<compile_context>
chip_gen: v5e
topology: v5e:2x2
jax: 0.10.0
libtpu: 0.0.40
codegen_flags: <defaults>
</compile_context>

<pallas_src>
import functools

import numpy as np
import jax
import jax.numpy as jnp
from jax.experimental import pallas as pl
from jax.experimental.pallas import tpu as pltpu


def _round_up(x, m):
    return (x + m - 1) // m * m


# ----------------------------------------------------------------------------
# Tile selection helpers (shared by the one-time weight packer and the GEMM
# wrapper so padded shapes always agree).
# ----------------------------------------------------------------------------
def _m_tiles(M):
    """Row tile / padded rows: tiles up to 512 rows, >=2 blocks on the
    parallel M axis whenever M allows (v7x has 2 TensorCores), 16-row
    alignment so bf16 blocks sit on native (16,128) tiles."""
    M16 = _round_up(max(M, 1), 16)
    if M16 <= 16:
        return M16, M16
    nblk = max(2, -(-M16 // 512))
    tm = _round_up(-(-M16 // nblk), 16)
    return tm, tm * nblk


def _k_tiles(K):
    """K tile / padded K: fewest K grid steps with tk <= 512; K is padded up
    to a tile multiple (a little zero MXU work beats extra pipeline steps)."""
    K128 = _round_up(K, 128)
    steps = -(-K128 // 512)
    tk = _round_up(-(-K128 // steps), 128)
    return tk, tk * steps


def _n_tiles(N):
    """N tile / padded N: 256-wide tiles to fill the v6e/v7x MXU when the
    padded width allows, else 128 (always lane-dense)."""
    Np = _round_up(N, 128)
    tn = 256 if Np % 256 == 0 else 128
    return tn, Np


# ----------------------------------------------------------------------------
# Tiled fused GEMM kernel:
#   out = relu_post( relu_pre(x @ w) * scale + shift + res )      (bf16 out)
# ----------------------------------------------------------------------------
def _gemm_kernel(*refs, relu_pre, relu_post, has_res):
    if has_res:
        x_ref, w_ref, ss_ref, res_ref, o_ref, acc_ref = refs
    else:
        x_ref, w_ref, ss_ref, o_ref, acc_ref = refs

    k = pl.program_id(2)

    @pl.when(k == 0)
    def _init():
        acc_ref[...] = jnp.zeros_like(acc_ref)

    acc_ref[...] += jnp.dot(x_ref[...], w_ref[...],
                            preferred_element_type=jnp.float32)

    @pl.when(k == pl.num_programs(2) - 1)
    def _epilogue():
        y = acc_ref[...]                       # f32 epilogue math (v5e-safe)
        if relu_pre:                           # Conv -> ReLU -> BN ordering
            y = jnp.maximum(y, 0.0)
        y = y * ss_ref[0:1, :] + ss_ref[1:2, :]
        if has_res:
            y = y + res_ref[...].astype(jnp.float32)
        if relu_post:                          # Conv -> BN -> (+skip) -> ReLU
            y = jnp.maximum(y, 0.0)
        o_ref[...] = y.astype(o_ref.dtype)     # bf16 writeback (half HBM)


def fused_matmul(x, gw, gm, res=None, relu_pre=False, relu_post=False):
    """Tiled, pipelined GEMM on pre-packed weights with a fused epilogue."""
    M, K = x.shape
    N, tk, tn = gm["N"], gm["tk"], gm["tn"]
    wb, ss = gw["w"], gw["ss"]
    Kp, Np = wb.shape
    tm, Mp = _m_tiles(M)
    has_res = res is not None

    # Pad activations directly in bf16 (no f32 round trip).
    xb = jnp.pad(x.astype(jnp.bfloat16), ((0, Mp - M), (0, Kp - K)))

    in_specs = [
        pl.BlockSpec((tm, tk), lambda i, j, k: (i, k)),
        pl.BlockSpec((tk, tn), lambda i, j, k: (k, j)),
        pl.BlockSpec((2, tn), lambda i, j, k: (0, j)),    # packed scale+shift
    ]
    args = [xb, wb, ss]
    if has_res:   # residual only DMA'd when actually used, and in bf16
        res_p = jnp.pad(res.astype(jnp.bfloat16), ((0, Mp - M), (0, Np - N)))
        in_specs.append(pl.BlockSpec((tm, tn), lambda i, j, k: (i, j)))
        args.append(res_p)

    kern = functools.partial(_gemm_kernel, relu_pre=relu_pre,
                             relu_post=relu_post, has_res=has_res)
    out = pl.pallas_call(
        kern,
        out_shape=jax.ShapeDtypeStruct((Mp, Np), jnp.bfloat16),
        grid=(Mp // tm, Np // tn, Kp // tk),
        in_specs=in_specs,
        out_specs=pl.BlockSpec((tm, tn), lambda i, j, k: (i, j)),
        scratch_shapes=[pltpu.VMEM((tm, tn), jnp.float32)],
        compiler_params=pltpu.CompilerParams(
            dimension_semantics=("parallel", "parallel", "arbitrary"),
            # Worst-case live tiles ~3 MiB; 48 MiB cap keeps v7x's 64 MiB
            # physical VMEM double-buffered and is safe on v5e/v6e.
            vmem_limit_bytes=48 * 1024 * 1024),
    )(*args)
    return out[:M, :N]


# ----------------------------------------------------------------------------
# Fused head kernel: AdaptiveAvgPool2d((1, None)) + Flatten + Linear + Linear
# ----------------------------------------------------------------------------
def _head_kernel(x_ref, lw_ref, lb_ref, fw_ref, fb_ref, o_ref):
    # Mean over H on the sublane axis; lanes carry W*C (no transpose).
    pooled = jnp.mean(x_ref[...].astype(jnp.float32), axis=1)       # (Bp, D)
    emb = jnp.dot(pooled.astype(jnp.bfloat16), lw_ref[...],
                  preferred_element_type=jnp.float32) + lb_ref[...]
    o_ref[...] = jnp.dot(emb.astype(jnp.bfloat16), fw_ref[...],
                         preferred_element_type=jnp.float32) + fb_ref[...]


def fused_head(x_nhwc, ha, hm):
    B, H, W, C = x_nhwc.shape
    D = W * C
    NC = hm["NC"]
    E = ha["lw"].shape[1]
    NCp = ha["fw"].shape[1]
    Bp = _round_up(max(B, 8), 8)          # (Bp, NCp) store is lane-dense
    x3 = jnp.pad(x_nhwc.astype(jnp.bfloat16).reshape(B, H, D),
                 ((0, Bp - B), (0, 0), (0, 0)))
    out = pl.pallas_call(
        _head_kernel,
        out_shape=jax.ShapeDtypeStruct((Bp, NCp), jnp.float32),
        grid=(1,),
        in_specs=[
            pl.BlockSpec((Bp, H, D), lambda i: (0, 0, 0)),
            pl.BlockSpec((D, E), lambda i: (0, 0)),
            pl.BlockSpec((1, E), lambda i: (0, 0)),
            pl.BlockSpec((E, NCp), lambda i: (0, 0)),
            pl.BlockSpec((1, NCp), lambda i: (0, 0)),
        ],
        out_specs=pl.BlockSpec((Bp, NCp), lambda i: (0, 0)),
        compiler_params=pltpu.CompilerParams(
            dimension_semantics=("arbitrary",)),
    )(x3, ha["lw"], ha["lb"], ha["fw"], ha["fb"])
    return out[:B, :NC]


# ----------------------------------------------------------------------------
# Glue: NHWC im2col + layer wrappers (bf16 reshapes / concats, no transposes)
# ----------------------------------------------------------------------------
def im2col_nhwc(x, kh, kw, stride):
    """NHWC -> (B*oh*ow, kh*kw*C) patch matrix (tap order: kh, kw, c)."""
    B, H, W, C = x.shape
    oh = (H - kh) // stride + 1
    ow = (W - kw) // stride + 1
    cols = []
    for i in range(kh):
        for j in range(kw):
            cols.append(x[:, i:i + stride * oh:stride,
                          j:j + stride * ow:stride, :])
    p = jnp.concatenate(cols, axis=-1)                 # (B, oh, ow, kh*kw*C)
    return p.reshape(B * oh * ow, kh * kw * C), oh, ow


def conv_relu_bn(x, gw, gm):
    """Conv2d(5x5, stride 2, no bias) -> ReLU -> BatchNorm2d (inference)."""
    B = x.shape[0]
    patches, oh, ow = im2col_nhwc(x, 5, 5, 2)
    y = fused_matmul(patches, gw, gm, relu_pre=True)
    return y.reshape(B, oh, ow, gm["N"])


def res_block(x, la, lm):
    """conv3x3-BN-ReLU, conv3x3-BN, + skip, ReLU (fused GEMM epilogues)."""
    B, H, W, C = x.shape
    xp = jnp.pad(x, ((0, 0), (1, 1), (1, 1), (0, 0)))
    p1, _, _ = im2col_nhwc(xp, 3, 3, 1)
    h = fused_matmul(p1, la["res1"], lm["res1"], relu_post=True)
    hp = jnp.pad(h.reshape(B, H, W, C), ((0, 0), (1, 1), (1, 1), (0, 0)))
    p2, _, _ = im2col_nhwc(hp, 3, 3, 1)
    skip = x.reshape(B * H * W, C)                     # no-copy view in NHWC
    y = fused_matmul(p2, la["res2"], lm["res2"], res=skip, relu_post=True)
    return y.reshape(B, H, W, C)


def forward(x_mel, arrs, meta):
    """ContrastiveModel._classify_forward on a precomputed mel spectrogram."""
    x = x_mel.astype(jnp.bfloat16)[:, :, :, None]   # Unflatten(1,(1,n_mel)) -> NHWC
    for la, lm in zip(arrs["layers"], meta["layers"]):
        x = conv_relu_bn(x, la["conv"], lm["conv"])
        x = res_block(x, la, lm)
    return fused_head(x, arrs["head"], meta["head"])


# ----------------------------------------------------------------------------
# One-time parameter packing: all weight relayout (transpose, pad, bf16 cast,
# BN fold, scale+shift packing) happens here, outside the jitted forward.
# ----------------------------------------------------------------------------
def conv_weight_matrix(w):
    """PyTorch (OC, IC, KH, KW) -> (KH*KW*IC, OC), matching im2col tap order."""
    oc = w.shape[0]
    return jnp.transpose(w, (2, 3, 1, 0)).reshape(-1, oc)


def fold_bn(gamma, beta, mean, var, eps=1e-5):
    # Inference-only BN fold (frozen running stats).
    scale = gamma / jnp.sqrt(var + eps)
    shift = beta - mean * scale
    return scale, shift


def pack_gemm(w_mat, scale, shift):
    K, N = w_mat.shape
    tk, Kp = _k_tiles(K)
    tn, Np = _n_tiles(N)
    wb = jnp.pad(w_mat.astype(jnp.float32),
                 ((0, Kp - K), (0, Np - N))).astype(jnp.bfloat16)
    ss = jnp.pad(jnp.stack([scale, shift]).astype(jnp.float32),
                 ((0, 0), (0, Np - N)))                # packed (2, Np)
    return {"w": wb, "ss": ss}, {"N": int(N), "tk": int(tk), "tn": int(tn)}


def pack_params(params):
    arr_layers, meta_layers = [], []
    for lyr in params["layers"]:
        ca, cm = pack_gemm(conv_weight_matrix(lyr["conv_w"]),
                           lyr["bn_scale"], lyr["bn_shift"])
        r = lyr["res"]
        r1a, r1m = pack_gemm(conv_weight_matrix(r["w1"]),
                             r["bn1_scale"], r["bn1_shift"])
        r2a, r2m = pack_gemm(conv_weight_matrix(r["w2"]),
                             r["bn2_scale"], r["bn2_shift"])
        arr_layers.append({"conv": ca, "res1": r1a, "res2": r2a})
        meta_layers.append({"conv": cm, "res1": r1m, "res2": r2m})

    E = params["lin_w"].shape[0]
    NC = params["fc_w"].shape[0]
    NCp = _round_up(NC, 128)
    # NOTE: flattened feature order here is (w, c); PyTorch's NCHW flatten is
    # (c, w).  Permute lin_w columns accordingly when loading PyTorch weights.
    head_a = {"lw": params["lin_w"].T.astype(jnp.bfloat16),
              "lb": params["lin_b"].reshape(1, E).astype(jnp.float32),
              "fw": jnp.pad(params["fc_w"].T.astype(jnp.float32),
                            ((0, 0), (0, NCp - NC))).astype(jnp.bfloat16),
              "fb": jnp.pad(params["fc_b"].reshape(1, NC).astype(jnp.float32),
                            ((0, 0), (0, NCp - NC)))}
    head_m = {"NC": int(NC)}
    return ({"layers": arr_layers, "head": head_a},
            {"layers": meta_layers, "head": head_m})


# ----------------------------------------------------------------------------
# Deterministic parameter initialisation (matches module __init__ shapes)
# ----------------------------------------------------------------------------
def init_params(key, n_mel, t_frames, n_layers, n_chan, emb_dim, n_classes):
    channels = np.rint(np.linspace(1, n_chan, n_layers + 1)).astype(int)
    keys = jax.random.split(key, 128)
    it = iter(range(128))
    nxt = lambda: keys[next(it)]

    def bn_affine(c):
        g = 1.0 + 0.1 * jax.random.normal(nxt(), (c,), jnp.float32)
        b = 0.1 * jax.random.normal(nxt(), (c,), jnp.float32)
        m = 0.05 * jax.random.normal(nxt(), (c,), jnp.float32)
        v = jax.random.uniform(nxt(), (c,), jnp.float32, 0.5, 1.5)
        return fold_bn(g, b, m, v)

    layers = []
    H, W = n_mel, t_frames
    for l in range(n_layers):
        cin, cout = int(channels[l]), int(channels[l + 1])
        conv_w = 0.1 * jax.random.normal(nxt(), (cout, cin, 5, 5), jnp.float32)
        bn_scale, bn_shift = bn_affine(cout)
        res = {}
        for tag in ("1", "2"):
            res["w" + tag] = 0.1 * jax.random.normal(
                nxt(), (cout, cout, 3, 3), jnp.float32)
            res["bn%s_scale" % tag], res["bn%s_shift" % tag] = bn_affine(cout)
        layers.append({"conv_w": conv_w, "bn_scale": bn_scale,
                       "bn_shift": bn_shift, "res": res})
        H = (H - 5) // 2 + 1                 # 5x5 conv, stride 2, no pad
        W = (W - 5) // 2 + 1

    conv_out_dim = int(channels[-1]) * W     # pool H -> 1, keep W (time)
    lin_w = 0.1 * jax.random.normal(nxt(), (emb_dim, conv_out_dim), jnp.float32)
    lin_b = 0.1 * jax.random.normal(nxt(), (emb_dim,), jnp.float32)
    fc_w = 0.1 * jax.random.normal(nxt(), (n_classes, emb_dim), jnp.float32)
    fc_b = 0.1 * jax.random.normal(nxt(), (n_classes,), jnp.float32)
    return {"layers": layers, "lin_w": lin_w, "lin_b": lin_b,
            "fc_w": fc_w, "fc_b": fc_b}


# ----------------------------------------------------------------------------
if __name__ == "__main__":
    # Small config: ContrastiveModel(in_freq=16000, n_layers=2, n_mel=32,
    #                                emb_dim=32, n_chan=8, n_classes=10)
    n_mel, n_layers, n_chan, emb_dim, n_classes = 32, 2, 8, 32, 10
    batch, t_frames = 2, 32

    key = jax.random.PRNGKey(0)
    k_x, k_p = jax.random.split(key)
    # Input to the conv tower: precomputed mel spectrogram (B, n_mel, T).
    x_mel = jax.random.normal(k_x, (batch, n_mel, t_frames), jnp.float32)
    params = init_params(k_p, n_mel, t_frames, n_layers, n_chan,
                         emb_dim, n_classes)

    arrs, meta = pack_params(params)        # one-time packing, outside jit
    fwd = jax.jit(functools.partial(forward, meta=meta))   # meta is static
    logits = jax.block_until_ready(fwd(x_mel, arrs))
    assert logits.shape == (batch, n_classes), logits.shape
    assert bool(jnp.all(jnp.isfinite(logits)))
    print("KERNEL_OK")
</pallas_src>

<mosaic_0001>
module attributes {stable_mosaic.version = 11 : i64} {
  func.func @_gemm_kernel(%arg0: i32, %arg1: i32, %arg2: i32, %arg3: memref<208x128xbf16, #tpu.memory_space<vmem>>, %arg4: memref<128x128xbf16, #tpu.memory_space<vmem>>, %arg5: memref<2x128xf32, #tpu.memory_space<vmem>>, %arg6: memref<208x128xbf16, #tpu.memory_space<vmem>>, %arg7: memref<208x128xf32, #tpu.memory_space<vmem>>) attributes {dimension_semantics = [#tpu.dimension_semantics<parallel>, #tpu.dimension_semantics<parallel>, #tpu.dimension_semantics<arbitrary>], iteration_bounds = array<i64: 2, 1, 1>, scalar_prefetch = 0 : i64, scratch_operands = 1 : i64, tpu.core_type = #tpu.core_type<tc>, window_params = [{transform_indices = @transform_0, window_bounds = array<i64: 208, 128>}, {transform_indices = @transform_1, window_bounds = array<i64: 128, 128>}, {transform_indices = @transform_2, window_bounds = array<i64: 2, 128>}, {transform_indices = @transform_3, window_bounds = array<i64: 208, 128>}]} {
    %c0_i32 = arith.constant 0 : i32
    %0 = arith.cmpi eq, %arg2, %c0_i32 : i32
    %1 = arith.extui %0 : i1 to i32
    %c0_i32_0 = arith.constant 0 : i32
    %2 = arith.cmpi ne, %1, %c0_i32_0 : i32
    scf.if %2 {
      %cst_10 = arith.constant 0.000000e+00 : f32
      %12 = vector.broadcast %cst_10 : f32 to vector<208x128xf32>
      %c0_11 = arith.constant 0 : index
      %c0_12 = arith.constant 0 : index
      %13 = vector.load %arg7[%c0_11, %c0_12] : memref<208x128xf32, #tpu.memory_space<vmem>>, vector<208x128xf32>
      tpu.vector_store %arg7[%c0_11, %c0_12], %12 {strides = array<i32>} : memref<208x128xf32, #tpu.memory_space<vmem>>, vector<208x128xf32>,
    } else {
    }
    %c0 = arith.constant 0 : index
    %c0_1 = arith.constant 0 : index
    %3 = vector.load %arg7[%c0, %c0_1] : memref<208x128xf32, #tpu.memory_space<vmem>>, vector<208x128xf32>
    %c0_2 = arith.constant 0 : index
    %c0_3 = arith.constant 0 : index
    %4 = vector.load %arg3[%c0_2, %c0_3] : memref<208x128xbf16, #tpu.memory_space<vmem>>, vector<208x128xbf16>
    %c0_4 = arith.constant 0 : index
    %c0_5 = arith.constant 0 : index
    %5 = vector.load %arg4[%c0_4, %c0_5] : memref<128x128xbf16, #tpu.memory_space<vmem>>, vector<128x128xbf16>
    %cst = arith.constant dense<0.000000e+00> : vector<208x128xf32>
    %6 = tpu.matmul %4, %5, %cst {dimension_numbers = #tpu.dot_dimension_numbers<[1], [0], [0], [1], [0, 0, 1, 1], [], []>} : vector<208x128xbf16>, vector<128x128xbf16>, vector<208x128xf32> -> vector<208x128xf32>
    %7 = arith.addf %3, %6 : vector<208x128xf32>
    %c0_6 = arith.constant 0 : index
    %c0_7 = arith.constant 0 : index
    %8 = vector.load %arg7[%c0_6, %c0_7] : memref<208x128xf32, #tpu.memory_space<vmem>>, vector<208x128xf32>
    tpu.vector_store %arg7[%c0_6, %c0_7], %7 {strides = array<i32>} : memref<208x128xf32, #tpu.memory_space<vmem>>, vector<208x128xf32>,
    %c0_i32_8 = arith.constant 0 : i32
    %9 = arith.cmpi eq, %arg2, %c0_i32_8 : i32
    %10 = arith.extui %9 : i1 to i32
    %c0_i32_9 = arith.constant 0 : i32
    %11 = arith.cmpi ne, %10, %c0_i32_9 : i32
    scf.if %11 {
      %c0_10 = arith.constant 0 : index
      %c0_11 = arith.constant 0 : index
      %12 = vector.load %arg7[%c0_10, %c0_11] : memref<208x128xf32, #tpu.memory_space<vmem>>, vector<208x128xf32>
      %cst_12 = arith.constant 0.000000e+00 : f32
      %13 = vector.broadcast %cst_12 : f32 to vector<208x128xf32>
      %14 = arith.maximumf %12, %13 : vector<208x128xf32>
      %c0_13 = arith.constant 0 : index
      %c0_14 = arith.constant 0 : index
      %15 = vector.load %arg5[%c0_13, %c0_14] : memref<2x128xf32, #tpu.memory_space<vmem>>, vector<1x128xf32>
      %16 = vector.broadcast %15 : vector<1x128xf32> to vector<208x128xf32>
      %17 = arith.mulf %14, %16 : vector<208x128xf32>
      %c1 = arith.constant 1 : index
      %c0_15 = arith.constant 0 : index
      %18 = vector.load %arg5[%c1, %c0_15] : memref<2x128xf32, #tpu.memory_space<vmem>>, vector<1x128xf32>
      %19 = vector.broadcast %18 : vector<1x128xf32> to vector<208x128xf32>
      %20 = arith.addf %17, %19 : vector<208x128xf32>
      %21 = arith.truncf %20 : vector<208x128xf32> to vector<208x128xbf16>
      %c0_16 = arith.constant 0 : index
      %c0_17 = arith.constant 0 : index
      %22 = vector.load %arg6[%c0_16, %c0_17] : memref<208x128xbf16, #tpu.memory_space<vmem>>, vector<208x128xbf16>
      tpu.vector_store %arg6[%c0_16, %c0_17], %21 {strides = array<i32>} : memref<208x128xbf16, #tpu.memory_space<vmem>>, vector<208x128xbf16>,
    } else {
    }
    return
  }
  func.func @transform_0(%arg0: i32, %arg1: i32, %arg2: i32) -> (i32, i32) {
    %c0_i32 = arith.constant 0 : i32
    return %arg0, %arg2 : i32, i32
  }
  func.func @transform_1(%arg0: i32, %arg1: i32, %arg2: i32) -> (i32, i32) {
    %c0_i32 = arith.constant 0 : i32
    return %arg2, %arg1 : i32, i32
  }
  func.func @transform_2(%arg0: i32, %arg1: i32, %arg2: i32) -> (i32, i32) {
    %c0_i32 = arith.constant 0 : i32
    %c0_i32_0 = arith.constant 0 : i32
    return %c0_i32, %arg1 : i32, i32
  }
  func.func @transform_3(%arg0: i32, %arg1: i32, %arg2: i32) -> (i32, i32) {
    %c0_i32 = arith.constant 0 : i32
    return %arg0, %arg1 : i32, i32
  }
}

module attributes {stable_mosaic.version = 11 : i64} {
  func.func @_gemm_kernel(%arg0: i32, %arg1: i32, %arg2: i32, %arg3: memref<208x128xbf16, #tpu.memory_space<vmem>>, %arg4: memref<128x128xbf16, #tpu.memory_space<vmem>>, %arg5: memref<2x128xf32, #tpu.memory_space<vmem>>, %arg6: memref<208x128xbf16, #tpu.memory_space<vmem>>, %arg7: memref<208x128xf32, #tpu.memory_space<vmem>>) attributes {dimension_semantics = [#tpu.dimension_semantics<parallel>, #tpu.dimension_semantics<parallel>, #tpu.dimension_semantics<arbitrary>], iteration_bounds = array<i64: 2, 1, 1>, scalar_prefetch = 0 : i64, scratch_operands = 1 : i64, tpu.core_type = #tpu.core_type<tc>, window_params = [{transform_indices = @transform_0, window_bounds = array<i64: 208, 128>}, {transform_indices = @transform_1, window_bounds = array<i64: 128, 128>}, {transform_indices = @transform_2, window_bounds = array<i64: 2, 128>}, {transform_indices = @transform_3, window_bounds = array<i64: 208, 128>}]} {
    %c0_i32 = arith.constant 0 : i32
    %0 = arith.cmpi eq, %arg2, %c0_i32 : i32
    %1 = arith.extui %0 : i1 to i32
    %c0_i32_0 = arith.constant 0 : i32
    %2 = arith.cmpi ne, %1, %c0_i32_0 : i32
    scf.if %2 {
      %cst_10 = arith.constant 0.000000e+00 : f32
      %12 = vector.broadcast %cst_10 : f32 to vector<208x128xf32>
      %c0_11 = arith.constant 0 : index
      %c0_12 = arith.constant 0 : index
      %13 = vector.load %arg7[%c0_11, %c0_12] : memref<208x128xf32, #tpu.memory_space<vmem>>, vector<208x128xf32>
      tpu.vector_store %arg7[%c0_11, %c0_12], %12 {strides = array<i32>} : memref<208x128xf32, #tpu.memory_space<vmem>>, vector<208x128xf32>,
    } else {
    }
    %c0 = arith.constant 0 : index
    %c0_1 = arith.constant 0 : index
    %3 = vector.load %arg7[%c0, %c0_1] : memref<208x128xf32, #tpu.memory_space<vmem>>, vector<208x128xf32>
    %c0_2 = arith.constant 0 : index
    %c0_3 = arith.constant 0 : index
    %4 = vector.load %arg3[%c0_2, %c0_3] : memref<208x128xbf16, #tpu.memory_space<vmem>>, vector<208x128xbf16>
    %c0_4 = arith.constant 0 : index
    %c0_5 = arith.constant 0 : index
    %5 = vector.load %arg4[%c0_4, %c0_5] : memref<128x128xbf16, #tpu.memory_space<vmem>>, vector<128x128xbf16>
    %cst = arith.constant dense<0.000000e+00> : vector<208x128xf32>
    %6 = tpu.matmul %4, %5, %cst {dimension_numbers = #tpu.dot_dimension_numbers<[1], [0], [0], [1], [0, 0, 1, 1], [], []>} : vector<208x128xbf16>, vector<128x128xbf16>, vector<208x128xf32> -> vector<208x128xf32>
    %7 = arith.addf %3, %6 : vector<208x128xf32>
    %c0_6 = arith.constant 0 : index
    %c0_7 = arith.constant 0 : index
    %8 = vector.load %arg7[%c0_6, %c0_7] : memref<208x128xf32, #tpu.memory_space<vmem>>, vector<208x128xf32>
    tpu.vector_store %arg7[%c0_6, %c0_7], %7 {strides = array<i32>} : memref<208x128xf32, #tpu.memory_space<vmem>>, vector<208x128xf32>,
    %c0_i32_8 = arith.constant 0 : i32
    %9 = arith.cmpi eq, %arg2, %c0_i32_8 : i32
    %10 = arith.extui %9 : i1 to i32
    %c0_i32_9 = arith.constant 0 : i32
    %11 = arith.cmpi ne, %10, %c0_i32_9 : i32
    scf.if %11 {
      %c0_10 = arith.constant 0 : index
      %c0_11 = arith.constant 0 : index
      %12 = vector.load %arg7[%c0_10, %c0_11] : memref<208x128xf32, #tpu.memory_space<vmem>>, vector<208x128xf32>
      %c0_12 = arith.constant 0 : index
      %c0_13 = arith.constant 0 : index
      %13 = vector.load %arg5[%c0_12, %c0_13] : memref<2x128xf32, #tpu.memory_space<vmem>>, vector<1x128xf32>
      %14 = vector.broadcast %13 : vector<1x128xf32> to vector<208x128xf32>
      %15 = arith.mulf %12, %14 : vector<208x128xf32>
      %c1 = arith.constant 1 : index
      %c0_14 = arith.constant 0 : index
      %16 = vector.load %arg5[%c1, %c0_14] : memref<2x128xf32, #tpu.memory_space<vmem>>, vector<1x128xf32>
      %17 = vector.broadcast %16 : vector<1x128xf32> to vector<208x128xf32>
      %18 = arith.addf %15, %17 : vector<208x128xf32>
      %cst_15 = arith.constant 0.000000e+00 : f32
      %19 = vector.broadcast %cst_15 : f32 to vector<208x128xf32>
      %20 = arith.maximumf %18, %19 : vector<208x128xf32>
      %21 = arith.truncf %20 : vector<208x128xf32> to vector<208x128xbf16>
      %c0_16 = arith.constant 0 : index
      %c0_17 = arith.constant 0 : index
      %22 = vector.load %arg6[%c0_16, %c0_17] : memref<208x128xbf16, #tpu.memory_space<vmem>>, vector<208x128xbf16>
      tpu.vector_store %arg6[%c0_16, %c0_17], %21 {strides = array<i32>} : memref<208x128xbf16, #tpu.memory_space<vmem>>, vector<208x128xbf16>,
    } else {
    }
    return
  }
  func.func @transform_0(%arg0: i32, %arg1: i32, %arg2: i32) -> (i32, i32) {
    %c0_i32 = arith.constant 0 : i32
    return %arg0, %arg2 : i32, i32
  }
  func.func @transform_1(%arg0: i32, %arg1: i32, %arg2: i32) -> (i32, i32) {
    %c0_i32 = arith.constant 0 : i32
    return %arg2, %arg1 : i32, i32
  }
  func.func @transform_2(%arg0: i32, %arg1: i32, %arg2: i32) -> (i32, i32) {
    %c0_i32 = arith.constant 0 : i32
    %c0_i32_0 = arith.constant 0 : i32
    return %c0_i32, %arg1 : i32, i32
  }
  func.func @transform_3(%arg0: i32, %arg1: i32, %arg2: i32) -> (i32, i32) {
    %c0_i32 = arith.constant 0 : i32
    return %arg0, %arg1 : i32, i32
  }
}

module attributes {stable_mosaic.version = 11 : i64} {
  func.func @_gemm_kernel(%arg0: i32, %arg1: i32, %arg2: i32, %arg3: memref<208x128xbf16, #tpu.memory_space<vmem>>, %arg4: memref<128x128xbf16, #tpu.memory_space<vmem>>, %arg5: memref<2x128xf32, #tpu.memory_space<vmem>>, %arg6: memref<208x128xbf16, #tpu.memory_space<vmem>>, %arg7: memref<208x128xbf16, #tpu.memory_space<vmem>>, %arg8: memref<208x128xf32, #tpu.memory_space<vmem>>) attributes {dimension_semantics = [#tpu.dimension_semantics<parallel>, #tpu.dimension_semantics<parallel>, #tpu.dimension_semantics<arbitrary>], iteration_bounds = array<i64: 2, 1, 1>, scalar_prefetch = 0 : i64, scratch_operands = 1 : i64, tpu.core_type = #tpu.core_type<tc>, window_params = [{transform_indices = @transform_0, window_bounds = array<i64: 208, 128>}, {transform_indices = @transform_1, window_bounds = array<i64: 128, 128>}, {transform_indices = @transform_2, window_bounds = array<i64: 2, 128>}, {transform_indices = @transform_3, window_bounds = array<i64: 208, 128>}, {transform_indices = @transform_4, window_bounds = array<i64: 208, 128>}]} {
    %c0_i32 = arith.constant 0 : i32
    %0 = arith.cmpi eq, %arg2, %c0_i32 : i32
    %1 = arith.extui %0 : i1 to i32
    %c0_i32_0 = arith.constant 0 : i32
    %2 = arith.cmpi ne, %1, %c0_i32_0 : i32
    scf.if %2 {
      %cst_10 = arith.constant 0.000000e+00 : f32
      %12 = vector.broadcast %cst_10 : f32 to vector<208x128xf32>
      %c0_11 = arith.constant 0 : index
      %c0_12 = arith.constant 0 : index
      %13 = vector.load %arg8[%c0_11, %c0_12] : memref<208x128xf32, #tpu.memory_space<vmem>>, vector<208x128xf32>
      tpu.vector_store %arg8[%c0_11, %c0_12], %12 {strides = array<i32>} : memref<208x128xf32, #tpu.memory_space<vmem>>, vector<208x128xf32>,
    } else {
    }
    %c0 = arith.constant 0 : index
    %c0_1 = arith.constant 0 : index
    %3 = vector.load %arg8[%c0, %c0_1] : memref<208x128xf32, #tpu.memory_space<vmem>>, vector<208x128xf32>
    %c0_2 = arith.constant 0 : index
    %c0_3 = arith.constant 0 : index
    %4 = vector.load %arg3[%c0_2, %c0_3] : memref<208x128xbf16, #tpu.memory_space<vmem>>, vector<208x128xbf16>
    %c0_4 = arith.constant 0 : index
    %c0_5 = arith.constant 0 : index
    %5 = vector.load %arg4[%c0_4, %c0_5] : memref<128x128xbf16, #tpu.memory_space<vmem>>, vector<128x128xbf16>
    %cst = arith.constant dense<0.000000e+00> : vector<208x128xf32>
    %6 = tpu.matmul %4, %5, %cst {dimension_numbers = #tpu.dot_dimension_numbers<[1], [0], [0], [1], [0, 0, 1, 1], [], []>} : vector<208x128xbf16>, vector<128x128xbf16>, vector<208x128xf32> -> vector<208x128xf32>
    %7 = arith.addf %3, %6 : vector<208x128xf32>
    %c0_6 = arith.constant 0 : index
    %c0_7 = arith.constant 0 : index
    %8 = vector.load %arg8[%c0_6, %c0_7] : memref<208x128xf32, #tpu.memory_space<vmem>>, vector<208x128xf32>
    tpu.vector_store %arg8[%c0_6, %c0_7], %7 {strides = array<i32>} : memref<208x128xf32, #tpu.memory_space<vmem>>, vector<208x128xf32>,
    %c0_i32_8 = arith.constant 0 : i32
    %9 = arith.cmpi eq, %arg2, %c0_i32_8 : i32
    %10 = arith.extui %9 : i1 to i32
    %c0_i32_9 = arith.constant 0 : i32
    %11 = arith.cmpi ne, %10, %c0_i32_9 : i32
    scf.if %11 {
      %c0_10 = arith.constant 0 : index
      %c0_11 = arith.constant 0 : index
      %12 = vector.load %arg8[%c0_10, %c0_11] : memref<208x128xf32, #tpu.memory_space<vmem>>, vector<208x128xf32>
      %c0_12 = arith.constant 0 : index
      %c0_13 = arith.constant 0 : index
      %13 = vector.load %arg5[%c0_12, %c0_13] : memref<2x128xf32, #tpu.memory_space<vmem>>, vector<1x128xf32>
      %14 = vector.broadcast %13 : vector<1x128xf32> to vector<208x128xf32>
      %15 = arith.mulf %12, %14 : vector<208x128xf32>
      %c1 = arith.constant 1 : index
      %c0_14 = arith.constant 0 : index
      %16 = vector.load %arg5[%c1, %c0_14] : memref<2x128xf32, #tpu.memory_space<vmem>>, vector<1x128xf32>
      %17 = vector.broadcast %16 : vector<1x128xf32> to vector<208x128xf32>
      %18 = arith.addf %15, %17 : vector<208x128xf32>
      %c0_15 = arith.constant 0 : index
      %c0_16 = arith.constant 0 : index
      %19 = vector.load %arg6[%c0_15, %c0_16] : memref<208x128xbf16, #tpu.memory_space<vmem>>, vector<208x128xbf16>
      %20 = arith.extf %19 : vector<208x128xbf16> to vector<208x128xf32>
      %21 = arith.addf %18, %20 : vector<208x128xf32>
      %cst_17 = arith.constant 0.000000e+00 : f32
      %22 = vector.broadcast %cst_17 : f32 to vector<208x128xf32>
      %23 = arith.maximumf %21, %22 : vector<208x128xf32>
      %24 = arith.truncf %23 : vector<208x128xf32> to vector<208x128xbf16>
      %c0_18 = arith.constant 0 : index
      %c0_19 = arith.constant 0 : index
      %25 = vector.load %arg7[%c0_18, %c0_19] : memref<208x128xbf16, #tpu.memory_space<vmem>>, vector<208x128xbf16>
      tpu.vector_store %arg7[%c0_18, %c0_19], %24 {strides = array<i32>} : memref<208x128xbf16, #tpu.memory_space<vmem>>, vector<208x128xbf16>,
    } else {
    }
    return
  }
  func.func @transform_0(%arg0: i32, %arg1: i32, %arg2: i32) -> (i32, i32) {
    %c0_i32 = arith.constant 0 : i32
    return %arg0, %arg2 : i32, i32
  }
  func.func @transform_1(%arg0: i32, %arg1: i32, %arg2: i32) -> (i32, i32) {
    %c0_i32 = arith.constant 0 : i32
    return %arg2, %arg1 : i32, i32
  }
  func.func @transform_2(%arg0: i32, %arg1: i32, %arg2: i32) -> (i32, i32) {
    %c0_i32 = arith.constant 0 : i32
    %c0_i32_0 = arith.constant 0 : i32
    return %c0_i32, %arg1 : i32, i32
  }
  func.func @transform_3(%arg0: i32, %arg1: i32, %arg2: i32) -> (i32, i32) {
    %c0_i32 = arith.constant 0 : i32
    return %arg0, %arg1 : i32, i32
  }
  func.func @transform_4(%arg0: i32, %arg1: i32, %arg2: i32) -> (i32, i32) {
    %c0_i32 = arith.constant 0 : i32
    return %arg0, %arg1 : i32, i32
  }
}

module attributes {stable_mosaic.version = 11 : i64} {
  func.func @_gemm_kernel(%arg0: i32, %arg1: i32, %arg2: i32, %arg3: memref<32x128xbf16, #tpu.memory_space<vmem>>, %arg4: memref<128x128xbf16, #tpu.memory_space<vmem>>, %arg5: memref<2x128xf32, #tpu.memory_space<vmem>>, %arg6: memref<32x128xbf16, #tpu.memory_space<vmem>>, %arg7: memref<32x128xf32, #tpu.memory_space<vmem>>) attributes {dimension_semantics = [#tpu.dimension_semantics<parallel>, #tpu.dimension_semantics<parallel>, #tpu.dimension_semantics<arbitrary>], iteration_bounds = array<i64: 2, 1, 1>, scalar_prefetch = 0 : i64, scratch_operands = 1 : i64, tpu.core_type = #tpu.core_type<tc>, window_params = [{transform_indices = @transform_0, window_bounds = array<i64: 32, 128>}, {transform_indices = @transform_1, window_bounds = array<i64: 128, 128>}, {transform_indices = @transform_2, window_bounds = array<i64: 2, 128>}, {transform_indices = @transform_3, window_bounds = array<i64: 32, 128>}]} {
    %c0_i32 = arith.constant 0 : i32
    %0 = arith.cmpi eq, %arg2, %c0_i32 : i32
    %1 = arith.extui %0 : i1 to i32
    %c0_i32_0 = arith.constant 0 : i32
    %2 = arith.cmpi ne, %1, %c0_i32_0 : i32
    scf.if %2 {
      %cst_10 = arith.constant 0.000000e+00 : f32
      %12 = vector.broadcast %cst_10 : f32 to vector<32x128xf32>
      %c0_11 = arith.constant 0 : index
      %c0_12 = arith.constant 0 : index
      %13 = vector.load %arg7[%c0_11, %c0_12] : memref<32x128xf32, #tpu.memory_space<vmem>>, vector<32x128xf32>
      tpu.vector_store %arg7[%c0_11, %c0_12], %12 {strides = array<i32>} : memref<32x128xf32, #tpu.memory_space<vmem>>, vector<32x128xf32>,
    } else {
    }
    %c0 = arith.constant 0 : index
    %c0_1 = arith.constant 0 : index
    %3 = vector.load %arg7[%c0, %c0_1] : memref<32x128xf32, #tpu.memory_space<vmem>>, vector<32x128xf32>
    %c0_2 = arith.constant 0 : index
    %c0_3 = arith.constant 0 : index
    %4 = vector.load %arg3[%c0_2, %c0_3] : memref<32x128xbf16, #tpu.memory_space<vmem>>, vector<32x128xbf16>
    %c0_4 = arith.constant 0 : index
    %c0_5 = arith.constant 0 : index
    %5 = vector.load %arg4[%c0_4, %c0_5] : memref<128x128xbf16, #tpu.memory_space<vmem>>, vector<128x128xbf16>
    %cst = arith.constant dense<0.000000e+00> : vector<32x128xf32>
    %6 = tpu.matmul %4, %5, %cst {dimension_numbers = #tpu.dot_dimension_numbers<[1], [0], [0], [1], [0, 0, 1, 1], [], []>} : vector<32x128xbf16>, vector<128x128xbf16>, vector<32x128xf32> -> vector<32x128xf32>
    %7 = arith.addf %3, %6 : vector<32x128xf32>
    %c0_6 = arith.constant 0 : index
    %c0_7 = arith.constant 0 : index
    %8 = vector.load %arg7[%c0_6, %c0_7] : memref<32x128xf32, #tpu.memory_space<vmem>>, vector<32x128xf32>
    tpu.vector_store %arg7[%c0_6, %c0_7], %7 {strides = array<i32>} : memref<32x128xf32, #tpu.memory_space<vmem>>, vector<32x128xf32>,
    %c0_i32_8 = arith.constant 0 : i32
    %9 = arith.cmpi eq, %arg2, %c0_i32_8 : i32
    %10 = arith.extui %9 : i1 to i32
    %c0_i32_9 = arith.constant 0 : i32
    %11 = arith.cmpi ne, %10, %c0_i32_9 : i32
    scf.if %11 {
      %c0_10 = arith.constant 0 : index
      %c0_11 = arith.constant 0 : index
      %12 = vector.load %arg7[%c0_10, %c0_11] : memref<32x128xf32, #tpu.memory_space<vmem>>, vector<32x128xf32>
      %cst_12 = arith.constant 0.000000e+00 : f32
      %13 = vector.broadcast %cst_12 : f32 to vector<32x128xf32>
      %14 = arith.maximumf %12, %13 : vector<32x128xf32>
      %c0_13 = arith.constant 0 : index
      %c0_14 = arith.constant 0 : index
      %15 = vector.load %arg5[%c0_13, %c0_14] : memref<2x128xf32, #tpu.memory_space<vmem>>, vector<1x128xf32>
      %16 = vector.broadcast %15 : vector<1x128xf32> to vector<32x128xf32>
      %17 = arith.mulf %14, %16 : vector<32x128xf32>
      %c1 = arith.constant 1 : index
      %c0_15 = arith.constant 0 : index
      %18 = vector.load %arg5[%c1, %c0_15] : memref<2x128xf32, #tpu.memory_space<vmem>>, vector<1x128xf32>
      %19 = vector.broadcast %18 : vector<1x128xf32> to vector<32x128xf32>
      %20 = arith.addf %17, %19 : vector<32x128xf32>
      %21 = arith.truncf %20 : vector<32x128xf32> to vector<32x128xbf16>
      %c0_16 = arith.constant 0 : index
      %c0_17 = arith.constant 0 : index
      %22 = vector.load %arg6[%c0_16, %c0_17] : memref<32x128xbf16, #tpu.memory_space<vmem>>, vector<32x128xbf16>
      tpu.vector_store %arg6[%c0_16, %c0_17], %21 {strides = array<i32>} : memref<32x128xbf16, #tpu.memory_space<vmem>>, vector<32x128xbf16>,
    } else {
    }
    return
  }
  func.func @transform_0(%arg0: i32, %arg1: i32, %arg2: i32) -> (i32, i32) {
    %c0_i32 = arith.constant 0 : i32
    return %arg0, %arg2 : i32, i32
  }
  func.func @transform_1(%arg0: i32, %arg1: i32, %arg2: i32) -> (i32, i32) {
    %c0_i32 = arith.constant 0 : i32
    return %arg2, %arg1 : i32, i32
  }
  func.func @transform_2(%arg0: i32, %arg1: i32, %arg2: i32) -> (i32, i32) {
    %c0_i32 = arith.constant 0 : i32
    %c0_i32_0 = arith.constant 0 : i32
    return %c0_i32, %arg1 : i32, i32
  }
  func.func @transform_3(%arg0: i32, %arg1: i32, %arg2: i32) -> (i32, i32) {
    %c0_i32 = arith.constant 0 : i32
    return %arg0, %arg1 : i32, i32
  }
}

module attributes {stable_mosaic.version = 11 : i64} {
  func.func @_gemm_kernel(%arg0: i32, %arg1: i32, %arg2: i32, %arg3: memref<32x128xbf16, #tpu.memory_space<vmem>>, %arg4: memref<128x128xbf16, #tpu.memory_space<vmem>>, %arg5: memref<2x128xf32, #tpu.memory_space<vmem>>, %arg6: memref<32x128xbf16, #tpu.memory_space<vmem>>, %arg7: memref<32x128xf32, #tpu.memory_space<vmem>>) attributes {dimension_semantics = [#tpu.dimension_semantics<parallel>, #tpu.dimension_semantics<parallel>, #tpu.dimension_semantics<arbitrary>], iteration_bounds = array<i64: 2, 1, 1>, scalar_prefetch = 0 : i64, scratch_operands = 1 : i64, tpu.core_type = #tpu.core_type<tc>, window_params = [{transform_indices = @transform_0, window_bounds = array<i64: 32, 128>}, {transform_indices = @transform_1, window_bounds = array<i64: 128, 128>}, {transform_indices = @transform_2, window_bounds = array<i64: 2, 128>}, {transform_indices = @transform_3, window_bounds = array<i64: 32, 128>}]} {
    %c0_i32 = arith.constant 0 : i32
    %0 = arith.cmpi eq, %arg2, %c0_i32 : i32
    %1 = arith.extui %0 : i1 to i32
    %c0_i32_0 = arith.constant 0 : i32
    %2 = arith.cmpi ne, %1, %c0_i32_0 : i32
    scf.if %2 {
      %cst_10 = arith.constant 0.000000e+00 : f32
      %12 = vector.broadcast %cst_10 : f32 to vector<32x128xf32>
      %c0_11 = arith.constant 0 : index
      %c0_12 = arith.constant 0 : index
      %13 = vector.load %arg7[%c0_11, %c0_12] : memref<32x128xf32, #tpu.memory_space<vmem>>, vector<32x128xf32>
      tpu.vector_store %arg7[%c0_11, %c0_12], %12 {strides = array<i32>} : memref<32x128xf32, #tpu.memory_space<vmem>>, vector<32x128xf32>,
    } else {
    }
    %c0 = arith.constant 0 : index
    %c0_1 = arith.constant 0 : index
    %3 = vector.load %arg7[%c0, %c0_1] : memref<32x128xf32, #tpu.memory_space<vmem>>, vector<32x128xf32>
    %c0_2 = arith.constant 0 : index
    %c0_3 = arith.constant 0 : index
    %4 = vector.load %arg3[%c0_2, %c0_3] : memref<32x128xbf16, #tpu.memory_space<vmem>>, vector<32x128xbf16>
    %c0_4 = arith.constant 0 : index
    %c0_5 = arith.constant 0 : index
    %5 = vector.load %arg4[%c0_4, %c0_5] : memref<128x128xbf16, #tpu.memory_space<vmem>>, vector<128x128xbf16>
    %cst = arith.constant dense<0.000000e+00> : vector<32x128xf32>
    %6 = tpu.matmul %4, %5, %cst {dimension_numbers = #tpu.dot_dimension_numbers<[1], [0], [0], [1], [0, 0, 1, 1], [], []>} : vector<32x128xbf16>, vector<128x128xbf16>, vector<32x128xf32> -> vector<32x128xf32>
    %7 = arith.addf %3, %6 : vector<32x128xf32>
    %c0_6 = arith.constant 0 : index
    %c0_7 = arith.constant 0 : index
    %8 = vector.load %arg7[%c0_6, %c0_7] : memref<32x128xf32, #tpu.memory_space<vmem>>, vector<32x128xf32>
    tpu.vector_store %arg7[%c0_6, %c0_7], %7 {strides = array<i32>} : memref<32x128xf32, #tpu.memory_space<vmem>>, vector<32x128xf32>,
    %c0_i32_8 = arith.constant 0 : i32
    %9 = arith.cmpi eq, %arg2, %c0_i32_8 : i32
    %10 = arith.extui %9 : i1 to i32
    %c0_i32_9 = arith.constant 0 : i32
    %11 = arith.cmpi ne, %10, %c0_i32_9 : i32
    scf.if %11 {
      %c0_10 = arith.constant 0 : index
      %c0_11 = arith.constant 0 : index
      %12 = vector.load %arg7[%c0_10, %c0_11] : memref<32x128xf32, #tpu.memory_space<vmem>>, vector<32x128xf32>
      %c0_12 = arith.constant 0 : index
      %c0_13 = arith.constant 0 : index
      %13 = vector.load %arg5[%c0_12, %c0_13] : memref<2x128xf32, #tpu.memory_space<vmem>>, vector<1x128xf32>
      %14 = vector.broadcast %13 : vector<1x128xf32> to vector<32x128xf32>
      %15 = arith.mulf %12, %14 : vector<32x128xf32>
      %c1 = arith.constant 1 : index
      %c0_14 = arith.constant 0 : index
      %16 = vector.load %arg5[%c1, %c0_14] : memref<2x128xf32, #tpu.memory_space<vmem>>, vector<1x128xf32>
      %17 = vector.broadcast %16 : vector<1x128xf32> to vector<32x128xf32>
      %18 = arith.addf %15, %17 : vector<32x128xf32>
      %cst_15 = arith.constant 0.000000e+00 : f32
      %19 = vector.broadcast %cst_15 : f32 to vector<32x128xf32>
      %20 = arith.maximumf %18, %19 : vector<32x128xf32>
      %21 = arith.truncf %20 : vector<32x128xf32> to vector<32x128xbf16>
      %c0_16 = arith.constant 0 : index
      %c0_17 = arith.constant 0 : index
      %22 = vector.load %arg6[%c0_16, %c0_17] : memref<32x128xbf16, #tpu.memory_space<vmem>>, vector<32x128xbf16>
      tpu.vector_store %arg6[%c0_16, %c0_17], %21 {strides = array<i32>} : memref<32x128xbf16, #tpu.memory_space<vmem>>, vector<32x128xbf16>,
    } else {
    }
    return
  }
  func.func @transform_0(%arg0: i32, %arg1: i32, %arg2: i32) -> (i32, i32) {
    %c0_i32 = arith.constant 0 : i32
    return %arg0, %arg2 : i32, i32
  }
  func.func @transform_1(%arg0: i32, %arg1: i32, %arg2: i32) -> (i32, i32) {
    %c0_i32 = arith.constant 0 : i32
    return %arg2, %arg1 : i32, i32
  }
  func.func @transform_2(%arg0: i32, %arg1: i32, %arg2: i32) -> (i32, i32) {
    %c0_i32 = arith.constant 0 : i32
    %c0_i32_0 = arith.constant 0 : i32
    return %c0_i32, %arg1 : i32, i32
  }
  func.func @transform_3(%arg0: i32, %arg1: i32, %arg2: i32) -> (i32, i32) {
    %c0_i32 = arith.constant 0 : i32
    return %arg0, %arg1 : i32, i32
  }
}

module attributes {stable_mosaic.version = 11 : i64} {
  func.func @_gemm_kernel(%arg0: i32, %arg1: i32, %arg2: i32, %arg3: memref<32x128xbf16, #tpu.memory_space<vmem>>, %arg4: memref<128x128xbf16, #tpu.memory_space<vmem>>, %arg5: memref<2x128xf32, #tpu.memory_space<vmem>>, %arg6: memref<32x128xbf16, #tpu.memory_space<vmem>>, %arg7: memref<32x128xbf16, #tpu.memory_space<vmem>>, %arg8: memref<32x128xf32, #tpu.memory_space<vmem>>) attributes {dimension_semantics = [#tpu.dimension_semantics<parallel>, #tpu.dimension_semantics<parallel>, #tpu.dimension_semantics<arbitrary>], iteration_bounds = array<i64: 2, 1, 1>, scalar_prefetch = 0 : i64, scratch_operands = 1 : i64, tpu.core_type = #tpu.core_type<tc>, window_params = [{transform_indices = @transform_0, window_bounds = array<i64: 32, 128>}, {transform_indices = @transform_1, window_bounds = array<i64: 128, 128>}, {transform_indices = @transform_2, window_bounds = array<i64: 2, 128>}, {transform_indices = @transform_3, window_bounds = array<i64: 32, 128>}, {transform_indices = @transform_4, window_bounds = array<i64: 32, 128>}]} {
    %c0_i32 = arith.constant 0 : i32
    %0 = arith.cmpi eq, %arg2, %c0_i32 : i32
    %1 = arith.extui %0 : i1 to i32
    %c0_i32_0 = arith.constant 0 : i32
    %2 = arith.cmpi ne, %1, %c0_i32_0 : i32
    scf.if %2 {
      %cst_10 = arith.constant 0.000000e+00 : f32
      %12 = vector.broadcast %cst_10 : f32 to vector<32x128xf32>
      %c0_11 = arith.constant 0 : index
      %c0_12 = arith.constant 0 : index
      %13 = vector.load %arg8[%c0_11, %c0_12] : memref<32x128xf32, #tpu.memory_space<vmem>>, vector<32x128xf32>
      tpu.vector_store %arg8[%c0_11, %c0_12], %12 {strides = array<i32>} : memref<32x128xf32, #tpu.memory_space<vmem>>, vector<32x128xf32>,
    } else {
    }
    %c0 = arith.constant 0 : index
    %c0_1 = arith.constant 0 : index
    %3 = vector.load %arg8[%c0, %c0_1] : memref<32x128xf32, #tpu.memory_space<vmem>>, vector<32x128xf32>
    %c0_2 = arith.constant 0 : index
    %c0_3 = arith.constant 0 : index
    %4 = vector.load %arg3[%c0_2, %c0_3] : memref<32x128xbf16, #tpu.memory_space<vmem>>, vector<32x128xbf16>
    %c0_4 = arith.constant 0 : index
    %c0_5 = arith.constant 0 : index
    %5 = vector.load %arg4[%c0_4, %c0_5] : memref<128x128xbf16, #tpu.memory_space<vmem>>, vector<128x128xbf16>
    %cst = arith.constant dense<0.000000e+00> : vector<32x128xf32>
    %6 = tpu.matmul %4, %5, %cst {dimension_numbers = #tpu.dot_dimension_numbers<[1], [0], [0], [1], [0, 0, 1, 1], [], []>} : vector<32x128xbf16>, vector<128x128xbf16>, vector<32x128xf32> -> vector<32x128xf32>
    %7 = arith.addf %3, %6 : vector<32x128xf32>
    %c0_6 = arith.constant 0 : index
    %c0_7 = arith.constant 0 : index
    %8 = vector.load %arg8[%c0_6, %c0_7] : memref<32x128xf32, #tpu.memory_space<vmem>>, vector<32x128xf32>
    tpu.vector_store %arg8[%c0_6, %c0_7], %7 {strides = array<i32>} : memref<32x128xf32, #tpu.memory_space<vmem>>, vector<32x128xf32>,
    %c0_i32_8 = arith.constant 0 : i32
    %9 = arith.cmpi eq, %arg2, %c0_i32_8 : i32
    %10 = arith.extui %9 : i1 to i32
    %c0_i32_9 = arith.constant 0 : i32
    %11 = arith.cmpi ne, %10, %c0_i32_9 : i32
    scf.if %11 {
      %c0_10 = arith.constant 0 : index
      %c0_11 = arith.constant 0 : index
      %12 = vector.load %arg8[%c0_10, %c0_11] : memref<32x128xf32, #tpu.memory_space<vmem>>, vector<32x128xf32>
      %c0_12 = arith.constant 0 : index
      %c0_13 = arith.constant 0 : index
      %13 = vector.load %arg5[%c0_12, %c0_13] : memref<2x128xf32, #tpu.memory_space<vmem>>, vector<1x128xf32>
      %14 = vector.broadcast %13 : vector<1x128xf32> to vector<32x128xf32>
      %15 = arith.mulf %12, %14 : vector<32x128xf32>
      %c1 = arith.constant 1 : index
      %c0_14 = arith.constant 0 : index
      %16 = vector.load %arg5[%c1, %c0_14] : memref<2x128xf32, #tpu.memory_space<vmem>>, vector<1x128xf32>
      %17 = vector.broadcast %16 : vector<1x128xf32> to vector<32x128xf32>
      %18 = arith.addf %15, %17 : vector<32x128xf32>
      %c0_15 = arith.constant 0 : index
      %c0_16 = arith.constant 0 : index
      %19 = vector.load %arg6[%c0_15, %c0_16] : memref<32x128xbf16, #tpu.memory_space<vmem>>, vector<32x128xbf16>
      %20 = arith.extf %19 : vector<32x128xbf16> to vector<32x128xf32>
      %21 = arith.addf %18, %20 : vector<32x128xf32>
      %cst_17 = arith.constant 0.000000e+00 : f32
      %22 = vector.broadcast %cst_17 : f32 to vector<32x128xf32>
      %23 = arith.maximumf %21, %22 : vector<32x128xf32>
      %24 = arith.truncf %23 : vector<32x128xf32> to vector<32x128xbf16>
      %c0_18 = arith.constant 0 : index
      %c0_19 = arith.constant 0 : index
      %25 = vector.load %arg7[%c0_18, %c0_19] : memref<32x128xbf16, #tpu.memory_space<vmem>>, vector<32x128xbf16>
      tpu.vector_store %arg7[%c0_18, %c0_19], %24 {strides = array<i32>} : memref<32x128xbf16, #tpu.memory_space<vmem>>, vector<32x128xbf16>,
    } else {
    }
    return
  }
  func.func @transform_0(%arg0: i32, %arg1: i32, %arg2: i32) -> (i32, i32) {
    %c0_i32 = arith.constant 0 : i32
    return %arg0, %arg2 : i32, i32
  }
  func.func @transform_1(%arg0: i32, %arg1: i32, %arg2: i32) -> (i32, i32) {
    %c0_i32 = arith.constant 0 : i32
    return %arg2, %arg1 : i32, i32
  }
  func.func @transform_2(%arg0: i32, %arg1: i32, %arg2: i32) -> (i32, i32) {
    %c0_i32 = arith.constant 0 : i32
    %c0_i32_0 = arith.constant 0 : i32
    return %c0_i32, %arg1 : i32, i32
  }
  func.func @transform_3(%arg0: i32, %arg1: i32, %arg2: i32) -> (i32, i32) {
    %c0_i32 = arith.constant 0 : i32
    return %arg0, %arg1 : i32, i32
  }
  func.func @transform_4(%arg0: i32, %arg1: i32, %arg2: i32) -> (i32, i32) {
    %c0_i32 = arith.constant 0 : i32
    return %arg0, %arg1 : i32, i32
  }
}

module attributes {stable_mosaic.version = 11 : i64} {
  func.func @_head_kernel(%arg0: i32, %arg1: memref<8x5x40xbf16, #tpu.memory_space<vmem>>, %arg2: memref<40x32xbf16, #tpu.memory_space<vmem>>, %arg3: memref<1x32xf32, #tpu.memory_space<vmem>>, %arg4: memref<32x128xbf16, #tpu.memory_space<vmem>>, %arg5: memref<1x128xf32, #tpu.memory_space<vmem>>, %arg6: memref<8x128xf32, #tpu.memory_space<vmem>>) attributes {dimension_semantics = [#tpu.dimension_semantics<arbitrary>], iteration_bounds = array<i64: 1>, scalar_prefetch = 0 : i64, scratch_operands = 0 : i64, tpu.core_type = #tpu.core_type<tc>, window_params = [{pipeline_mode = #tpu.pipeline_mode<synchronous>, transform_indices = @transform_0, window_bounds = array<i64: 8, 5, 40>}, {pipeline_mode = #tpu.pipeline_mode<synchronous>, transform_indices = @transform_1, window_bounds = array<i64: 40, 32>}, {pipeline_mode = #tpu.pipeline_mode<synchronous>, transform_indices = @transform_2, window_bounds = array<i64: 1, 32>}, {pipeline_mode = #tpu.pipeline_mode<synchronous>, transform_indices = @transform_3, window_bounds = array<i64: 32, 128>}, {pipeline_mode = #tpu.pipeline_mode<synchronous>, transform_indices = @transform_4, window_bounds = array<i64: 1, 128>}, {pipeline_mode = #tpu.pipeline_mode<synchronous>, transform_indices = @transform_5, window_bounds = array<i64: 8, 128>}]} {
    %c0 = arith.constant 0 : index
    %c0_0 = arith.constant 0 : index
    %c0_1 = arith.constant 0 : index
    %0 = vector.load %arg1[%c0, %c0_0, %c0_1] : memref<8x5x40xbf16, #tpu.memory_space<vmem>>, vector<8x5x40xbf16>
    %1 = arith.extf %0 : vector<8x5x40xbf16> to vector<8x5x40xf32>
    %cst = arith.constant dense<0.000000e+00> : vector<8x40xf32>
    %2 = vector.multi_reduction <add>, %1, %cst [1] : vector<8x5x40xf32> to vector<8x40xf32>
    %cst_2 = arith.constant 5.000000e+00 : f32
    %3 = vector.broadcast %cst_2 : f32 to vector<8x40xf32>
    %4 = arith.divf %2, %3 : vector<8x40xf32>
    %5 = arith.truncf %4 : vector<8x40xf32> to vector<8x40xbf16>
    %c0_3 = arith.constant 0 : index
    %c0_4 = arith.constant 0 : index
    %6 = vector.load %arg2[%c0_3, %c0_4] : memref<40x32xbf16, #tpu.memory_space<vmem>>, vector<40x32xbf16>
    %cst_5 = arith.constant dense<0.000000e+00> : vector<8x32xf32>
    %7 = tpu.matmul %5, %6, %cst_5 {dimension_numbers = #tpu.dot_dimension_numbers<[1], [0], [0], [1], [0, 0, 1, 1], [], []>} : vector<8x40xbf16>, vector<40x32xbf16>, vector<8x32xf32> -> vector<8x32xf32>
    %c0_6 = arith.constant 0 : index
    %c0_7 = arith.constant 0 : index
    %8 = vector.load %arg3[%c0_6, %c0_7] : memref<1x32xf32, #tpu.memory_space<vmem>>, vector<1x32xf32>
    %9 = vector.broadcast %8 : vector<1x32xf32> to vector<8x32xf32>
    %10 = arith.addf %7, %9 : vector<8x32xf32>
    %11 = arith.truncf %10 : vector<8x32xf32> to vector<8x32xbf16>
    %c0_8 = arith.constant 0 : index
    %c0_9 = arith.constant 0 : index
    %12 = vector.load %arg4[%c0_8, %c0_9] : memref<32x128xbf16, #tpu.memory_space<vmem>>, vector<32x128xbf16>
    %cst_10 = arith.constant dense<0.000000e+00> : vector<8x128xf32>
    %13 = tpu.matmul %11, %12, %cst_10 {dimension_numbers = #tpu.dot_dimension_numbers<[1], [0], [0], [1], [0, 0, 1, 1], [], []>} : vector<8x32xbf16>, vector<32x128xbf16>, vector<8x128xf32> -> vector<8x128xf32>
    %c0_11 = arith.constant 0 : index
    %c0_12 = arith.constant 0 : index
    %14 = vector.load %arg5[%c0_11, %c0_12] : memref<1x128xf32, #tpu.memory_space<vmem>>, vector<1x128xf32>
    %15 = vector.broadcast %14 : vector<1x128xf32> to vector<8x128xf32>
    %16 = arith.addf %13, %15 : vector<8x128xf32>
    %c0_13 = arith.constant 0 : index
    %c0_14 = arith.constant 0 : index
    %17 = vector.load %arg6[%c0_13, %c0_14] : memref<8x128xf32, #tpu.memory_space<vmem>>, vector<8x128xf32>
    tpu.vector_store %arg6[%c0_13, %c0_14], %16 {strides = array<i32>} : memref<8x128xf32, #tpu.memory_space<vmem>>, vector<8x128xf32>,
    return
  }
  func.func @transform_0(%arg0: i32) -> (i32, i32, i32) {
    %c0_i32 = arith.constant 0 : i32
    %c0_i32_0 = arith.constant 0 : i32
    %c0_i32_1 = arith.constant 0 : i32
    %c0_i32_2 = arith.constant 0 : i32
    return %c0_i32, %c0_i32_0, %c0_i32_1 : i32, i32, i32
  }
  func.func @transform_1(%arg0: i32) -> (i32, i32) {
    %c0_i32 = arith.constant 0 : i32
    %c0_i32_0 = arith.constant 0 : i32
    %c0_i32_1 = arith.constant 0 : i32
    return %c0_i32, %c0_i32_0 : i32, i32
  }
  func.func @transform_2(%arg0: i32) -> (i32, i32) {
    %c0_i32 = arith.constant 0 : i32
    %c0_i32_0 = arith.constant 0 : i32
    %c0_i32_1 = arith.constant 0 : i32
    return %c0_i32, %c0_i32_0 : i32, i32
  }
  func.func @transform_3(%arg0: i32) -> (i32, i32) {
    %c0_i32 = arith.constant 0 : i32
    %c0_i32_0 = arith.constant 0 : i32
    %c0_i32_1 = arith.constant 0 : i32
    return %c0_i32, %c0_i32_0 : i32, i32
  }
  func.func @transform_4(%arg0: i32) -> (i32, i32) {
    %c0_i32 = arith.constant 0 : i32
    %c0_i32_0 = arith.constant 0 : i32
    %c0_i32_1 = arith.constant 0 : i32
    return %c0_i32, %c0_i32_0 : i32, i32
  }
  func.func @transform_5(%arg0: i32) -> (i32, i32) {
    %c0_i32 = arith.constant 0 : i32
    %c0_i32_0 = arith.constant 0 : i32
    %c0_i32_1 = arith.constant 0 : i32
    return %c0_i32, %c0_i32_0 : i32, i32
  }
}

</mosaic_0001>

<llo_original>
// kernel: forward.7
$region0: #{forward.7}
  #allocation0 [shape = 'u32[]', space=smem, size = 0x4, offset = 0x4, fixed_abs, tag = 'smem constant byte address 0x4 - core index']
  #allocation1 [shape = 'u32[72,128]{1,0:T(1,128)}', space=vmem, size = 0x9000, scoped, tag = 'internal scratch']
  #allocation2 [shape = 'f32[208,128]{1,0:T(8,128)}', space=vmem, size = 0x1a000, scoped, tag = 'scratch operand']
  %s0 = inlined_call_operand.vmem [shape: bf16[416,128], index: 0, kind: input, shape index: {}]
  %s1 = inlined_call_operand.vmem [shape: bf16[128,128], index: 1, kind: input, shape index: {}]
  %s2 = inlined_call_operand.vmem [shape: f32[2,128], index: 2, kind: input, shape index: {}]
  %s3 = inlined_call_operand.vmem [shape: bf16[416,128], index: 3, kind: output, shape index: {}]
  %s4 = sld [smem:[#allocation0]]
  $region53: #{forward.7} parent=0
    _
  %s6 = ssub.s32 1, %s4
  %s7 = scalar_select 0, %s6, %s4
  loop: start=0, step=1, limit=4
  $region2: #{forward.7} parent=0 // loop_pre_header
    _
  $region3: #{forward.7} parent=0 // loop_header
    %s9 = sphi 0, %s13
    %p10 = scmp.ge.s32.totalorder %s9, 4
    %s16 = sphi 0, %s35
    %s17 = sphi 0, %s31
    %s18 = sphi 0, %s27
    %s19 = sphi 0, %s16
    %s20 = sphi 0, %s17
    %s21 = sphi 0, %s18
    %s22 = sphi 0, %s19
    %s23 = sphi 0, %s20
    %s24 = sphi 0, %s21
    %s40 = sphi 0, %s42
    %s43 = sphi 0, %s40
    %s44 = sphi 0, %s43
    %s60 = sphi 0, %s44
    %s68 = sphi 0, %s70
    %s71 = sphi 0, %s68
    %s72 = sphi 0, %s71
    %s88 = sphi 0, %s72
    %s94 = sphi 0, %s96
    %s97 = sphi 0, %s94
    %s98 = sphi 0, %s97
    %s114 = sphi 0, %s98
    %s122 = sphi 0, %s124
    %s125 = sphi 0, %s122
    %s126 = sphi 0, %s125
    %s142 = sphi 0, %s126
  $region4: #{forward.7} parent=0 // loop_header_branch
    %12 = sbr.rel (%p10) target = $region8
  $region5: #{forward.7} parent=0 // loop_body
    %s14 = ssub.s32 %s9, 1
    %s15 = ssub.s32 %s9, 2
    %s25 = sadd.s32 1, %s18
    %p26 = scmp.ge.s32.totalorder %s25, 1
    %s27 = scalar_select %p26, 0, %s25
    %s28 = sadd.s32 1, %s17
    %s29 = scalar_select %p26, %s28, %s17
    %p30 = scmp.ge.s32.totalorder %s29, 1
    %s31 = scalar_select %p30, 0, %s29
    %s32 = sadd.s32 1, %s16
    %s33 = scalar_select %p30, %s32, %s16
    %p34 = scmp.ge.s32.totalorder %s33, 2
    %s35 = scalar_select %p34, 0, %s33
    %s36 = ssub.s32 %s16, %s35
    %s37 = ssub.s32 %s18, %s27
    %s38 = sor.u32 %s36, %s37
    %p39 = scmp.eq.s32.totalorder %s38, 0
    %s41 = sadd.s32 %s40, 1
    %s42 = scalar_select %p39, %s40, %s41
    %p45 = pneg %p39
    %p46 = scmp.eq.s32.totalorder %s9, 1
    %p47 = por %p45, %p46
    %p48 = scmp.ne.s32.totalorder %s40, %s43
    %p49 = scmp.eq.s32.totalorder %s9, 0
    %p50 = por %p48, %p49
    %p51 = scmp.ne.s32.totalorder %s40, %s43
    %p52 = scmp.eq.s32.totalorder %s14, 1
    %p53 = por %p51, %p52
    %p54 = scmp.ne.s32.totalorder %s43, %s44
    %p55 = scmp.eq.s32.totalorder %s14, 0
    %p56 = por %p54, %p55
    %p57 = scmp.ne.s32.totalorder %s43, %s44
    %p58 = scmp.eq.s32.totalorder %s15, 1
    %p59 = por %p57, %p58
    %p61 = scmp.ne.s32.totalorder %s44, %s60
    %p62 = scmp.eq.s32.totalorder %s15, 0
    %p63 = por %p61, %p62
    %s64 = ssub.s32 %s18, %s27
    %s65 = ssub.s32 %s17, %s31
    %s66 = sor.u32 %s64, %s65
    %p67 = scmp.eq.s32.totalorder %s66, 0
    %s69 = sadd.s32 %s68, 1
    %s70 = scalar_select %p67, %s68, %s69
    %p73 = pneg %p67
    %p74 = scmp.eq.s32.totalorder %s9, 1
    %p75 = por %p73, %p74
    %p76 = scmp.ne.s32.totalorder %s68, %s71
    %p77 = scmp.eq.s32.totalorder %s9, 0
    %p78 = por %p76, %p77
    %p79 = scmp.ne.s32.totalorder %s68, %s71
    %p80 = scmp.eq.s32.totalorder %s14, 1
    %p81 = por %p79, %p80
    %p82 = scmp.ne.s32.totalorder %s71, %s72
    %p83 = scmp.eq.s32.totalorder %s14, 0
    %p84 = por %p82, %p83
    %p85 = scmp.ne.s32.totalorder %s71, %s72
    %p86 = scmp.eq.s32.totalorder %s15, 1
    %p87 = por %p85, %p86
    %p89 = scmp.ne.s32.totalorder %s72, %s88
    %p90 = scmp.eq.s32.totalorder %s15, 0
    %p91 = por %p89, %p90
    %s92 = ssub.s32 %s17, %s31
    %p93 = scmp.eq.s32.totalorder %s92, 0
    %s95 = sadd.s32 %s94, 1
    %s96 = scalar_select %p93, %s94, %s95
    %p99 = pneg %p93
    %p100 = scmp.eq.s32.totalorder %s9, 1
    %p101 = por %p99, %p100
    %p102 = scmp.ne.s32.totalorder %s94, %s97
    %p103 = scmp.eq.s32.totalorder %s9, 0
    %p104 = por %p102, %p103
    %p105 = scmp.ne.s32.totalorder %s94, %s97
    %p106 = scmp.eq.s32.totalorder %s14, 1
    %p107 = por %p105, %p106
    %p108 = scmp.ne.s32.totalorder %s97, %s98
    %p109 = scmp.eq.s32.totalorder %s14, 0
    %p110 = por %p108, %p109
    %p111 = scmp.ne.s32.totalorder %s97, %s98
    %p112 = scmp.eq.s32.totalorder %s15, 1
    %p113 = por %p111, %p112
    %p115 = scmp.ne.s32.totalorder %s98, %s114
    %p116 = scmp.eq.s32.totalorder %s15, 0
    %p117 = por %p115, %p116
    %s118 = ssub.s32 %s16, %s35
    %s119 = ssub.s32 %s17, %s31
    %s120 = sor.u32 %s118, %s119
    %p121 = scmp.eq.s32.totalorder %s120, 0
    %s123 = sadd.s32 %s122, 1
    %s124 = scalar_select %p121, %s122, %s123
    %p127 = pneg %p121
    %p128 = scmp.eq.s32.totalorder %s9, 1
    %p129 = por %p127, %p128
    %p130 = scmp.ne.s32.totalorder %s122, %s125
    %p131 = scmp.eq.s32.totalorder %s9, 0
    %p132 = por %p130, %p131
    %p133 = scmp.ne.s32.totalorder %s122, %s125
    %p134 = scmp.eq.s32.totalorder %s14, 1
    %p135 = por %p133, %p134
    %p136 = scmp.ne.s32.totalorder %s125, %s126
    %p137 = scmp.eq.s32.totalorder %s14, 0
    %p138 = por %p136, %p137
    %p139 = scmp.ne.s32.totalorder %s125, %s126
    %p140 = scmp.eq.s32.totalorder %s15, 1
    %p141 = por %p139, %p140
    %p143 = scmp.ne.s32.totalorder %s126, %s142
    %p144 = scmp.eq.s32.totalorder %s15, 0
    %p145 = por %p143, %p144
    %p146 = scmp.le.s32.totalorder 1, %s9
    %p147 = scmp.lt.s32.totalorder %s9, 3
    %p148 = pnand %p146, %p147
    %p149 = pneg %p148
    // Predicated region
    $region9: #{forward.7} parent=5 // pred_check
      _
    $region10: #{forward.7} parent=5 // pred_check_branch
      %151 = sbr.rel (%p148) target = $region12
    $region11: #{forward.7} parent=5 // pred_region
      %s152 = ssub.s32 %s9, 1
      // Predicated region
      $region13: #{forward.7} parent=11 // pred_check
        %p153 = pneg %p84
      $region14: #{forward.7} parent=11 // pred_check_branch
        %155 = sbr.rel (%p153) target = $region16
      $region15: #{forward.7} parent=11 // pred_region
        %s156 = smul.u32 16, %s21
        %p157 = scmp.lt.s32.totalorder %s156, 15
        %s158 = scalar_select %p157, %s156, 15
        %p159 = scmp.lt.s32.totalorder %s20, 0
        %s160 = scalar_select %p159, %s20, 0
        %s161 = sadd.s32 %s160, %s158
        %s162 = smul.addr %s161, 4
        %s163 = scalar_lea.vmem %s1, %s162
        %s164 = smul.u32 16, %s21
      $region16: #{forward.7} parent=11 // pred_fallthru
        _
      // Predicated region
      $region17: #{forward.7} parent=11 // pred_check
        %p165 = pneg %p110
      $region18: #{forward.7} parent=11 // pred_check_branch
        %167 = sbr.rel (%p165) target = $region20
      $region19: #{forward.7} parent=11 // pred_region
        %p168 = scmp.lt.s32.totalorder %s20, 0
        %s169 = scalar_select %p168, %s20, 0
        %s170 = smul.addr %s169, 2
        %s171 = scalar_lea.vmem %s2, %s170
      $region20: #{forward.7} parent=11 // pred_fallthru
        _
    $region12: #{forward.7} parent=5 // pred_fallthru
      _
    %p172 = scmp.lt.s32.totalorder %s9, 2
    // Predicated region
    $region21: #{forward.7} parent=5 // pred_check
      %p173 = pneg %p172
    $region22: #{forward.7} parent=5 // pred_check_branch
      %175 = sbr.rel (%p173) target = $region24
    $region23: #{forward.7} parent=5 // pred_region
      // Predicated region
      $region25: #{forward.7} parent=23 // pred_check
        %p176 = pneg %p50
      $region26: #{forward.7} parent=23 // pred_check_branch
        %178 = sbr.rel (%p176) target = $region28
      $region27: #{forward.7} parent=23 // pred_region
        %s179 = smul.u32 26, %s16
        %p180 = scmp.lt.s32.totalorder %s179, 51
        %s181 = scalar_select %p180, %s179, 51
        %p182 = scmp.lt.s32.totalorder %s18, 0
        %s183 = scalar_select %p182, %s18, 0
        %s184 = sadd.s32 %s183, %s181
        %s185 = smul.addr %s184, 4
        %s186 = scalar_lea.vmem %s0, %s185
        %s187 = smul.u32 26, %s16
      $region28: #{forward.7} parent=23 // pred_fallthru
        _
    $region24: #{forward.7} parent=5 // pred_fallthru
      _
    %p188 = scmp.le.s32.totalorder 1, %s9
    %p189 = scmp.lt.s32.totalorder %s9, 3
    %p190 = pnand %p188, %p189
    %p191 = pneg %p190
    // Predicated region
    $region29: #{forward.7} parent=5 // pred_check
      _
    $region30: #{forward.7} parent=5 // pred_check_branch
      %193 = sbr.rel (%p190) target = $region32
    $region31: #{forward.7} parent=5 // pred_region
      %s194 = ssub.s32 %s9, 1
      %s195 = smul.u32 26, %s19
      %p196 = scmp.lt.s32.totalorder %s195, 51
      %s197 = scalar_select %p196, %s195, 51
      %p198 = scmp.lt.s32.totalorder %s21, 0
      %s199 = scalar_select %p198, %s21, 0
      %s200 = sadd.s32 %s199, %s197
      %s201 = smul.addr %s200, 4
      %s202 = scalar_lea.vmem %s0, %s201
      %p203 = pneg %p56
      %p204 = pneg %p53
      %s205 = smul.u32 16, %s21
      %p206 = scmp.lt.s32.totalorder %s205, 15
      %s207 = scalar_select %p206, %s205, 15
      %p208 = scmp.lt.s32.totalorder %s20, 0
      %s209 = scalar_select %p208, %s20, 0
      %s210 = sadd.s32 %s209, %s207
      %s211 = smul.addr %s210, 4
      %s212 = scalar_lea.vmem %s1, %s211
      %p213 = pneg %p84
      %p214 = pneg %p81
      %p215 = scmp.lt.s32.totalorder %s20, 0
      %s216 = scalar_select %p215, %s20, 0
      %s217 = smul.addr %s216, 2
      %s218 = scalar_lea.vmem %s2, %s217
      %p219 = pneg %p110
      %p220 = pneg %p107
      %p221 = pneg %p138
      %p222 = pneg %p135
      %s223 = smul.u32 26, %s19
      %p224 = scmp.lt.s32.totalorder %s223, 51
      %s225 = scalar_select %p224, %s223, 51
      %p226 = scmp.lt.s32.totalorder %s20, 0
      %s227 = scalar_select %p226, %s20, 0
      %s228 = sadd.s32 %s227, %s225
      %s229 = smul.addr %s228, 4
      %s230 = scalar_lea.vmem %s3, %s229
      %s231 = smul.u32 26, %s19
      %p232 = scmp.lt.s32.totalorder %s231, 51
      %s233 = scalar_select %p232, %s231, 51
      %p234 = scmp.lt.s32.totalorder %s21, 0
      %s235 = scalar_select %p234, %s21, 0
      %s236 = sadd.s32 %s235, %s233
      %s237 = smul.addr %s236, 4
      %s238 = scalar_lea.vmem %s0, %s237
      %s239 = smul.u32 26, %s19
      %s240 = smul.u32 16, %s21
      %p241 = scmp.lt.s32.totalorder %s240, 15
      %s242 = scalar_select %p241, %s240, 15
      %p243 = scmp.lt.s32.totalorder %s20, 0
      %s244 = scalar_select %p243, %s20, 0
      %s245 = sadd.s32 %s244, %s242
      %s246 = smul.addr %s245, 4
      %s247 = scalar_lea.vmem %s1, %s246
      %s248 = smul.u32 16, %s21
      %p249 = scmp.lt.s32.totalorder %s20, 0
      %s250 = scalar_select %p249, %s20, 0
      %s251 = smul.addr %s250, 2
      %s252 = scalar_lea.vmem %s2, %s251
      %s253 = smul.u32 26, %s19
      %p254 = scmp.lt.s32.totalorder %s253, 51
      %s255 = scalar_select %p254, %s253, 51
      %p256 = scmp.lt.s32.totalorder %s20, 0
      %s257 = scalar_select %p256, %s20, 0
      %s258 = sadd.s32 %s257, %s255
      %s259 = smul.addr %s258, 4
      %s260 = scalar_lea.vmem %s3, %s259
      %s261 = smul.u32 26, %s19
      %p262 = scmp.eq.s32.totalorder %s21, 0
      // Predicated region
      $region33: #{forward.7} parent=31 // pred_check
        %p263 = pneg %p262
      $region34: #{forward.7} parent=31 // pred_check_branch
        %265 = sbr.rel (%p263) target = $region36
      $region35: #{forward.7} parent=31 // pred_region
        %266 = vst [vmem:[#allocation2] sm:$0xff] 0.0
        %267 = vst [vmem:[#allocation2 + $0x8] sm:$0xff] 0.0
        %268 = vst [vmem:[#allocation2 + $0x10] sm:$0xff] 0.0
        %269 = vst [vmem:[#allocation2 + $0x18] sm:$0xff] 0.0
        %270 = vst [vmem:[#allocation2 + $0x20] sm:$0xff] 0.0
        %271 = vst [vmem:[#allocation2 + $0x28] sm:$0xff] 0.0
        %272 = vst [vmem:[#allocation2 + $0x30] sm:$0xff] 0.0
        %273 = vst [vmem:[#allocation2 + $0x38] sm:$0xff] 0.0
        %274 = vst [vmem:[#allocation2 + $0x40] sm:$0xff] 0.0
        %275 = vst [vmem:[#allocation2 + $0x48] sm:$0xff] 0.0
        %276 = vst [vmem:[#allocation2 + $0x50] sm:$0xff] 0.0
        %277 = vst [vmem:[#allocation2 + $0x58] sm:$0xff] 0.0
        %278 = vst [vmem:[#allocation2 + $0x60] sm:$0xff] 0.0
        %279 = vst [vmem:[#allocation2 + $0x68] sm:$0xff] 0.0
        %280 = vst [vmem:[#allocation2 + $0x70] sm:$0xff] 0.0
        %281 = vst [vmem:[#allocation2 + $0x78] sm:$0xff] 0.0
        %282 = vst [vmem:[#allocation2 + $0x80] sm:$0xff] 0.0
        %283 = vst [vmem:[#allocation2 + $0x88] sm:$0xff] 0.0
        %284 = vst [vmem:[#allocation2 + $0x90] sm:$0xff] 0.0
        %285 = vst [vmem:[#allocation2 + $0x98] sm:$0xff] 0.0
        %286 = vst [vmem:[#allocation2 + $0xa0] sm:$0xff] 0.0
        %287 = vst [vmem:[#allocation2 + $0xa8] sm:$0xff] 0.0
        %288 = vst [vmem:[#allocation2 + $0xb0] sm:$0xff] 0.0
        %289 = vst [vmem:[#allocation2 + $0xb8] sm:$0xff] 0.0
        %290 = vst [vmem:[#allocation2 + $0xc0] sm:$0xff] 0.0
        %291 = vst [vmem:[#allocation2 + $0xc8] sm:$0xff] 0.0
      $region36: #{forward.7} parent=31 // pred_fallthru
        _
      %v292 = vld [vmem:[#allocation2] sm:$0xff]
      %v293 = vld [vmem:[#allocation2 + $0x8] sm:$0xff]
      %v294 = vld [vmem:[#allocation2 + $0x10] sm:$0xff]
      %v295 = vld [vmem:[#allocation2 + $0x18] sm:$0xff]
      %v296 = vld [vmem:[#allocation2 + $0x20] sm:$0xff]
      %v297 = vld [vmem:[#allocation2 + $0x28] sm:$0xff]
      %v298 = vld [vmem:[#allocation2 + $0x30] sm:$0xff]
      %v299 = vld [vmem:[#allocation2 + $0x38] sm:$0xff]
      %v300 = vld [vmem:[#allocation2 + $0x40] sm:$0xff]
      %v301 = vld [vmem:[#allocation2 + $0x48] sm:$0xff]
      %v302 = vld [vmem:[#allocation2 + $0x50] sm:$0xff]
      %v303 = vld [vmem:[#allocation2 + $0x58] sm:$0xff]
      %v304 = vld [vmem:[#allocation2 + $0x60] sm:$0xff]
      %v305 = vld [vmem:[#allocation2 + $0x68] sm:$0xff]
      %v306 = vld [vmem:[#allocation2 + $0x70] sm:$0xff]
      %v307 = vld [vmem:[#allocation2 + $0x78] sm:$0xff]
      %v308 = vld [vmem:[#allocation2 + $0x80] sm:$0xff]
      %v309 = vld [vmem:[#allocation2 + $0x88] sm:$0xff]
      %v310 = vld [vmem:[#allocation2 + $0x90] sm:$0xff]
      %v311 = vld [vmem:[#allocation2 + $0x98] sm:$0xff]
      %v312 = vld [vmem:[#allocation2 + $0xa0] sm:$0xff]
      %v313 = vld [vmem:[#allocation2 + $0xa8] sm:$0xff]
      %v314 = vld [vmem:[#allocation2 + $0xb0] sm:$0xff]
      %v315 = vld [vmem:[#allocation2 + $0xb8] sm:$0xff]
      %v316 = vld [vmem:[#allocation2 + $0xc0] sm:$0xff]
      %v317 = vld [vmem:[#allocation2 + $0xc8] sm:$0xff]
      %v318 = vld [vmem:[%s238] sm:$0xf]
      %v319 = vld [vmem:[%s238 + $0x4] sm:$0xf]
      %v320 = vld [vmem:[%s238 + $0x8] sm:$0xf]
      %v321 = vld [vmem:[%s238 + $0xc] sm:$0xf]
      %v322 = vld [vmem:[%s238 + $0x10] sm:$0xf]
      %v323 = vld [vmem:[%s238 + $0x14] sm:$0xf]
      %v324 = vld [vmem:[%s238 + $0x18] sm:$0xf]
      %v325 = vld [vmem:[%s238 + $0x1c] sm:$0xf]
      %v326 = vld [vmem:[%s238 + $0x20] sm:$0xf]
      %v327 = vld [vmem:[%s238 + $0x24] sm:$0xf]
      %v328 = vld [vmem:[%s238 + $0x28] sm:$0xf]
      %v329 = vld [vmem:[%s238 + $0x2c] sm:$0xf]
      %v330 = vld [vmem:[%s238 + $0x30] sm:$0xf]
      %v331 = vld [vmem:[%s238 + $0x34] sm:$0xf]
      %v332 = vld [vmem:[%s238 + $0x38] sm:$0xf]
      %v333 = vld [vmem:[%s238 + $0x3c] sm:$0xf]
      %v334 = vld [vmem:[%s238 + $0x40] sm:$0xf]
      %v335 = vld [vmem:[%s238 + $0x44] sm:$0xf]
      %v336 = vld [vmem:[%s238 + $0x48] sm:$0xf]
      %v337 = vld [vmem:[%s238 + $0x4c] sm:$0xf]
      %v338 = vld [vmem:[%s238 + $0x50] sm:$0xf]
      %v339 = vld [vmem:[%s238 + $0x54] sm:$0xf]
      %v340 = vld [vmem:[%s238 + $0x58] sm:$0xf]
      %v341 = vld [vmem:[%s238 + $0x5c] sm:$0xf]
      %v342 = vld [vmem:[%s238 + $0x60] sm:$0xf]
      %v343 = vld [vmem:[%s238 + $0x64] sm:$0xf]
      %v344 = vld [vmem:[%s247] sm:$0xf]
      %v345 = vld [vmem:[%s247 + $0x4] sm:$0xf]
      %v346 = vld [vmem:[%s247 + $0x8] sm:$0xf]
      %v347 = vld [vmem:[%s247 + $0xc] sm:$0xf]
      %v348 = vld [vmem:[%s247 + $0x10] sm:$0xf]
      %v349 = vld [vmem:[%s247 + $0x14] sm:$0xf]
      %v350 = vld [vmem:[%s247 + $0x18] sm:$0xf]
      %v351 = vld [vmem:[%s247 + $0x1c] sm:$0xf]
      %v352 = vld [vmem:[%s247 + $0x20] sm:$0xf]
      %v353 = vld [vmem:[%s247 + $0x24] sm:$0xf]
      %v354 = vld [vmem:[%s247 + $0x28] sm:$0xf]
      %v355 = vld [vmem:[%s247 + $0x2c] sm:$0xf]
      %v356 = vld [vmem:[%s247 + $0x30] sm:$0xf]
      %v357 = vld [vmem:[%s247 + $0x34] sm:$0xf]
      %v358 = vld [vmem:[%s247 + $0x38] sm:$0xf]
      %v359 = vld [vmem:[%s247 + $0x3c] sm:$0xf]
      %v386 = vunpack.c.l.b16 %v318
      %v387 = vunpack.c.l.b16 %v319
      %v388 = vunpack.c.l.b16 %v320
      %v389 = vunpack.c.l.b16 %v321
      %v390 = vunpack.c.l.b16 %v322
      %v391 = vunpack.c.l.b16 %v323
      %v392 = vunpack.c.l.b16 %v324
      %v393 = vunpack.c.l.b16 %v325
      %v394 = vunpack.c.l.b16 %v326
      %v395 = vunpack.c.l.b16 %v327
      %v396 = vunpack.c.l.b16 %v328
      %v397 = vunpack.c.l.b16 %v329
      %v398 = vunpack.c.l.b16 %v330
      %v399 = vunpack.c.l.b16 %v331
      %v400 = vunpack.c.l.b16 %v332
      %v401 = vunpack.c.l.b16 %v333
      %v402 = vunpack.c.l.b16 %v334
      %v403 = vunpack.c.l.b16 %v335
      %v404 = vunpack.c.l.b16 %v336
      %v405 = vunpack.c.l.b16 %v337
      %v406 = vunpack.c.l.b16 %v338
      %v407 = vunpack.c.l.b16 %v339
      %v408 = vunpack.c.l.b16 %v340
      %v409 = vunpack.c.l.b16 %v341
      %v410 = vunpack.c.l.b16 %v342
      %v411 = vunpack.c.l.b16 %v343
      %v412 = vpack.c.b16 %v387, %v386
      %v413 = vpack.c.b16 %v389, %v388
      %v414 = vpack.c.b16 %v391, %v390
      %v415 = vpack.c.b16 %v393, %v392
      %v416 = vpack.c.b16 %v395, %v394
      %v417 = vpack.c.b16 %v397, %v396
      %v418 = vpack.c.b16 %v399, %v398
      %v419 = vpack.c.b16 %v401, %v400
      %v420 = vpack.c.b16 %v403, %v402
      %v421 = vpack.c.b16 %v405, %v404
      %v422 = vpack.c.b16 %v407, %v406
      %v423 = vpack.c.b16 %v409, %v408
      %v424 = vpack.c.b16 %v411, %v410
      %v454 = vunpack.c.l.b16 %v344
      %v455 = vunpack.c.l.b16 %v345
      %v456 = vunpack.c.l.b16 %v346
      %v457 = vunpack.c.l.b16 %v347
      %v458 = vunpack.c.l.b16 %v348
      %v459 = vunpack.c.l.b16 %v349
      %v460 = vunpack.c.l.b16 %v350
      %v461 = vunpack.c.l.b16 %v351
      %v462 = vunpack.c.l.b16 %v352
      %v463 = vunpack.c.l.b16 %v353
      %v464 = vunpack.c.l.b16 %v354
      %v465 = vunpack.c.l.b16 %v355
      %v466 = vunpack.c.l.b16 %v356
      %v467 = vunpack.c.l.b16 %v357
      %v468 = vunpack.c.l.b16 %v358
      %v469 = vunpack.c.l.b16 %v359
      %v470 = vpack.c.b16 %v455, %v454
      %v471 = vpack.c.b16 %v457, %v456
      %v472 = vpack.c.b16 %v459, %v458
      %v473 = vpack.c.b16 %v461, %v460
      %v474 = vpack.c.b16 %v463, %v462
      %v475 = vpack.c.b16 %v465, %v464
      %v476 = vpack.c.b16 %v467, %v466
      %v477 = vpack.c.b16 %v469, %v468
      %486 = vmatpush.bf16.msra.mxu0 %v477
      %487 = vmatpush.bf16.msra.mxu0 %v476
      %488 = vmatpush.bf16.msra.mxu0 %v475
      %489 = vmatpush.bf16.msra.mxu0 %v474
      %490 = vmatpush.bf16.msra.mxu0 %v473
      %491 = vmatpush.bf16.msra.mxu0 %v472
      %492 = vmatpush.bf16.msra.mxu0 %v471
      %493 = vmatpush.bf16.msra.mxu0 %v470
      %494 = vmatmul.bf16.gmra.mxu0 %v412
      %v495 = vpop.f32.mrf.mxu0
      %v496 = vadd.f32 0.0, %v495
      %v497 = vpop.f32.mrf.mxu0
      %v498 = vadd.f32 0.0, %v497
      %499 = vmatmul.bf16.gmra.mxu0 %v413
      %v500 = vpop.f32.mrf.mxu0
      %v501 = vadd.f32 0.0, %v500
      %v502 = vpop.f32.mrf.mxu0
      %v503 = vadd.f32 0.0, %v502
      %504 = vmatmul.bf16.gmra.mxu0 %v414
      %v505 = vpop.f32.mrf.mxu0
      %v506 = vadd.f32 0.0, %v505
      %v507 = vpop.f32.mrf.mxu0
      %v508 = vadd.f32 0.0, %v507
      %509 = vmatmul.bf16.gmra.mxu0 %v415
      %v510 = vpop.f32.mrf.mxu0
      %v511 = vadd.f32 0.0, %v510
      %v512 = vpop.f32.mrf.mxu0
      %v513 = vadd.f32 0.0, %v512
      %514 = vmatmul.bf16.gmra.mxu0 %v416
      %v515 = vpop.f32.mrf.mxu0
      %v516 = vadd.f32 0.0, %v515
      %v517 = vpop.f32.mrf.mxu0
      %v518 = vadd.f32 0.0, %v517
      %519 = vmatmul.bf16.gmra.mxu0 %v417
      %v520 = vpop.f32.mrf.mxu0
      %v521 = vadd.f32 0.0, %v520
      %v522 = vpop.f32.mrf.mxu0
      %v523 = vadd.f32 0.0, %v522
      %524 = vmatmul.bf16.gmra.mxu0 %v418
      %v525 = vpop.f32.mrf.mxu0
      %v526 = vadd.f32 0.0, %v525
      %v527 = vpop.f32.mrf.mxu0
      %v528 = vadd.f32 0.0, %v527
      %529 = vmatmul.bf16.gmra.mxu0 %v419
      %v530 = vpop.f32.mrf.mxu0
      %v531 = vadd.f32 0.0, %v530
      %v532 = vpop.f32.mrf.mxu0
      %v533 = vadd.f32 0.0, %v532
      %534 = vmatmul.bf16.gmra.mxu0 %v420
      %v535 = vpop.f32.mrf.mxu0
      %v536 = vadd.f32 0.0, %v535
      %v537 = vpop.f32.mrf.mxu0
      %v538 = vadd.f32 0.0, %v537
      %539 = vmatmul.bf16.gmra.mxu0 %v421
      %v540 = vpop.f32.mrf.mxu0
      %v541 = vadd.f32 0.0, %v540
      %v542 = vpop.f32.mrf.mxu0
      %v543 = vadd.f32 0.0, %v542
      %544 = vmatmul.bf16.gmra.mxu0 %v422
      %v545 = vpop.f32.mrf.mxu0
      %v546 = vadd.f32 0.0, %v545
      %v547 = vpop.f32.mrf.mxu0
      %v548 = vadd.f32 0.0, %v547
      %549 = vmatmul.bf16.gmra.mxu0 %v423
      %v550 = vpop.f32.mrf.mxu0
      %v551 = vadd.f32 0.0, %v550
      %v552 = vpop.f32.mrf.mxu0
      %v553 = vadd.f32 0.0, %v552
      %554 = vmatmul.bf16.gmra.mxu0 %v424
      %v555 = vpop.f32.mrf.mxu0
      %v556 = vadd.f32 0.0, %v555
      %v557 = vpop.f32.mrf.mxu0
      %v558 = vadd.f32 0.0, %v557
      %559 = vdwg.mxu0
      %v560 = vadd.f32 %v292, %v496
      %v561 = vadd.f32 %v293, %v498
      %v562 = vadd.f32 %v294, %v501
      %v563 = vadd.f32 %v295, %v503
      %v564 = vadd.f32 %v296, %v506
      %v565 = vadd.f32 %v297, %v508
      %v566 = vadd.f32 %v298, %v511
      %v567 = vadd.f32 %v299, %v513
      %v568 = vadd.f32 %v300, %v516
      %v569 = vadd.f32 %v301, %v518
      %v570 = vadd.f32 %v302, %v521
      %v571 = vadd.f32 %v303, %v523
      %v572 = vadd.f32 %v304, %v526
      %v573 = vadd.f32 %v305, %v528
      %v574 = vadd.f32 %v306, %v531
      %v575 = vadd.f32 %v307, %v533
      %v576 = vadd.f32 %v308, %v536
      %v577 = vadd.f32 %v309, %v538
      %v578 = vadd.f32 %v310, %v541
      %v579 = vadd.f32 %v311, %v543
      %v580 = vadd.f32 %v312, %v546
      %v581 = vadd.f32 %v313, %v548
      %v582 = vadd.f32 %v314, %v551
      %v583 = vadd.f32 %v315, %v553
      %v584 = vadd.f32 %v316, %v556
      %v585 = vadd.f32 %v317, %v558
      %586 = vst [vmem:[#allocation2] sm:$0xff] %v560
      %587 = vst [vmem:[#allocation2 + $0x8] sm:$0xff] %v561
      %588 = vst [vmem:[#allocation2 + $0x10] sm:$0xff] %v562
      %589 = vst [vmem:[#allocation2 + $0x18] sm:$0xff] %v563
      %590 = vst [vmem:[#allocation2 + $0x20] sm:$0xff] %v564
      %591 = vst [vmem:[#allocation2 + $0x28] sm:$0xff] %v565
      %592 = vst [vmem:[#allocation2 + $0x30] sm:$0xff] %v566
      %593 = vst [vmem:[#allocation2 + $0x38] sm:$0xff] %v567
      %594 = vst [vmem:[#allocation2 + $0x40] sm:$0xff] %v568
      %595 = vst [vmem:[#allocation2 + $0x48] sm:$0xff] %v569
      %596 = vst [vmem:[#allocation2 + $0x50] sm:$0xff] %v570
      %597 = vst [vmem:[#allocation2 + $0x58] sm:$0xff] %v571
      %598 = vst [vmem:[#allocation2 + $0x60] sm:$0xff] %v572
      %599 = vst [vmem:[#allocation2 + $0x68] sm:$0xff] %v573
      %600 = vst [vmem:[#allocation2 + $0x70] sm:$0xff] %v574
      %601 = vst [vmem:[#allocation2 + $0x78] sm:$0xff] %v575
      %602 = vst [vmem:[#allocation2 + $0x80] sm:$0xff] %v576
      %603 = vst [vmem:[#allocation2 + $0x88] sm:$0xff] %v577
      %604 = vst [vmem:[#allocation2 + $0x90] sm:$0xff] %v578
      %605 = vst [vmem:[#allocation2 + $0x98] sm:$0xff] %v579
      %606 = vst [vmem:[#allocation2 + $0xa0] sm:$0xff] %v580
      %607 = vst [vmem:[#allocation2 + $0xa8] sm:$0xff] %v581
      %608 = vst [vmem:[#allocation2 + $0xb0] sm:$0xff] %v582
      %609 = vst [vmem:[#allocation2 + $0xb8] sm:$0xff] %v583
      %610 = vst [vmem:[#allocation2 + $0xc0] sm:$0xff] %v584
      %611 = vst [vmem:[#allocation2 + $0xc8] sm:$0xff] %v585
      // Predicated region
      $region37: #{forward.7} parent=31 // pred_check
        %p612 = pneg %p262
      $region38: #{forward.7} parent=31 // pred_check_branch
        %614 = sbr.rel (%p612) target = $region40
      $region39: #{forward.7} parent=31 // pred_region
        %v615 = vld [vmem:[#allocation2] sm:$0xff]
        %v616 = vld [vmem:[#allocation2 + $0x8] sm:$0xff]
        %v617 = vld [vmem:[#allocation2 + $0x10] sm:$0xff]
        %v618 = vld [vmem:[#allocation2 + $0x18] sm:$0xff]
        %v619 = vld [vmem:[#allocation2 + $0x20] sm:$0xff]
        %v620 = vld [vmem:[#allocation2 + $0x28] sm:$0xff]
        %v621 = vld [vmem:[#allocation2 + $0x30] sm:$0xff]
        %v622 = vld [vmem:[#allocation2 + $0x38] sm:$0xff]
        %v623 = vld [vmem:[#allocation2 + $0x40] sm:$0xff]
        %v624 = vld [vmem:[#allocation2 + $0x48] sm:$0xff]
        %v625 = vld [vmem:[#allocation2 + $0x50] sm:$0xff]
        %v626 = vld [vmem:[#allocation2 + $0x58] sm:$0xff]
        %v627 = vld [vmem:[#allocation2 + $0x60] sm:$0xff]
        %v628 = vld [vmem:[#allocation2 + $0x68] sm:$0xff]
        %v629 = vld [vmem:[#allocation2 + $0x70] sm:$0xff]
        %v630 = vld [vmem:[#allocation2 + $0x78] sm:$0xff]
        %v631 = vld [vmem:[#allocation2 + $0x80] sm:$0xff]
        %v632 = vld [vmem:[#allocation2 + $0x88] sm:$0xff]
        %v633 = vld [vmem:[#allocation2 + $0x90] sm:$0xff]
        %v634 = vld [vmem:[#allocation2 + $0x98] sm:$0xff]
        %v635 = vld [vmem:[#allocation2 + $0xa0] sm:$0xff]
        %v636 = vld [vmem:[#allocation2 + $0xa8] sm:$0xff]
        %v637 = vld [vmem:[#allocation2 + $0xb0] sm:$0xff]
        %v638 = vld [vmem:[#allocation2 + $0xb8] sm:$0xff]
        %v639 = vld [vmem:[#allocation2 + $0xc0] sm:$0xff]
        %v640 = vld [vmem:[#allocation2 + $0xc8] sm:$0xff]
        %v641 = vmax.f32 %v615, 0.0
        %v642 = vmax.f32 %v616, 0.0
        %v643 = vmax.f32 %v617, 0.0
        %v644 = vmax.f32 %v618, 0.0
        %v645 = vmax.f32 %v619, 0.0
        %v646 = vmax.f32 %v620, 0.0
        %v647 = vmax.f32 %v621, 0.0
        %v648 = vmax.f32 %v622, 0.0
        %v649 = vmax.f32 %v623, 0.0
        %v650 = vmax.f32 %v624, 0.0
        %v651 = vmax.f32 %v625, 0.0
        %v652 = vmax.f32 %v626, 0.0
        %v653 = vmax.f32 %v627, 0.0
        %v654 = vmax.f32 %v628, 0.0
        %v655 = vmax.f32 %v629, 0.0
        %v656 = vmax.f32 %v630, 0.0
        %v657 = vmax.f32 %v631, 0.0
        %v658 = vmax.f32 %v632, 0.0
        %v659 = vmax.f32 %v633, 0.0
        %v660 = vmax.f32 %v634, 0.0
        %v661 = vmax.f32 %v635, 0.0
        %v662 = vmax.f32 %v636, 0.0
        %v663 = vmax.f32 %v637, 0.0
        %v664 = vmax.f32 %v638, 0.0
        %v665 = vmax.f32 %v639, 0.0
        %v666 = vmax.f32 %v640, 0.0
        %v667 = vld [vmem:[%s252] sm:$0x1]
        %v668 = vperm.slane %v667, 0
        %v669 = vmul.f32 %v641, %v668
        %v670 = vmul.f32 %v642, %v668
        %v671 = vmul.f32 %v643, %v668
        %v672 = vmul.f32 %v644, %v668
        %v673 = vmul.f32 %v645, %v668
        %v674 = vmul.f32 %v646, %v668
        %v675 = vmul.f32 %v647, %v668
        %v676 = vmul.f32 %v648, %v668
        %v677 = vmul.f32 %v649, %v668
        %v678 = vmul.f32 %v650, %v668
        %v679 = vmul.f32 %v651, %v668
        %v680 = vmul.f32 %v652, %v668
        %v681 = vmul.f32 %v653, %v668
        %v682 = vmul.f32 %v654, %v668
        %v683 = vmul.f32 %v655, %v668
        %v684 = vmul.f32 %v656, %v668
        %v685 = vmul.f32 %v657, %v668
        %v686 = vmul.f32 %v658, %v668
        %v687 = vmul.f32 %v659, %v668
        %v688 = vmul.f32 %v660, %v668
        %v689 = vmul.f32 %v661, %v668
        %v690 = vmul.f32 %v662, %v668
        %v691 = vmul.f32 %v663, %v668
        %v692 = vmul.f32 %v664, %v668
        %v693 = vmul.f32 %v665, %v668
        %v694 = vmul.f32 %v666, %v668
        %v695 = vld [vmem:[%s252 + $0x1] sm:$0x1]
        %v696 = vperm.slane %v695, 0
        %v697 = vadd.f32 %v669, %v696
        %v698 = vadd.f32 %v670, %v696
        %v699 = vadd.f32 %v671, %v696
        %v700 = vadd.f32 %v672, %v696
        %v701 = vadd.f32 %v673, %v696
        %v702 = vadd.f32 %v674, %v696
        %v703 = vadd.f32 %v675, %v696
        %v704 = vadd.f32 %v676, %v696
        %v705 = vadd.f32 %v677, %v696
        %v706 = vadd.f32 %v678, %v696
        %v707 = vadd.f32 %v679, %v696
        %v708 = vadd.f32 %v680, %v696
        %v709 = vadd.f32 %v681, %v696
        %v710 = vadd.f32 %v682, %v696
        %v711 = vadd.f32 %v683, %v696
        %v712 = vadd.f32 %v684, %v696
        %v713 = vadd.f32 %v685, %v696
        %v714 = vadd.f32 %v686, %v696
        %v715 = vadd.f32 %v687, %v696
        %v716 = vadd.f32 %v688, %v696
        %v717 = vadd.f32 %v689, %v696
        %v718 = vadd.f32 %v690, %v696
        %v719 = vadd.f32 %v691, %v696
        %v720 = vadd.f32 %v692, %v696
        %v721 = vadd.f32 %v693, %v696
        %v722 = vadd.f32 %v694, %v696
        %v723 = vpack.c.bf16 %v697, %v697
        %v724 = vpack.c.bf16 %v698, %v698
        %v725 = vpack.c.bf16 %v699, %v699
        %v726 = vpack.c.bf16 %v700, %v700
        %v727 = vpack.c.bf16 %v701, %v701
        %v728 = vpack.c.bf16 %v702, %v702
        %v729 = vpack.c.bf16 %v703, %v703
        %v730 = vpack.c.bf16 %v704, %v704
        %v731 = vpack.c.bf16 %v705, %v705
        %v732 = vpack.c.bf16 %v706, %v706
        %v733 = vpack.c.bf16 %v707, %v707
        %v734 = vpack.c.bf16 %v708, %v708
        %v735 = vpack.c.bf16 %v709, %v709
        %v736 = vpack.c.bf16 %v710, %v710
        %v737 = vpack.c.bf16 %v711, %v711
        %v738 = vpack.c.bf16 %v712, %v712
        %v739 = vpack.c.bf16 %v713, %v713
        %v740 = vpack.c.bf16 %v714, %v714
        %v741 = vpack.c.bf16 %v715, %v715
        %v742 = vpack.c.bf16 %v716, %v716
        %v743 = vpack.c.bf16 %v717, %v717
        %v744 = vpack.c.bf16 %v718, %v718
        %v745 = vpack.c.bf16 %v719, %v719
        %v746 = vpack.c.bf16 %v720, %v720
        %v747 = vpack.c.bf16 %v721, %v721
        %v748 = vpack.c.bf16 %v722, %v722
        %749 = vst [vmem:[%s260] sm:$0xf] %v723
        %750 = vst [vmem:[%s260 + $0x4] sm:$0xf] %v724
        %751 = vst [vmem:[%s260 + $0x8] sm:$0xf] %v725
        %752 = vst [vmem:[%s260 + $0xc] sm:$0xf] %v726
        %753 = vst [vmem:[%s260 + $0x10] sm:$0xf] %v727
        %754 = vst [vmem:[%s260 + $0x14] sm:$0xf] %v728
        %755 = vst [vmem:[%s260 + $0x18] sm:$0xf] %v729
        %756 = vst [vmem:[%s260 + $0x1c] sm:$0xf] %v730
        %757 = vst [vmem:[%s260 + $0x20] sm:$0xf] %v731
        %758 = vst [vmem:[%s260 + $0x24] sm:$0xf] %v732
        %759 = vst [vmem:[%s260 + $0x28] sm:$0xf] %v733
        %760 = vst [vmem:[%s260 + $0x2c] sm:$0xf] %v734
        %761 = vst [vmem:[%s260 + $0x30] sm:$0xf] %v735
        %762 = vst [vmem:[%s260 + $0x34] sm:$0xf] %v736
        %763 = vst [vmem:[%s260 + $0x38] sm:$0xf] %v737
        %764 = vst [vmem:[%s260 + $0x3c] sm:$0xf] %v738
        %765 = vst [vmem:[%s260 + $0x40] sm:$0xf] %v739
        %766 = vst [vmem:[%s260 + $0x44] sm:$0xf] %v740
        %767 = vst [vmem:[%s260 + $0x48] sm:$0xf] %v741
        %768 = vst [vmem:[%s260 + $0x4c] sm:$0xf] %v742
        %769 = vst [vmem:[%s260 + $0x50] sm:$0xf] %v743
        %770 = vst [vmem:[%s260 + $0x54] sm:$0xf] %v744
        %771 = vst [vmem:[%s260 + $0x58] sm:$0xf] %v745
        %772 = vst [vmem:[%s260 + $0x5c] sm:$0xf] %v746
        %773 = vst [vmem:[%s260 + $0x60] sm:$0xf] %v747
        %774 = vst [vmem:[%s260 + $0x64] sm:$0xf] %v748
      $region40: #{forward.7} parent=31 // pred_fallthru
        _
      %s775 = smul.u32 26, %s19
      %p776 = scmp.lt.s32.totalorder %s775, 51
      %s777 = scalar_select %p776, %s775, 51
      %p778 = scmp.lt.s32.totalorder %s20, 0
      %s779 = scalar_select %p778, %s20, 0
      %s780 = sadd.s32 %s779, %s777
      %s781 = smul.addr %s780, 4
      %s782 = scalar_lea.vmem %s3, %s781
      // Predicated region
      $region41: #{forward.7} parent=31 // pred_check
        %p783 = pneg %p135
      $region42: #{forward.7} parent=31 // pred_check_branch
        %785 = sbr.rel (%p783) target = $region44
      $region43: #{forward.7} parent=31 // pred_region
        %s786 = smul.u32 26, %s19
      $region44: #{forward.7} parent=31 // pred_fallthru
        _
    $region32: #{forward.7} parent=5 // pred_fallthru
      _
    %p787 = scmp.le.s32.totalorder 2, %s9
    // Predicated region
    $region45: #{forward.7} parent=5 // pred_check
      %p788 = pneg %p787
    $region46: #{forward.7} parent=5 // pred_check_branch
      %790 = sbr.rel (%p788) target = $region48
    $region47: #{forward.7} parent=5 // pred_region
      %s791 = ssub.s32 %s9, 2
      // Predicated region
      $region49: #{forward.7} parent=47 // pred_check
        %p792 = pneg %p141
      $region50: #{forward.7} parent=47 // pred_check_branch
        %794 = sbr.rel (%p792) target = $region52
      $region51: #{forward.7} parent=47 // pred_region
        %s795 = smul.u32 26, %s22
        %p796 = scmp.lt.s32.totalorder %s795, 51
        %s797 = scalar_select %p796, %s795, 51
        %p798 = scmp.lt.s32.totalorder %s23, 0
        %s799 = scalar_select %p798, %s23, 0
        %s800 = sadd.s32 %s799, %s797
        %s801 = smul.addr %s800, 4
        %s802 = scalar_lea.vmem %s3, %s801
      $region52: #{forward.7} parent=47 // pred_fallthru
        _
    $region48: #{forward.7} parent=5 // pred_fallthru
      _
  $region6: #{forward.7} parent=0 // loop_footer
    %s13 = sadd.s32 1, %s9
  $region7: #{forward.7} parent=0 // loop_footer_branch
    %8 = sbr.rel target = $region3
  $region8: #{forward.7} parent=0 // loop_exit
    _

// kernel: forward.8
$region0: #{forward.8}
  #allocation0 [shape = 'u32[]', space=smem, size = 0x4, offset = 0x4, fixed_abs, tag = 'smem constant byte address 0x4 - core index']
  #allocation1 [shape = 'u32[72,128]{1,0:T(1,128)}', space=vmem, size = 0x9000, scoped, tag = 'internal scratch']
  #allocation2 [shape = 'f32[208,128]{1,0:T(8,128)}', space=vmem, size = 0x1a000, scoped, tag = 'scratch operand']
  %s0 = inlined_call_operand.vmem [shape: bf16[416,128], index: 0, kind: input, shape index: {}]
  %s1 = inlined_call_operand.vmem [shape: bf16[128,128], index: 1, kind: input, shape index: {}]
  %s2 = inlined_call_operand.vmem [shape: f32[2,128], index: 2, kind: input, shape index: {}]
  %s3 = inlined_call_operand.vmem [shape: bf16[416,128], index: 3, kind: output, shape index: {}]
  %s4 = sld [smem:[#allocation0]]
  $region53: #{forward.8} parent=0
    _
  %s6 = ssub.s32 1, %s4
  %s7 = scalar_select 0, %s6, %s4
  loop: start=0, step=1, limit=4
  $region2: #{forward.8} parent=0 // loop_pre_header
    _
  $region3: #{forward.8} parent=0 // loop_header
    %s9 = sphi 0, %s13
    %p10 = scmp.ge.s32.totalorder %s9, 4
    %s16 = sphi 0, %s35
    %s17 = sphi 0, %s31
    %s18 = sphi 0, %s27
    %s19 = sphi 0, %s16
    %s20 = sphi 0, %s17
    %s21 = sphi 0, %s18
    %s22 = sphi 0, %s19
    %s23 = sphi 0, %s20
    %s24 = sphi 0, %s21
    %s40 = sphi 0, %s42
    %s43 = sphi 0, %s40
    %s44 = sphi 0, %s43
    %s60 = sphi 0, %s44
    %s68 = sphi 0, %s70
    %s71 = sphi 0, %s68
    %s72 = sphi 0, %s71
    %s88 = sphi 0, %s72
    %s94 = sphi 0, %s96
    %s97 = sphi 0, %s94
    %s98 = sphi 0, %s97
    %s114 = sphi 0, %s98
    %s122 = sphi 0, %s124
    %s125 = sphi 0, %s122
    %s126 = sphi 0, %s125
    %s142 = sphi 0, %s126
  $region4: #{forward.8} parent=0 // loop_header_branch
    %12 = sbr.rel (%p10) target = $region8
  $region5: #{forward.8} parent=0 // loop_body
    %s14 = ssub.s32 %s9, 1
    %s15 = ssub.s32 %s9, 2
    %s25 = sadd.s32 1, %s18
    %p26 = scmp.ge.s32.totalorder %s25, 1
    %s27 = scalar_select %p26, 0, %s25
    %s28 = sadd.s32 1, %s17
    %s29 = scalar_select %p26, %s28, %s17
    %p30 = scmp.ge.s32.totalorder %s29, 1
    %s31 = scalar_select %p30, 0, %s29
    %s32 = sadd.s32 1, %s16
    %s33 = scalar_select %p30, %s32, %s16
    %p34 = scmp.ge.s32.totalorder %s33, 2
    %s35 = scalar_select %p34, 0, %s33
    %s36 = ssub.s32 %s16, %s35
    %s37 = ssub.s32 %s18, %s27
    %s38 = sor.u32 %s36, %s37
    %p39 = scmp.eq.s32.totalorder %s38, 0
    %s41 = sadd.s32 %s40, 1
    %s42 = scalar_select %p39, %s40, %s41
    %p45 = pneg %p39
    %p46 = scmp.eq.s32.totalorder %s9, 1
    %p47 = por %p45, %p46
    %p48 = scmp.ne.s32.totalorder %s40, %s43
    %p49 = scmp.eq.s32.totalorder %s9, 0
    %p50 = por %p48, %p49
    %p51 = scmp.ne.s32.totalorder %s40, %s43
    %p52 = scmp.eq.s32.totalorder %s14, 1
    %p53 = por %p51, %p52
    %p54 = scmp.ne.s32.totalorder %s43, %s44
    %p55 = scmp.eq.s32.totalorder %s14, 0
    %p56 = por %p54, %p55
    %p57 = scmp.ne.s32.totalorder %s43, %s44
    %p58 = scmp.eq.s32.totalorder %s15, 1
    %p59 = por %p57, %p58
    %p61 = scmp.ne.s32.totalorder %s44, %s60
    %p62 = scmp.eq.s32.totalorder %s15, 0
    %p63 = por %p61, %p62
    %s64 = ssub.s32 %s18, %s27
    %s65 = ssub.s32 %s17, %s31
    %s66 = sor.u32 %s64, %s65
    %p67 = scmp.eq.s32.totalorder %s66, 0
    %s69 = sadd.s32 %s68, 1
    %s70 = scalar_select %p67, %s68, %s69
    %p73 = pneg %p67
    %p74 = scmp.eq.s32.totalorder %s9, 1
    %p75 = por %p73, %p74
    %p76 = scmp.ne.s32.totalorder %s68, %s71
    %p77 = scmp.eq.s32.totalorder %s9, 0
    %p78 = por %p76, %p77
    %p79 = scmp.ne.s32.totalorder %s68, %s71
    %p80 = scmp.eq.s32.totalorder %s14, 1
    %p81 = por %p79, %p80
    %p82 = scmp.ne.s32.totalorder %s71, %s72
    %p83 = scmp.eq.s32.totalorder %s14, 0
    %p84 = por %p82, %p83
    %p85 = scmp.ne.s32.totalorder %s71, %s72
    %p86 = scmp.eq.s32.totalorder %s15, 1
    %p87 = por %p85, %p86
    %p89 = scmp.ne.s32.totalorder %s72, %s88
    %p90 = scmp.eq.s32.totalorder %s15, 0
    %p91 = por %p89, %p90
    %s92 = ssub.s32 %s17, %s31
    %p93 = scmp.eq.s32.totalorder %s92, 0
    %s95 = sadd.s32 %s94, 1
    %s96 = scalar_select %p93, %s94, %s95
    %p99 = pneg %p93
    %p100 = scmp.eq.s32.totalorder %s9, 1
    %p101 = por %p99, %p100
    %p102 = scmp.ne.s32.totalorder %s94, %s97
    %p103 = scmp.eq.s32.totalorder %s9, 0
    %p104 = por %p102, %p103
    %p105 = scmp.ne.s32.totalorder %s94, %s97
    %p106 = scmp.eq.s32.totalorder %s14, 1
    %p107 = por %p105, %p106
    %p108 = scmp.ne.s32.totalorder %s97, %s98
    %p109 = scmp.eq.s32.totalorder %s14, 0
    %p110 = por %p108, %p109
    %p111 = scmp.ne.s32.totalorder %s97, %s98
    %p112 = scmp.eq.s32.totalorder %s15, 1
    %p113 = por %p111, %p112
    %p115 = scmp.ne.s32.totalorder %s98, %s114
    %p116 = scmp.eq.s32.totalorder %s15, 0
    %p117 = por %p115, %p116
    %s118 = ssub.s32 %s16, %s35
    %s119 = ssub.s32 %s17, %s31
    %s120 = sor.u32 %s118, %s119
    %p121 = scmp.eq.s32.totalorder %s120, 0
    %s123 = sadd.s32 %s122, 1
    %s124 = scalar_select %p121, %s122, %s123
    %p127 = pneg %p121
    %p128 = scmp.eq.s32.totalorder %s9, 1
    %p129 = por %p127, %p128
    %p130 = scmp.ne.s32.totalorder %s122, %s125
    %p131 = scmp.eq.s32.totalorder %s9, 0
    %p132 = por %p130, %p131
    %p133 = scmp.ne.s32.totalorder %s122, %s125
    %p134 = scmp.eq.s32.totalorder %s14, 1
    %p135 = por %p133, %p134
    %p136 = scmp.ne.s32.totalorder %s125, %s126
    %p137 = scmp.eq.s32.totalorder %s14, 0
    %p138 = por %p136, %p137
    %p139 = scmp.ne.s32.totalorder %s125, %s126
    %p140 = scmp.eq.s32.totalorder %s15, 1
    %p141 = por %p139, %p140
    %p143 = scmp.ne.s32.totalorder %s126, %s142
    %p144 = scmp.eq.s32.totalorder %s15, 0
    %p145 = por %p143, %p144
    %p146 = scmp.le.s32.totalorder 1, %s9
    %p147 = scmp.lt.s32.totalorder %s9, 3
    %p148 = pnand %p146, %p147
    %p149 = pneg %p148
    // Predicated region
    $region9: #{forward.8} parent=5 // pred_check
      _
    $region10: #{forward.8} parent=5 // pred_check_branch
      %151 = sbr.rel (%p148) target = $region12
    $region11: #{forward.8} parent=5 // pred_region
      %s152 = ssub.s32 %s9, 1
      // Predicated region
      $region13: #{forward.8} parent=11 // pred_check
        %p153 = pneg %p84
      $region14: #{forward.8} parent=11 // pred_check_branch
        %155 = sbr.rel (%p153) target = $region16
      $region15: #{forward.8} parent=11 // pred_region
        %s156 = smul.u32 16, %s21
        %p157 = scmp.lt.s32.totalorder %s156, 15
        %s158 = scalar_select %p157, %s156, 15
        %p159 = scmp.lt.s32.totalorder %s20, 0
        %s160 = scalar_select %p159, %s20, 0
        %s161 = sadd.s32 %s160, %s158
        %s162 = smul.addr %s161, 4
        %s163 = scalar_lea.vmem %s1, %s162
        %s164 = smul.u32 16, %s21
      $region16: #{forward.8} parent=11 // pred_fallthru
        _
      // Predicated region
      $region17: #{forward.8} parent=11 // pred_check
        %p165 = pneg %p110
      $region18: #{forward.8} parent=11 // pred_check_branch
        %167 = sbr.rel (%p165) target = $region20
      $region19: #{forward.8} parent=11 // pred_region
        %p168 = scmp.lt.s32.totalorder %s20, 0
        %s169 = scalar_select %p168, %s20, 0
        %s170 = smul.addr %s169, 2
        %s171 = scalar_lea.vmem %s2, %s170
      $region20: #{forward.8} parent=11 // pred_fallthru
        _
    $region12: #{forward.8} parent=5 // pred_fallthru
      _
    %p172 = scmp.lt.s32.totalorder %s9, 2
    // Predicated region
    $region21: #{forward.8} parent=5 // pred_check
      %p173 = pneg %p172
    $region22: #{forward.8} parent=5 // pred_check_branch
      %175 = sbr.rel (%p173) target = $region24
    $region23: #{forward.8} parent=5 // pred_region
      // Predicated region
      $region25: #{forward.8} parent=23 // pred_check
        %p176 = pneg %p50
      $region26: #{forward.8} parent=23 // pred_check_branch
        %178 = sbr.rel (%p176) target = $region28
      $region27: #{forward.8} parent=23 // pred_region
        %s179 = smul.u32 26, %s16
        %p180 = scmp.lt.s32.totalorder %s179, 51
        %s181 = scalar_select %p180, %s179, 51
        %p182 = scmp.lt.s32.totalorder %s18, 0
        %s183 = scalar_select %p182, %s18, 0
        %s184 = sadd.s32 %s183, %s181
        %s185 = smul.addr %s184, 4
        %s186 = scalar_lea.vmem %s0, %s185
        %s187 = smul.u32 26, %s16
      $region28: #{forward.8} parent=23 // pred_fallthru
        _
    $region24: #{forward.8} parent=5 // pred_fallthru
      _
    %p188 = scmp.le.s32.totalorder 1, %s9
    %p189 = scmp.lt.s32.totalorder %s9, 3
    %p190 = pnand %p188, %p189
    %p191 = pneg %p190
    // Predicated region
    $region29: #{forward.8} parent=5 // pred_check
      _
    $region30: #{forward.8} parent=5 // pred_check_branch
      %193 = sbr.rel (%p190) target = $region32
    $region31: #{forward.8} parent=5 // pred_region
      %s194 = ssub.s32 %s9, 1
      %s195 = smul.u32 26, %s19
      %p196 = scmp.lt.s32.totalorder %s195, 51
      %s197 = scalar_select %p196, %s195, 51
      %p198 = scmp.lt.s32.totalorder %s21, 0
      %s199 = scalar_select %p198, %s21, 0
      %s200 = sadd.s32 %s199, %s197
      %s201 = smul.addr %s200, 4
      %s202 = scalar_lea.vmem %s0, %s201
      %p203 = pneg %p56
      %p204 = pneg %p53
      %s205 = smul.u32 16, %s21
      %p206 = scmp.lt.s32.totalorder %s205, 15
      %s207 = scalar_select %p206, %s205, 15
      %p208 = scmp.lt.s32.totalorder %s20, 0
      %s209 = scalar_select %p208, %s20, 0
      %s210 = sadd.s32 %s209, %s207
      %s211 = smul.addr %s210, 4
      %s212 = scalar_lea.vmem %s1, %s211
      %p213 = pneg %p84
      %p214 = pneg %p81
      %p215 = scmp.lt.s32.totalorder %s20, 0
      %s216 = scalar_select %p215, %s20, 0
      %s217 = smul.addr %s216, 2
      %s218 = scalar_lea.vmem %s2, %s217
      %p219 = pneg %p110
      %p220 = pneg %p107
      %p221 = pneg %p138
      %p222 = pneg %p135
      %s223 = smul.u32 26, %s19
      %p224 = scmp.lt.s32.totalorder %s223, 51
      %s225 = scalar_select %p224, %s223, 51
      %p226 = scmp.lt.s32.totalorder %s20, 0
      %s227 = scalar_select %p226, %s20, 0
      %s228 = sadd.s32 %s227, %s225
      %s229 = smul.addr %s228, 4
      %s230 = scalar_lea.vmem %s3, %s229
      %s231 = smul.u32 26, %s19
      %p232 = scmp.lt.s32.totalorder %s231, 51
      %s233 = scalar_select %p232, %s231, 51
      %p234 = scmp.lt.s32.totalorder %s21, 0
      %s235 = scalar_select %p234, %s21, 0
      %s236 = sadd.s32 %s235, %s233
      %s237 = smul.addr %s236, 4
      %s238 = scalar_lea.vmem %s0, %s237
      %s239 = smul.u32 26, %s19
      %s240 = smul.u32 16, %s21
      %p241 = scmp.lt.s32.totalorder %s240, 15
      %s242 = scalar_select %p241, %s240, 15
      %p243 = scmp.lt.s32.totalorder %s20, 0
      %s244 = scalar_select %p243, %s20, 0
      %s245 = sadd.s32 %s244, %s242
      %s246 = smul.addr %s245, 4
      %s247 = scalar_lea.vmem %s1, %s246
      %s248 = smul.u32 16, %s21
      %p249 = scmp.lt.s32.totalorder %s20, 0
      %s250 = scalar_select %p249, %s20, 0
      %s251 = smul.addr %s250, 2
      %s252 = scalar_lea.vmem %s2, %s251
      %s253 = smul.u32 26, %s19
      %p254 = scmp.lt.s32.totalorder %s253, 51
      %s255 = scalar_select %p254, %s253, 51
      %p256 = scmp.lt.s32.totalorder %s20, 0
      %s257 = scalar_select %p256, %s20, 0
      %s258 = sadd.s32 %s257, %s255
      %s259 = smul.addr %s258, 4
      %s260 = scalar_lea.vmem %s3, %s259
      %s261 = smul.u32 26, %s19
      %p262 = scmp.eq.s32.totalorder %s21, 0
      // Predicated region
      $region33: #{forward.8} parent=31 // pred_check
        %p263 = pneg %p262
      $region34: #{forward.8} parent=31 // pred_check_branch
        %265 = sbr.rel (%p263) target = $region36
      $region35: #{forward.8} parent=31 // pred_region
        %266 = vst [vmem:[#allocation2] sm:$0xff] 0.0
        %267 = vst [vmem:[#allocation2 + $0x8] sm:$0xff] 0.0
        %268 = vst [vmem:[#allocation2 + $0x10] sm:$0xff] 0.0
        %269 = vst [vmem:[#allocation2 + $0x18] sm:$0xff] 0.0
        %270 = vst [vmem:[#allocation2 + $0x20] sm:$0xff] 0.0
        %271 = vst [vmem:[#allocation2 + $0x28] sm:$0xff] 0.0
        %272 = vst [vmem:[#allocation2 + $0x30] sm:$0xff] 0.0
        %273 = vst [vmem:[#allocation2 + $0x38] sm:$0xff] 0.0
        %274 = vst [vmem:[#allocation2 + $0x40] sm:$0xff] 0.0
        %275 = vst [vmem:[#allocation2 + $0x48] sm:$0xff] 0.0
        %276 = vst [vmem:[#allocation2 + $0x50] sm:$0xff] 0.0
        %277 = vst [vmem:[#allocation2 + $0x58] sm:$0xff] 0.0
        %278 = vst [vmem:[#allocation2 + $0x60] sm:$0xff] 0.0
        %279 = vst [vmem:[#allocation2 + $0x68] sm:$0xff] 0.0
        %280 = vst [vmem:[#allocation2 + $0x70] sm:$0xff] 0.0
        %281 = vst [vmem:[#allocation2 + $0x78] sm:$0xff] 0.0
        %282 = vst [vmem:[#allocation2 + $0x80] sm:$0xff] 0.0
        %283 = vst [vmem:[#allocation2 + $0x88] sm:$0xff] 0.0
        %284 = vst [vmem:[#allocation2 + $0x90] sm:$0xff] 0.0
        %285 = vst [vmem:[#allocation2 + $0x98] sm:$0xff] 0.0
        %286 = vst [vmem:[#allocation2 + $0xa0] sm:$0xff] 0.0
        %287 = vst [vmem:[#allocation2 + $0xa8] sm:$0xff] 0.0
        %288 = vst [vmem:[#allocation2 + $0xb0] sm:$0xff] 0.0
        %289 = vst [vmem:[#allocation2 + $0xb8] sm:$0xff] 0.0
        %290 = vst [vmem:[#allocation2 + $0xc0] sm:$0xff] 0.0
        %291 = vst [vmem:[#allocation2 + $0xc8] sm:$0xff] 0.0
      $region36: #{forward.8} parent=31 // pred_fallthru
        _
      %v292 = vld [vmem:[#allocation2] sm:$0xff]
      %v293 = vld [vmem:[#allocation2 + $0x8] sm:$0xff]
      %v294 = vld [vmem:[#allocation2 + $0x10] sm:$0xff]
      %v295 = vld [vmem:[#allocation2 + $0x18] sm:$0xff]
      %v296 = vld [vmem:[#allocation2 + $0x20] sm:$0xff]
      %v297 = vld [vmem:[#allocation2 + $0x28] sm:$0xff]
      %v298 = vld [vmem:[#allocation2 + $0x30] sm:$0xff]
      %v299 = vld [vmem:[#allocation2 + $0x38] sm:$0xff]
      %v300 = vld [vmem:[#allocation2 + $0x40] sm:$0xff]
      %v301 = vld [vmem:[#allocation2 + $0x48] sm:$0xff]
      %v302 = vld [vmem:[#allocation2 + $0x50] sm:$0xff]
      %v303 = vld [vmem:[#allocation2 + $0x58] sm:$0xff]
      %v304 = vld [vmem:[#allocation2 + $0x60] sm:$0xff]
      %v305 = vld [vmem:[#allocation2 + $0x68] sm:$0xff]
      %v306 = vld [vmem:[#allocation2 + $0x70] sm:$0xff]
      %v307 = vld [vmem:[#allocation2 + $0x78] sm:$0xff]
      %v308 = vld [vmem:[#allocation2 + $0x80] sm:$0xff]
      %v309 = vld [vmem:[#allocation2 + $0x88] sm:$0xff]
      %v310 = vld [vmem:[#allocation2 + $0x90] sm:$0xff]
      %v311 = vld [vmem:[#allocation2 + $0x98] sm:$0xff]
      %v312 = vld [vmem:[#allocation2 + $0xa0] sm:$0xff]
      %v313 = vld [vmem:[#allocation2 + $0xa8] sm:$0xff]
      %v314 = vld [vmem:[#allocation2 + $0xb0] sm:$0xff]
      %v315 = vld [vmem:[#allocation2 + $0xb8] sm:$0xff]
      %v316 = vld [vmem:[#allocation2 + $0xc0] sm:$0xff]
      %v317 = vld [vmem:[#allocation2 + $0xc8] sm:$0xff]
      %v318 = vld [vmem:[%s238] sm:$0xf]
      %v319 = vld [vmem:[%s238 + $0x4] sm:$0xf]
      %v320 = vld [vmem:[%s238 + $0x8] sm:$0xf]
      %v321 = vld [vmem:[%s238 + $0xc] sm:$0xf]
      %v322 = vld [vmem:[%s238 + $0x10] sm:$0xf]
      %v323 = vld [vmem:[%s238 + $0x14] sm:$0xf]
      %v324 = vld [vmem:[%s238 + $0x18] sm:$0xf]
      %v325 = vld [vmem:[%s238 + $0x1c] sm:$0xf]
      %v326 = vld [vmem:[%s238 + $0x20] sm:$0xf]
      %v327 = vld [vmem:[%s238 + $0x24] sm:$0xf]
      %v328 = vld [vmem:[%s238 + $0x28] sm:$0xf]
      %v329 = vld [vmem:[%s238 + $0x2c] sm:$0xf]
      %v330 = vld [vmem:[%s238 + $0x30] sm:$0xf]
      %v331 = vld [vmem:[%s238 + $0x34] sm:$0xf]
      %v332 = vld [vmem:[%s238 + $0x38] sm:$0xf]
      %v333 = vld [vmem:[%s238 + $0x3c] sm:$0xf]
      %v334 = vld [vmem:[%s238 + $0x40] sm:$0xf]
      %v335 = vld [vmem:[%s238 + $0x44] sm:$0xf]
      %v336 = vld [vmem:[%s238 + $0x48] sm:$0xf]
      %v337 = vld [vmem:[%s238 + $0x4c] sm:$0xf]
      %v338 = vld [vmem:[%s238 + $0x50] sm:$0xf]
      %v339 = vld [vmem:[%s238 + $0x54] sm:$0xf]
      %v340 = vld [vmem:[%s238 + $0x58] sm:$0xf]
      %v341 = vld [vmem:[%s238 + $0x5c] sm:$0xf]
      %v342 = vld [vmem:[%s238 + $0x60] sm:$0xf]
      %v343 = vld [vmem:[%s238 + $0x64] sm:$0xf]
      %v344 = vld [vmem:[%s247] sm:$0xf]
      %v345 = vld [vmem:[%s247 + $0x4] sm:$0xf]
      %v346 = vld [vmem:[%s247 + $0x8] sm:$0xf]
      %v347 = vld [vmem:[%s247 + $0xc] sm:$0xf]
      %v348 = vld [vmem:[%s247 + $0x10] sm:$0xf]
      %v349 = vld [vmem:[%s247 + $0x14] sm:$0xf]
      %v350 = vld [vmem:[%s247 + $0x18] sm:$0xf]
      %v351 = vld [vmem:[%s247 + $0x1c] sm:$0xf]
      %v352 = vld [vmem:[%s247 + $0x20] sm:$0xf]
      %v353 = vld [vmem:[%s247 + $0x24] sm:$0xf]
      %v354 = vld [vmem:[%s247 + $0x28] sm:$0xf]
      %v355 = vld [vmem:[%s247 + $0x2c] sm:$0xf]
      %v356 = vld [vmem:[%s247 + $0x30] sm:$0xf]
      %v357 = vld [vmem:[%s247 + $0x34] sm:$0xf]
      %v358 = vld [vmem:[%s247 + $0x38] sm:$0xf]
      %v359 = vld [vmem:[%s247 + $0x3c] sm:$0xf]
      %v386 = vunpack.c.l.b16 %v318
      %v387 = vunpack.c.l.b16 %v319
      %v388 = vunpack.c.l.b16 %v320
      %v389 = vunpack.c.l.b16 %v321
      %v390 = vunpack.c.l.b16 %v322
      %v391 = vunpack.c.l.b16 %v323
      %v392 = vunpack.c.l.b16 %v324
      %v393 = vunpack.c.l.b16 %v325
      %v394 = vunpack.c.l.b16 %v326
      %v395 = vunpack.c.l.b16 %v327
      %v396 = vunpack.c.l.b16 %v328
      %v397 = vunpack.c.l.b16 %v329
      %v398 = vunpack.c.l.b16 %v330
      %v399 = vunpack.c.l.b16 %v331
      %v400 = vunpack.c.l.b16 %v332
      %v401 = vunpack.c.l.b16 %v333
      %v402 = vunpack.c.l.b16 %v334
      %v403 = vunpack.c.l.b16 %v335
      %v404 = vunpack.c.l.b16 %v336
      %v405 = vunpack.c.l.b16 %v337
      %v406 = vunpack.c.l.b16 %v338
      %v407 = vunpack.c.l.b16 %v339
      %v408 = vunpack.c.l.b16 %v340
      %v409 = vunpack.c.l.b16 %v341
      %v410 = vunpack.c.l.b16 %v342
      %v411 = vunpack.c.l.b16 %v343
      %v412 = vpack.c.b16 %v387, %v386
      %v413 = vpack.c.b16 %v389, %v388
      %v414 = vpack.c.b16 %v391, %v390
      %v415 = vpack.c.b16 %v393, %v392
      %v416 = vpack.c.b16 %v395, %v394
      %v417 = vpack.c.b16 %v397, %v396
      %v418 = vpack.c.b16 %v399, %v398
      %v419 = vpack.c.b16 %v401, %v400
      %v420 = vpack.c.b16 %v403, %v402
      %v421 = vpack.c.b16 %v405, %v404
      %v422 = vpack.c.b16 %v407, %v406
      %v423 = vpack.c.b16 %v409, %v408
      %v424 = vpack.c.b16 %v411, %v410
      %v454 = vunpack.c.l.b16 %v344
      %v455 = vunpack.c.l.b16 %v345
      %v456 = vunpack.c.l.b16 %v346
      %v457 = vunpack.c.l.b16 %v347
      %v458 = vunpack.c.l.b16 %v348
      %v459 = vunpack.c.l.b16 %v349
      %v460 = vunpack.c.l.b16 %v350
      %v461 = vunpack.c.l.b16 %v351
      %v462 = vunpack.c.l.b16 %v352
      %v463 = vunpack.c.l.b16 %v353
      %v464 = vunpack.c.l.b16 %v354
      %v465 = vunpack.c.l.b16 %v355
      %v466 = vunpack.c.l.b16 %v356
      %v467 = vunpack.c.l.b16 %v357
      %v468 = vunpack.c.l.b16 %v358
      %v469 = vunpack.c.l.b16 %v359
      %v470 = vpack.c.b16 %v455, %v454
      %v471 = vpack.c.b16 %v457, %v456
      %v472 = vpack.c.b16 %v459, %v458
      %v473 = vpack.c.b16 %v461, %v460
      %v474 = vpack.c.b16 %v463, %v462
      %v475 = vpack.c.b16 %v465, %v464
      %v476 = vpack.c.b16 %v467, %v466
      %v477 = vpack.c.b16 %v469, %v468
      %486 = vmatpush.bf16.msra.mxu0 %v477
      %487 = vmatpush.bf16.msra.mxu0 %v476
      %488 = vmatpush.bf16.msra.mxu0 %v475
      %489 = vmatpush.bf16.msra.mxu0 %v474
      %490 = vmatpush.bf16.msra.mxu0 %v473
      %491 = vmatpush.bf16.msra.mxu0 %v472
      %492 = vmatpush.bf16.msra.mxu0 %v471
      %493 = vmatpush.bf16.msra.mxu0 %v470
      %494 = vmatmul.bf16.gmra.mxu0 %v412
      %v495 = vpop.f32.mrf.mxu0
      %v496 = vadd.f32 0.0, %v495
      %v497 = vpop.f32.mrf.mxu0
      %v498 = vadd.f32 0.0, %v497
      %499 = vmatmul.bf16.gmra.mxu0 %v413
      %v500 = vpop.f32.mrf.mxu0
      %v501 = vadd.f32 0.0, %v500
      %v502 = vpop.f32.mrf.mxu0
      %v503 = vadd.f32 0.0, %v502
      %504 = vmatmul.bf16.gmra.mxu0 %v414
      %v505 = vpop.f32.mrf.mxu0
      %v506 = vadd.f32 0.0, %v505
      %v507 = vpop.f32.mrf.mxu0
      %v508 = vadd.f32 0.0, %v507
      %509 = vmatmul.bf16.gmra.mxu0 %v415
      %v510 = vpop.f32.mrf.mxu0
      %v511 = vadd.f32 0.0, %v510
      %v512 = vpop.f32.mrf.mxu0
      %v513 = vadd.f32 0.0, %v512
      %514 = vmatmul.bf16.gmra.mxu0 %v416
      %v515 = vpop.f32.mrf.mxu0
      %v516 = vadd.f32 0.0, %v515
      %v517 = vpop.f32.mrf.mxu0
      %v518 = vadd.f32 0.0, %v517
      %519 = vmatmul.bf16.gmra.mxu0 %v417
      %v520 = vpop.f32.mrf.mxu0
      %v521 = vadd.f32 0.0, %v520
      %v522 = vpop.f32.mrf.mxu0
      %v523 = vadd.f32 0.0, %v522
      %524 = vmatmul.bf16.gmra.mxu0 %v418
      %v525 = vpop.f32.mrf.mxu0
      %v526 = vadd.f32 0.0, %v525
      %v527 = vpop.f32.mrf.mxu0
      %v528 = vadd.f32 0.0, %v527
      %529 = vmatmul.bf16.gmra.mxu0 %v419
      %v530 = vpop.f32.mrf.mxu0
      %v531 = vadd.f32 0.0, %v530
      %v532 = vpop.f32.mrf.mxu0
      %v533 = vadd.f32 0.0, %v532
      %534 = vmatmul.bf16.gmra.mxu0 %v420
      %v535 = vpop.f32.mrf.mxu0
      %v536 = vadd.f32 0.0, %v535
      %v537 = vpop.f32.mrf.mxu0
      %v538 = vadd.f32 0.0, %v537
      %539 = vmatmul.bf16.gmra.mxu0 %v421
      %v540 = vpop.f32.mrf.mxu0
      %v541 = vadd.f32 0.0, %v540
      %v542 = vpop.f32.mrf.mxu0
      %v543 = vadd.f32 0.0, %v542
      %544 = vmatmul.bf16.gmra.mxu0 %v422
      %v545 = vpop.f32.mrf.mxu0
      %v546 = vadd.f32 0.0, %v545
      %v547 = vpop.f32.mrf.mxu0
      %v548 = vadd.f32 0.0, %v547
      %549 = vmatmul.bf16.gmra.mxu0 %v423
      %v550 = vpop.f32.mrf.mxu0
      %v551 = vadd.f32 0.0, %v550
      %v552 = vpop.f32.mrf.mxu0
      %v553 = vadd.f32 0.0, %v552
      %554 = vmatmul.bf16.gmra.mxu0 %v424
      %v555 = vpop.f32.mrf.mxu0
      %v556 = vadd.f32 0.0, %v555
      %v557 = vpop.f32.mrf.mxu0
      %v558 = vadd.f32 0.0, %v557
      %559 = vdwg.mxu0
      %v560 = vadd.f32 %v292, %v496
      %v561 = vadd.f32 %v293, %v498
      %v562 = vadd.f32 %v294, %v501
      %v563 = vadd.f32 %v295, %v503
      %v564 = vadd.f32 %v296, %v506
      %v565 = vadd.f32 %v297, %v508
      %v566 = vadd.f32 %v298, %v511
      %v567 = vadd.f32 %v299, %v513
      %v568 = vadd.f32 %v300, %v516
      %v569 = vadd.f32 %v301, %v518
      %v570 = vadd.f32 %v302, %v521
      %v571 = vadd.f32 %v303, %v523
      %v572 = vadd.f32 %v304, %v526
      %v573 = vadd.f32 %v305, %v528
      %v574 = vadd.f32 %v306, %v531
      %v575 = vadd.f32 %v307, %v533
      %v576 = vadd.f32 %v308, %v536
      %v577 = vadd.f32 %v309, %v538
      %v578 = vadd.f32 %v310, %v541
      %v579 = vadd.f32 %v311, %v543
      %v580 = vadd.f32 %v312, %v546
      %v581 = vadd.f32 %v313, %v548
      %v582 = vadd.f32 %v314, %v551
      %v583 = vadd.f32 %v315, %v553
      %v584 = vadd.f32 %v316, %v556
      %v585 = vadd.f32 %v317, %v558
      %586 = vst [vmem:[#allocation2] sm:$0xff] %v560
      %587 = vst [vmem:[#allocation2 + $0x8] sm:$0xff] %v561
      %588 = vst [vmem:[#allocation2 + $0x10] sm:$0xff] %v562
      %589 = vst [vmem:[#allocation2 + $0x18] sm:$0xff] %v563
      %590 = vst [vmem:[#allocation2 + $0x20] sm:$0xff] %v564
      %591 = vst [vmem:[#allocation2 + $0x28] sm:$0xff] %v565
      %592 = vst [vmem:[#allocation2 + $0x30] sm:$0xff] %v566
      %593 = vst [vmem:[#allocation2 + $0x38] sm:$0xff] %v567
      %594 = vst [vmem:[#allocation2 + $0x40] sm:$0xff] %v568
      %595 = vst [vmem:[#allocation2 + $0x48] sm:$0xff] %v569
      %596 = vst [vmem:[#allocation2 + $0x50] sm:$0xff] %v570
      %597 = vst [vmem:[#allocation2 + $0x58] sm:$0xff] %v571
      %598 = vst [vmem:[#allocation2 + $0x60] sm:$0xff] %v572
      %599 = vst [vmem:[#allocation2 + $0x68] sm:$0xff] %v573
      %600 = vst [vmem:[#allocation2 + $0x70] sm:$0xff] %v574
      %601 = vst [vmem:[#allocation2 + $0x78] sm:$0xff] %v575
      %602 = vst [vmem:[#allocation2 + $0x80] sm:$0xff] %v576
      %603 = vst [vmem:[#allocation2 + $0x88] sm:$0xff] %v577
      %604 = vst [vmem:[#allocation2 + $0x90] sm:$0xff] %v578
      %605 = vst [vmem:[#allocation2 + $0x98] sm:$0xff] %v579
      %606 = vst [vmem:[#allocation2 + $0xa0] sm:$0xff] %v580
      %607 = vst [vmem:[#allocation2 + $0xa8] sm:$0xff] %v581
      %608 = vst [vmem:[#allocation2 + $0xb0] sm:$0xff] %v582
      %609 = vst [vmem:[#allocation2 + $0xb8] sm:$0xff] %v583
      %610 = vst [vmem:[#allocation2 + $0xc0] sm:$0xff] %v584
      %611 = vst [vmem:[#allocation2 + $0xc8] sm:$0xff] %v585
      // Predicated region
      $region37: #{forward.8} parent=31 // pred_check
        %p612 = pneg %p262
      $region38: #{forward.8} parent=31 // pred_check_branch
        %614 = sbr.rel (%p612) target = $region40
      $region39: #{forward.8} parent=31 // pred_region
        %v615 = vld [vmem:[#allocation2] sm:$0xff]
        %v616 = vld [vmem:[#allocation2 + $0x8] sm:$0xff]
        %v617 = vld [vmem:[#allocation2 + $0x10] sm:$0xff]
        %v618 = vld [vmem:[#allocation2 + $0x18] sm:$0xff]
        %v619 = vld [vmem:[#allocation2 + $0x20] sm:$0xff]
        %v620 = vld [vmem:[#allocation2 + $0x28] sm:$0xff]
        %v621 = vld [vmem:[#allocation2 + $0x30] sm:$0xff]
        %v622 = vld [vmem:[#allocation2 + $0x38] sm:$0xff]
        %v623 = vld [vmem:[#allocation2 + $0x40] sm:$0xff]
        %v624 = vld [vmem:[#allocation2 + $0x48] sm:$0xff]
        %v625 = vld [vmem:[#allocation2 + $0x50] sm:$0xff]
        %v626 = vld [vmem:[#allocation2 + $0x58] sm:$0xff]
        %v627 = vld [vmem:[#allocation2 + $0x60] sm:$0xff]
        %v628 = vld [vmem:[#allocation2 + $0x68] sm:$0xff]
        %v629 = vld [vmem:[#allocation2 + $0x70] sm:$0xff]
        %v630 = vld [vmem:[#allocation2 + $0x78] sm:$0xff]
        %v631 = vld [vmem:[#allocation2 + $0x80] sm:$0xff]
        %v632 = vld [vmem:[#allocation2 + $0x88] sm:$0xff]
        %v633 = vld [vmem:[#allocation2 + $0x90] sm:$0xff]
        %v634 = vld [vmem:[#allocation2 + $0x98] sm:$0xff]
        %v635 = vld [vmem:[#allocation2 + $0xa0] sm:$0xff]
        %v636 = vld [vmem:[#allocation2 + $0xa8] sm:$0xff]
        %v637 = vld [vmem:[#allocation2 + $0xb0] sm:$0xff]
        %v638 = vld [vmem:[#allocation2 + $0xb8] sm:$0xff]
        %v639 = vld [vmem:[#allocation2 + $0xc0] sm:$0xff]
        %v640 = vld [vmem:[#allocation2 + $0xc8] sm:$0xff]
        %v641 = vld [vmem:[%s252] sm:$0x1]
        %v642 = vperm.slane %v641, 0
        %v643 = vmul.f32 %v615, %v642
        %v644 = vmul.f32 %v616, %v642
        %v645 = vmul.f32 %v617, %v642
        %v646 = vmul.f32 %v618, %v642
        %v647 = vmul.f32 %v619, %v642
        %v648 = vmul.f32 %v620, %v642
        %v649 = vmul.f32 %v621, %v642
        %v650 = vmul.f32 %v622, %v642
        %v651 = vmul.f32 %v623, %v642
        %v652 = vmul.f32 %v624, %v642
        %v653 = vmul.f32 %v625, %v642
        %v654 = vmul.f32 %v626, %v642
        %v655 = vmul.f32 %v627, %v642
        %v656 = vmul.f32 %v628, %v642
        %v657 = vmul.f32 %v629, %v642
        %v658 = vmul.f32 %v630, %v642
        %v659 = vmul.f32 %v631, %v642
        %v660 = vmul.f32 %v632, %v642
        %v661 = vmul.f32 %v633, %v642
        %v662 = vmul.f32 %v634, %v642
        %v663 = vmul.f32 %v635, %v642
        %v664 = vmul.f32 %v636, %v642
        %v665 = vmul.f32 %v637, %v642
        %v666 = vmul.f32 %v638, %v642
        %v667 = vmul.f32 %v639, %v642
        %v668 = vmul.f32 %v640, %v642
        %v669 = vld [vmem:[%s252 + $0x1] sm:$0x1]
        %v670 = vperm.slane %v669, 0
        %v671 = vadd.f32 %v643, %v670
        %v672 = vadd.f32 %v644, %v670
        %v673 = vadd.f32 %v645, %v670
        %v674 = vadd.f32 %v646, %v670
        %v675 = vadd.f32 %v647, %v670
        %v676 = vadd.f32 %v648, %v670
        %v677 = vadd.f32 %v649, %v670
        %v678 = vadd.f32 %v650, %v670
        %v679 = vadd.f32 %v651, %v670
        %v680 = vadd.f32 %v652, %v670
        %v681 = vadd.f32 %v653, %v670
        %v682 = vadd.f32 %v654, %v670
        %v683 = vadd.f32 %v655, %v670
        %v684 = vadd.f32 %v656, %v670
        %v685 = vadd.f32 %v657, %v670
        %v686 = vadd.f32 %v658, %v670
        %v687 = vadd.f32 %v659, %v670
        %v688 = vadd.f32 %v660, %v670
        %v689 = vadd.f32 %v661, %v670
        %v690 = vadd.f32 %v662, %v670
        %v691 = vadd.f32 %v663, %v670
        %v692 = vadd.f32 %v664, %v670
        %v693 = vadd.f32 %v665, %v670
        %v694 = vadd.f32 %v666, %v670
        %v695 = vadd.f32 %v667, %v670
        %v696 = vadd.f32 %v668, %v670
        %v697 = vmax.f32 %v671, 0.0
        %v698 = vmax.f32 %v672, 0.0
        %v699 = vmax.f32 %v673, 0.0
        %v700 = vmax.f32 %v674, 0.0
        %v701 = vmax.f32 %v675, 0.0
        %v702 = vmax.f32 %v676, 0.0
        %v703 = vmax.f32 %v677, 0.0
        %v704 = vmax.f32 %v678, 0.0
        %v705 = vmax.f32 %v679, 0.0
        %v706 = vmax.f32 %v680, 0.0
        %v707 = vmax.f32 %v681, 0.0
        %v708 = vmax.f32 %v682, 0.0
        %v709 = vmax.f32 %v683, 0.0
        %v710 = vmax.f32 %v684, 0.0
        %v711 = vmax.f32 %v685, 0.0
        %v712 = vmax.f32 %v686, 0.0
        %v713 = vmax.f32 %v687, 0.0
        %v714 = vmax.f32 %v688, 0.0
        %v715 = vmax.f32 %v689, 0.0
        %v716 = vmax.f32 %v690, 0.0
        %v717 = vmax.f32 %v691, 0.0
        %v718 = vmax.f32 %v692, 0.0
        %v719 = vmax.f32 %v693, 0.0
        %v720 = vmax.f32 %v694, 0.0
        %v721 = vmax.f32 %v695, 0.0
        %v722 = vmax.f32 %v696, 0.0
        %v723 = vpack.c.bf16 %v697, %v697
        %v724 = vpack.c.bf16 %v698, %v698
        %v725 = vpack.c.bf16 %v699, %v699
        %v726 = vpack.c.bf16 %v700, %v700
        %v727 = vpack.c.bf16 %v701, %v701
        %v728 = vpack.c.bf16 %v702, %v702
        %v729 = vpack.c.bf16 %v703, %v703
        %v730 = vpack.c.bf16 %v704, %v704
        %v731 = vpack.c.bf16 %v705, %v705
        %v732 = vpack.c.bf16 %v706, %v706
        %v733 = vpack.c.bf16 %v707, %v707
        %v734 = vpack.c.bf16 %v708, %v708
        %v735 = vpack.c.bf16 %v709, %v709
        %v736 = vpack.c.bf16 %v710, %v710
        %v737 = vpack.c.bf16 %v711, %v711
        %v738 = vpack.c.bf16 %v712, %v712
        %v739 = vpack.c.bf16 %v713, %v713
        %v740 = vpack.c.bf16 %v714, %v714
        %v741 = vpack.c.bf16 %v715, %v715
        %v742 = vpack.c.bf16 %v716, %v716
        %v743 = vpack.c.bf16 %v717, %v717
        %v744 = vpack.c.bf16 %v718, %v718
        %v745 = vpack.c.bf16 %v719, %v719
        %v746 = vpack.c.bf16 %v720, %v720
        %v747 = vpack.c.bf16 %v721, %v721
        %v748 = vpack.c.bf16 %v722, %v722
        %749 = vst [vmem:[%s260] sm:$0xf] %v723
        %750 = vst [vmem:[%s260 + $0x4] sm:$0xf] %v724
        %751 = vst [vmem:[%s260 + $0x8] sm:$0xf] %v725
        %752 = vst [vmem:[%s260 + $0xc] sm:$0xf] %v726
        %753 = vst [vmem:[%s260 + $0x10] sm:$0xf] %v727
        %754 = vst [vmem:[%s260 + $0x14] sm:$0xf] %v728
        %755 = vst [vmem:[%s260 + $0x18] sm:$0xf] %v729
        %756 = vst [vmem:[%s260 + $0x1c] sm:$0xf] %v730
        %757 = vst [vmem:[%s260 + $0x20] sm:$0xf] %v731
        %758 = vst [vmem:[%s260 + $0x24] sm:$0xf] %v732
        %759 = vst [vmem:[%s260 + $0x28] sm:$0xf] %v733
        %760 = vst [vmem:[%s260 + $0x2c] sm:$0xf] %v734
        %761 = vst [vmem:[%s260 + $0x30] sm:$0xf] %v735
        %762 = vst [vmem:[%s260 + $0x34] sm:$0xf] %v736
        %763 = vst [vmem:[%s260 + $0x38] sm:$0xf] %v737
        %764 = vst [vmem:[%s260 + $0x3c] sm:$0xf] %v738
        %765 = vst [vmem:[%s260 + $0x40] sm:$0xf] %v739
        %766 = vst [vmem:[%s260 + $0x44] sm:$0xf] %v740
        %767 = vst [vmem:[%s260 + $0x48] sm:$0xf] %v741
        %768 = vst [vmem:[%s260 + $0x4c] sm:$0xf] %v742
        %769 = vst [vmem:[%s260 + $0x50] sm:$0xf] %v743
        %770 = vst [vmem:[%s260 + $0x54] sm:$0xf] %v744
        %771 = vst [vmem:[%s260 + $0x58] sm:$0xf] %v745
        %772 = vst [vmem:[%s260 + $0x5c] sm:$0xf] %v746
        %773 = vst [vmem:[%s260 + $0x60] sm:$0xf] %v747
        %774 = vst [vmem:[%s260 + $0x64] sm:$0xf] %v748
      $region40: #{forward.8} parent=31 // pred_fallthru
        _
      %s775 = smul.u32 26, %s19
      %p776 = scmp.lt.s32.totalorder %s775, 51
      %s777 = scalar_select %p776, %s775, 51
      %p778 = scmp.lt.s32.totalorder %s20, 0
      %s779 = scalar_select %p778, %s20, 0
      %s780 = sadd.s32 %s779, %s777
      %s781 = smul.addr %s780, 4
      %s782 = scalar_lea.vmem %s3, %s781
      // Predicated region
      $region41: #{forward.8} parent=31 // pred_check
        %p783 = pneg %p135
      $region42: #{forward.8} parent=31 // pred_check_branch
        %785 = sbr.rel (%p783) target = $region44
      $region43: #{forward.8} parent=31 // pred_region
        %s786 = smul.u32 26, %s19
      $region44: #{forward.8} parent=31 // pred_fallthru
        _
    $region32: #{forward.8} parent=5 // pred_fallthru
      _
    %p787 = scmp.le.s32.totalorder 2, %s9
    // Predicated region
    $region45: #{forward.8} parent=5 // pred_check
      %p788 = pneg %p787
    $region46: #{forward.8} parent=5 // pred_check_branch
      %790 = sbr.rel (%p788) target = $region48
    $region47: #{forward.8} parent=5 // pred_region
      %s791 = ssub.s32 %s9, 2
      // Predicated region
      $region49: #{forward.8} parent=47 // pred_check
        %p792 = pneg %p141
      $region50: #{forward.8} parent=47 // pred_check_branch
        %794 = sbr.rel (%p792) target = $region52
      $region51: #{forward.8} parent=47 // pred_region
        %s795 = smul.u32 26, %s22
        %p796 = scmp.lt.s32.totalorder %s795, 51
        %s797 = scalar_select %p796, %s795, 51
        %p798 = scmp.lt.s32.totalorder %s23, 0
        %s799 = scalar_select %p798, %s23, 0
        %s800 = sadd.s32 %s799, %s797
        %s801 = smul.addr %s800, 4
        %s802 = scalar_lea.vmem %s3, %s801
      $region52: #{forward.8} parent=47 // pred_fallthru
        _
    $region48: #{forward.8} parent=5 // pred_fallthru
      _
  $region6: #{forward.8} parent=0 // loop_footer
    %s13 = sadd.s32 1, %s9
  $region7: #{forward.8} parent=0 // loop_footer_branch
    %8 = sbr.rel target = $region3
  $region8: #{forward.8} parent=0 // loop_exit
    _

// kernel: forward.9
$region0: #{forward.9}
  #allocation0 [shape = 'u32[]', space=smem, size = 0x4, offset = 0x4, fixed_abs, tag = 'smem constant byte address 0x4 - core index']
  #allocation1 [shape = 'u32[72,128]{1,0:T(1,128)}', space=vmem, size = 0x9000, scoped, tag = 'internal scratch']
  #allocation2 [shape = 'f32[208,128]{1,0:T(8,128)}', space=vmem, size = 0x1a000, scoped, tag = 'scratch operand']
  %s0 = inlined_call_operand.vmem [shape: bf16[416,128], index: 0, kind: input, shape index: {}]
  %s1 = inlined_call_operand.vmem [shape: bf16[128,128], index: 1, kind: input, shape index: {}]
  %s2 = inlined_call_operand.vmem [shape: f32[2,128], index: 2, kind: input, shape index: {}]
  %s3 = inlined_call_operand.vmem [shape: bf16[416,128], index: 3, kind: input, shape index: {}]
  %s4 = inlined_call_operand.vmem [shape: bf16[416,128], index: 4, kind: output, shape index: {}]
  %s5 = sld [smem:[#allocation0]]
  $region57: #{forward.9} parent=0
    _
  %s7 = ssub.s32 1, %s5
  %s8 = scalar_select 0, %s7, %s5
  loop: start=0, step=1, limit=4
  $region2: #{forward.9} parent=0 // loop_pre_header
    _
  $region3: #{forward.9} parent=0 // loop_header
    %s10 = sphi 0, %s14
    %p11 = scmp.ge.s32.totalorder %s10, 4
    %s17 = sphi 0, %s36
    %s18 = sphi 0, %s32
    %s19 = sphi 0, %s28
    %s20 = sphi 0, %s17
    %s21 = sphi 0, %s18
    %s22 = sphi 0, %s19
    %s23 = sphi 0, %s20
    %s24 = sphi 0, %s21
    %s25 = sphi 0, %s22
    %s41 = sphi 0, %s43
    %s44 = sphi 0, %s41
    %s45 = sphi 0, %s44
    %s61 = sphi 0, %s45
    %s69 = sphi 0, %s71
    %s72 = sphi 0, %s69
    %s73 = sphi 0, %s72
    %s89 = sphi 0, %s73
    %s95 = sphi 0, %s97
    %s98 = sphi 0, %s95
    %s99 = sphi 0, %s98
    %s115 = sphi 0, %s99
    %s123 = sphi 0, %s125
    %s126 = sphi 0, %s123
    %s127 = sphi 0, %s126
    %s143 = sphi 0, %s127
    %s151 = sphi 0, %s153
    %s154 = sphi 0, %s151
    %s155 = sphi 0, %s154
    %s171 = sphi 0, %s155
  $region4: #{forward.9} parent=0 // loop_header_branch
    %13 = sbr.rel (%p11) target = $region8
  $region5: #{forward.9} parent=0 // loop_body
    %s15 = ssub.s32 %s10, 1
    %s16 = ssub.s32 %s10, 2
    %s26 = sadd.s32 1, %s19
    %p27 = scmp.ge.s32.totalorder %s26, 1
    %s28 = scalar_select %p27, 0, %s26
    %s29 = sadd.s32 1, %s18
    %s30 = scalar_select %p27, %s29, %s18
    %p31 = scmp.ge.s32.totalorder %s30, 1
    %s32 = scalar_select %p31, 0, %s30
    %s33 = sadd.s32 1, %s17
    %s34 = scalar_select %p31, %s33, %s17
    %p35 = scmp.ge.s32.totalorder %s34, 2
    %s36 = scalar_select %p35, 0, %s34
    %s37 = ssub.s32 %s17, %s36
    %s38 = ssub.s32 %s19, %s28
    %s39 = sor.u32 %s37, %s38
    %p40 = scmp.eq.s32.totalorder %s39, 0
    %s42 = sadd.s32 %s41, 1
    %s43 = scalar_select %p40, %s41, %s42
    %p46 = pneg %p40
    %p47 = scmp.eq.s32.totalorder %s10, 1
    %p48 = por %p46, %p47
    %p49 = scmp.ne.s32.totalorder %s41, %s44
    %p50 = scmp.eq.s32.totalorder %s10, 0
    %p51 = por %p49, %p50
    %p52 = scmp.ne.s32.totalorder %s41, %s44
    %p53 = scmp.eq.s32.totalorder %s15, 1
    %p54 = por %p52, %p53
    %p55 = scmp.ne.s32.totalorder %s44, %s45
    %p56 = scmp.eq.s32.totalorder %s15, 0
    %p57 = por %p55, %p56
    %p58 = scmp.ne.s32.totalorder %s44, %s45
    %p59 = scmp.eq.s32.totalorder %s16, 1
    %p60 = por %p58, %p59
    %p62 = scmp.ne.s32.totalorder %s45, %s61
    %p63 = scmp.eq.s32.totalorder %s16, 0
    %p64 = por %p62, %p63
    %s65 = ssub.s32 %s19, %s28
    %s66 = ssub.s32 %s18, %s32
    %s67 = sor.u32 %s65, %s66
    %p68 = scmp.eq.s32.totalorder %s67, 0
    %s70 = sadd.s32 %s69, 1
    %s71 = scalar_select %p68, %s69, %s70
    %p74 = pneg %p68
    %p75 = scmp.eq.s32.totalorder %s10, 1
    %p76 = por %p74, %p75
    %p77 = scmp.ne.s32.totalorder %s69, %s72
    %p78 = scmp.eq.s32.totalorder %s10, 0
    %p79 = por %p77, %p78
    %p80 = scmp.ne.s32.totalorder %s69, %s72
    %p81 = scmp.eq.s32.totalorder %s15, 1
    %p82 = por %p80, %p81
    %p83 = scmp.ne.s32.totalorder %s72, %s73
    %p84 = scmp.eq.s32.totalorder %s15, 0
    %p85 = por %p83, %p84
    %p86 = scmp.ne.s32.totalorder %s72, %s73
    %p87 = scmp.eq.s32.totalorder %s16, 1
    %p88 = por %p86, %p87
    %p90 = scmp.ne.s32.totalorder %s73, %s89
    %p91 = scmp.eq.s32.totalorder %s16, 0
    %p92 = por %p90, %p91
    %s93 = ssub.s32 %s18, %s32
    %p94 = scmp.eq.s32.totalorder %s93, 0
    %s96 = sadd.s32 %s95, 1
    %s97 = scalar_select %p94, %s95, %s96
    %p100 = pneg %p94
    %p101 = scmp.eq.s32.totalorder %s10, 1
    %p102 = por %p100, %p101
    %p103 = scmp.ne.s32.totalorder %s95, %s98
    %p104 = scmp.eq.s32.totalorder %s10, 0
    %p105 = por %p103, %p104
    %p106 = scmp.ne.s32.totalorder %s95, %s98
    %p107 = scmp.eq.s32.totalorder %s15, 1
    %p108 = por %p106, %p107
    %p109 = scmp.ne.s32.totalorder %s98, %s99
    %p110 = scmp.eq.s32.totalorder %s15, 0
    %p111 = por %p109, %p110
    %p112 = scmp.ne.s32.totalorder %s98, %s99
    %p113 = scmp.eq.s32.totalorder %s16, 1
    %p114 = por %p112, %p113
    %p116 = scmp.ne.s32.totalorder %s99, %s115
    %p117 = scmp.eq.s32.totalorder %s16, 0
    %p118 = por %p116, %p117
    %s119 = ssub.s32 %s17, %s36
    %s120 = ssub.s32 %s18, %s32
    %s121 = sor.u32 %s119, %s120
    %p122 = scmp.eq.s32.totalorder %s121, 0
    %s124 = sadd.s32 %s123, 1
    %s125 = scalar_select %p122, %s123, %s124
    %p128 = pneg %p122
    %p129 = scmp.eq.s32.totalorder %s10, 1
    %p130 = por %p128, %p129
    %p131 = scmp.ne.s32.totalorder %s123, %s126
    %p132 = scmp.eq.s32.totalorder %s10, 0
    %p133 = por %p131, %p132
    %p134 = scmp.ne.s32.totalorder %s123, %s126
    %p135 = scmp.eq.s32.totalorder %s15, 1
    %p136 = por %p134, %p135
    %p137 = scmp.ne.s32.totalorder %s126, %s127
    %p138 = scmp.eq.s32.totalorder %s15, 0
    %p139 = por %p137, %p138
    %p140 = scmp.ne.s32.totalorder %s126, %s127
    %p141 = scmp.eq.s32.totalorder %s16, 1
    %p142 = por %p140, %p141
    %p144 = scmp.ne.s32.totalorder %s127, %s143
    %p145 = scmp.eq.s32.totalorder %s16, 0
    %p146 = por %p144, %p145
    %s147 = ssub.s32 %s17, %s36
    %s148 = ssub.s32 %s18, %s32
    %s149 = sor.u32 %s147, %s148
    %p150 = scmp.eq.s32.totalorder %s149, 0
    %s152 = sadd.s32 %s151, 1
    %s153 = scalar_select %p150, %s151, %s152
    %p156 = pneg %p150
    %p157 = scmp.eq.s32.totalorder %s10, 1
    %p158 = por %p156, %p157
    %p159 = scmp.ne.s32.totalorder %s151, %s154
    %p160 = scmp.eq.s32.totalorder %s10, 0
    %p161 = por %p159, %p160
    %p162 = scmp.ne.s32.totalorder %s151, %s154
    %p163 = scmp.eq.s32.totalorder %s15, 1
    %p164 = por %p162, %p163
    %p165 = scmp.ne.s32.totalorder %s154, %s155
    %p166 = scmp.eq.s32.totalorder %s15, 0
    %p167 = por %p165, %p166
    %p168 = scmp.ne.s32.totalorder %s154, %s155
    %p169 = scmp.eq.s32.totalorder %s16, 1
    %p170 = por %p168, %p169
    %p172 = scmp.ne.s32.totalorder %s155, %s171
    %p173 = scmp.eq.s32.totalorder %s16, 0
    %p174 = por %p172, %p173
    %p175 = scmp.le.s32.totalorder 1, %s10
    %p176 = scmp.lt.s32.totalorder %s10, 3
    %p177 = pnand %p175, %p176
    %p178 = pneg %p177
    // Predicated region
    $region9: #{forward.9} parent=5 // pred_check
      _
    $region10: #{forward.9} parent=5 // pred_check_branch
      %180 = sbr.rel (%p177) target = $region12
    $region11: #{forward.9} parent=5 // pred_region
      %s181 = ssub.s32 %s10, 1
      // Predicated region
      $region13: #{forward.9} parent=11 // pred_check
        %p182 = pneg %p85
      $region14: #{forward.9} parent=11 // pred_check_branch
        %184 = sbr.rel (%p182) target = $region16
      $region15: #{forward.9} parent=11 // pred_region
        %s185 = smul.u32 16, %s22
        %p186 = scmp.lt.s32.totalorder %s185, 15
        %s187 = scalar_select %p186, %s185, 15
        %p188 = scmp.lt.s32.totalorder %s21, 0
        %s189 = scalar_select %p188, %s21, 0
        %s190 = sadd.s32 %s189, %s187
        %s191 = smul.addr %s190, 4
        %s192 = scalar_lea.vmem %s1, %s191
        %s193 = smul.u32 16, %s22
      $region16: #{forward.9} parent=11 // pred_fallthru
        _
      // Predicated region
      $region17: #{forward.9} parent=11 // pred_check
        %p194 = pneg %p111
      $region18: #{forward.9} parent=11 // pred_check_branch
        %196 = sbr.rel (%p194) target = $region20
      $region19: #{forward.9} parent=11 // pred_region
        %p197 = scmp.lt.s32.totalorder %s21, 0
        %s198 = scalar_select %p197, %s21, 0
        %s199 = smul.addr %s198, 2
        %s200 = scalar_lea.vmem %s2, %s199
      $region20: #{forward.9} parent=11 // pred_fallthru
        _
    $region12: #{forward.9} parent=5 // pred_fallthru
      _
    %p201 = scmp.lt.s32.totalorder %s10, 2
    // Predicated region
    $region21: #{forward.9} parent=5 // pred_check
      %p202 = pneg %p201
    $region22: #{forward.9} parent=5 // pred_check_branch
      %204 = sbr.rel (%p202) target = $region24
    $region23: #{forward.9} parent=5 // pred_region
      // Predicated region
      $region25: #{forward.9} parent=23 // pred_check
        %p205 = pneg %p51
      $region26: #{forward.9} parent=23 // pred_check_branch
        %207 = sbr.rel (%p205) target = $region28
      $region27: #{forward.9} parent=23 // pred_region
        %s208 = smul.u32 26, %s17
        %p209 = scmp.lt.s32.totalorder %s208, 51
        %s210 = scalar_select %p209, %s208, 51
        %p211 = scmp.lt.s32.totalorder %s19, 0
        %s212 = scalar_select %p211, %s19, 0
        %s213 = sadd.s32 %s212, %s210
        %s214 = smul.addr %s213, 4
        %s215 = scalar_lea.vmem %s0, %s214
        %s216 = smul.u32 26, %s17
      $region28: #{forward.9} parent=23 // pred_fallthru
        _
      // Predicated region
      $region29: #{forward.9} parent=23 // pred_check
        %p217 = pneg %p133
      $region30: #{forward.9} parent=23 // pred_check_branch
        %219 = sbr.rel (%p217) target = $region32
      $region31: #{forward.9} parent=23 // pred_region
        %s220 = smul.u32 26, %s17
        %p221 = scmp.lt.s32.totalorder %s220, 51
        %s222 = scalar_select %p221, %s220, 51
        %p223 = scmp.lt.s32.totalorder %s18, 0
        %s224 = scalar_select %p223, %s18, 0
        %s225 = sadd.s32 %s224, %s222
        %s226 = smul.addr %s225, 4
        %s227 = scalar_lea.vmem %s3, %s226
        %s228 = smul.u32 26, %s17
      $region32: #{forward.9} parent=23 // pred_fallthru
        _
    $region24: #{forward.9} parent=5 // pred_fallthru
      _
    %p229 = scmp.le.s32.totalorder 1, %s10
    %p230 = scmp.lt.s32.totalorder %s10, 3
    %p231 = pnand %p229, %p230
    %p232 = pneg %p231
    // Predicated region
    $region33: #{forward.9} parent=5 // pred_check
      _
    $region34: #{forward.9} parent=5 // pred_check_branch
      %234 = sbr.rel (%p231) target = $region36
    $region35: #{forward.9} parent=5 // pred_region
      %s235 = ssub.s32 %s10, 1
      %s236 = smul.u32 26, %s20
      %p237 = scmp.lt.s32.totalorder %s236, 51
      %s238 = scalar_select %p237, %s236, 51
      %p239 = scmp.lt.s32.totalorder %s22, 0
      %s240 = scalar_select %p239, %s22, 0
      %s241 = sadd.s32 %s240, %s238
      %s242 = smul.addr %s241, 4
      %s243 = scalar_lea.vmem %s0, %s242
      %p244 = pneg %p57
      %p245 = pneg %p54
      %s246 = smul.u32 16, %s22
      %p247 = scmp.lt.s32.totalorder %s246, 15
      %s248 = scalar_select %p247, %s246, 15
      %p249 = scmp.lt.s32.totalorder %s21, 0
      %s250 = scalar_select %p249, %s21, 0
      %s251 = sadd.s32 %s250, %s248
      %s252 = smul.addr %s251, 4
      %s253 = scalar_lea.vmem %s1, %s252
      %p254 = pneg %p85
      %p255 = pneg %p82
      %p256 = scmp.lt.s32.totalorder %s21, 0
      %s257 = scalar_select %p256, %s21, 0
      %s258 = smul.addr %s257, 2
      %s259 = scalar_lea.vmem %s2, %s258
      %p260 = pneg %p111
      %p261 = pneg %p108
      %s262 = smul.u32 26, %s20
      %p263 = scmp.lt.s32.totalorder %s262, 51
      %s264 = scalar_select %p263, %s262, 51
      %p265 = scmp.lt.s32.totalorder %s21, 0
      %s266 = scalar_select %p265, %s21, 0
      %s267 = sadd.s32 %s266, %s264
      %s268 = smul.addr %s267, 4
      %s269 = scalar_lea.vmem %s3, %s268
      %p270 = pneg %p139
      %p271 = pneg %p136
      %p272 = pneg %p167
      %p273 = pneg %p164
      %s274 = smul.u32 26, %s20
      %p275 = scmp.lt.s32.totalorder %s274, 51
      %s276 = scalar_select %p275, %s274, 51
      %p277 = scmp.lt.s32.totalorder %s21, 0
      %s278 = scalar_select %p277, %s21, 0
      %s279 = sadd.s32 %s278, %s276
      %s280 = smul.addr %s279, 4
      %s281 = scalar_lea.vmem %s4, %s280
      %s282 = smul.u32 26, %s20
      %p283 = scmp.lt.s32.totalorder %s282, 51
      %s284 = scalar_select %p283, %s282, 51
      %p285 = scmp.lt.s32.totalorder %s22, 0
      %s286 = scalar_select %p285, %s22, 0
      %s287 = sadd.s32 %s286, %s284
      %s288 = smul.addr %s287, 4
      %s289 = scalar_lea.vmem %s0, %s288
      %s290 = smul.u32 26, %s20
      %s291 = smul.u32 16, %s22
      %p292 = scmp.lt.s32.totalorder %s291, 15
      %s293 = scalar_select %p292, %s291, 15
      %p294 = scmp.lt.s32.totalorder %s21, 0
      %s295 = scalar_select %p294, %s21, 0
      %s296 = sadd.s32 %s295, %s293
      %s297 = smul.addr %s296, 4
      %s298 = scalar_lea.vmem %s1, %s297
      %s299 = smul.u32 16, %s22
      %p300 = scmp.lt.s32.totalorder %s21, 0
      %s301 = scalar_select %p300, %s21, 0
      %s302 = smul.addr %s301, 2
      %s303 = scalar_lea.vmem %s2, %s302
      %s304 = smul.u32 26, %s20
      %p305 = scmp.lt.s32.totalorder %s304, 51
      %s306 = scalar_select %p305, %s304, 51
      %p307 = scmp.lt.s32.totalorder %s21, 0
      %s308 = scalar_select %p307, %s21, 0
      %s309 = sadd.s32 %s308, %s306
      %s310 = smul.addr %s309, 4
      %s311 = scalar_lea.vmem %s3, %s310
      %s312 = smul.u32 26, %s20
      %s313 = smul.u32 26, %s20
      %p314 = scmp.lt.s32.totalorder %s313, 51
      %s315 = scalar_select %p314, %s313, 51
      %p316 = scmp.lt.s32.totalorder %s21, 0
      %s317 = scalar_select %p316, %s21, 0
      %s318 = sadd.s32 %s317, %s315
      %s319 = smul.addr %s318, 4
      %s320 = scalar_lea.vmem %s4, %s319
      %s321 = smul.u32 26, %s20
      %p322 = scmp.eq.s32.totalorder %s22, 0
      // Predicated region
      $region37: #{forward.9} parent=35 // pred_check
        %p323 = pneg %p322
      $region38: #{forward.9} parent=35 // pred_check_branch
        %325 = sbr.rel (%p323) target = $region40
      $region39: #{forward.9} parent=35 // pred_region
        %326 = vst [vmem:[#allocation2] sm:$0xff] 0.0
        %327 = vst [vmem:[#allocation2 + $0x8] sm:$0xff] 0.0
        %328 = vst [vmem:[#allocation2 + $0x10] sm:$0xff] 0.0
        %329 = vst [vmem:[#allocation2 + $0x18] sm:$0xff] 0.0
        %330 = vst [vmem:[#allocation2 + $0x20] sm:$0xff] 0.0
        %331 = vst [vmem:[#allocation2 + $0x28] sm:$0xff] 0.0
        %332 = vst [vmem:[#allocation2 + $0x30] sm:$0xff] 0.0
        %333 = vst [vmem:[#allocation2 + $0x38] sm:$0xff] 0.0
        %334 = vst [vmem:[#allocation2 + $0x40] sm:$0xff] 0.0
        %335 = vst [vmem:[#allocation2 + $0x48] sm:$0xff] 0.0
        %336 = vst [vmem:[#allocation2 + $0x50] sm:$0xff] 0.0
        %337 = vst [vmem:[#allocation2 + $0x58] sm:$0xff] 0.0
        %338 = vst [vmem:[#allocation2 + $0x60] sm:$0xff] 0.0
        %339 = vst [vmem:[#allocation2 + $0x68] sm:$0xff] 0.0
        %340 = vst [vmem:[#allocation2 + $0x70] sm:$0xff] 0.0
        %341 = vst [vmem:[#allocation2 + $0x78] sm:$0xff] 0.0
        %342 = vst [vmem:[#allocation2 + $0x80] sm:$0xff] 0.0
        %343 = vst [vmem:[#allocation2 + $0x88] sm:$0xff] 0.0
        %344 = vst [vmem:[#allocation2 + $0x90] sm:$0xff] 0.0
        %345 = vst [vmem:[#allocation2 + $0x98] sm:$0xff] 0.0
        %346 = vst [vmem:[#allocation2 + $0xa0] sm:$0xff] 0.0
        %347 = vst [vmem:[#allocation2 + $0xa8] sm:$0xff] 0.0
        %348 = vst [vmem:[#allocation2 + $0xb0] sm:$0xff] 0.0
        %349 = vst [vmem:[#allocation2 + $0xb8] sm:$0xff] 0.0
        %350 = vst [vmem:[#allocation2 + $0xc0] sm:$0xff] 0.0
        %351 = vst [vmem:[#allocation2 + $0xc8] sm:$0xff] 0.0
      $region40: #{forward.9} parent=35 // pred_fallthru
        _
      %v352 = vld [vmem:[#allocation2] sm:$0xff]
      %v353 = vld [vmem:[#allocation2 + $0x8] sm:$0xff]
      %v354 = vld [vmem:[#allocation2 + $0x10] sm:$0xff]
      %v355 = vld [vmem:[#allocation2 + $0x18] sm:$0xff]
      %v356 = vld [vmem:[#allocation2 + $0x20] sm:$0xff]
      %v357 = vld [vmem:[#allocation2 + $0x28] sm:$0xff]
      %v358 = vld [vmem:[#allocation2 + $0x30] sm:$0xff]
      %v359 = vld [vmem:[#allocation2 + $0x38] sm:$0xff]
      %v360 = vld [vmem:[#allocation2 + $0x40] sm:$0xff]
      %v361 = vld [vmem:[#allocation2 + $0x48] sm:$0xff]
      %v362 = vld [vmem:[#allocation2 + $0x50] sm:$0xff]
      %v363 = vld [vmem:[#allocation2 + $0x58] sm:$0xff]
      %v364 = vld [vmem:[#allocation2 + $0x60] sm:$0xff]
      %v365 = vld [vmem:[#allocation2 + $0x68] sm:$0xff]
      %v366 = vld [vmem:[#allocation2 + $0x70] sm:$0xff]
      %v367 = vld [vmem:[#allocation2 + $0x78] sm:$0xff]
      %v368 = vld [vmem:[#allocation2 + $0x80] sm:$0xff]
      %v369 = vld [vmem:[#allocation2 + $0x88] sm:$0xff]
      %v370 = vld [vmem:[#allocation2 + $0x90] sm:$0xff]
      %v371 = vld [vmem:[#allocation2 + $0x98] sm:$0xff]
      %v372 = vld [vmem:[#allocation2 + $0xa0] sm:$0xff]
      %v373 = vld [vmem:[#allocation2 + $0xa8] sm:$0xff]
      %v374 = vld [vmem:[#allocation2 + $0xb0] sm:$0xff]
      %v375 = vld [vmem:[#allocation2 + $0xb8] sm:$0xff]
      %v376 = vld [vmem:[#allocation2 + $0xc0] sm:$0xff]
      %v377 = vld [vmem:[#allocation2 + $0xc8] sm:$0xff]
      %v378 = vld [vmem:[%s289] sm:$0xf]
      %v379 = vld [vmem:[%s289 + $0x4] sm:$0xf]
      %v380 = vld [vmem:[%s289 + $0x8] sm:$0xf]
      %v381 = vld [vmem:[%s289 + $0xc] sm:$0xf]
      %v382 = vld [vmem:[%s289 + $0x10] sm:$0xf]
      %v383 = vld [vmem:[%s289 + $0x14] sm:$0xf]
      %v384 = vld [vmem:[%s289 + $0x18] sm:$0xf]
      %v385 = vld [vmem:[%s289 + $0x1c] sm:$0xf]
      %v386 = vld [vmem:[%s289 + $0x20] sm:$0xf]
      %v387 = vld [vmem:[%s289 + $0x24] sm:$0xf]
      %v388 = vld [vmem:[%s289 + $0x28] sm:$0xf]
      %v389 = vld [vmem:[%s289 + $0x2c] sm:$0xf]
      %v390 = vld [vmem:[%s289 + $0x30] sm:$0xf]
      %v391 = vld [vmem:[%s289 + $0x34] sm:$0xf]
      %v392 = vld [vmem:[%s289 + $0x38] sm:$0xf]
      %v393 = vld [vmem:[%s289 + $0x3c] sm:$0xf]
      %v394 = vld [vmem:[%s289 + $0x40] sm:$0xf]
      %v395 = vld [vmem:[%s289 + $0x44] sm:$0xf]
      %v396 = vld [vmem:[%s289 + $0x48] sm:$0xf]
      %v397 = vld [vmem:[%s289 + $0x4c] sm:$0xf]
      %v398 = vld [vmem:[%s289 + $0x50] sm:$0xf]
      %v399 = vld [vmem:[%s289 + $0x54] sm:$0xf]
      %v400 = vld [vmem:[%s289 + $0x58] sm:$0xf]
      %v401 = vld [vmem:[%s289 + $0x5c] sm:$0xf]
      %v402 = vld [vmem:[%s289 + $0x60] sm:$0xf]
      %v403 = vld [vmem:[%s289 + $0x64] sm:$0xf]
      %v404 = vld [vmem:[%s298] sm:$0xf]
      %v405 = vld [vmem:[%s298 + $0x4] sm:$0xf]
      %v406 = vld [vmem:[%s298 + $0x8] sm:$0xf]
      %v407 = vld [vmem:[%s298 + $0xc] sm:$0xf]
      %v408 = vld [vmem:[%s298 + $0x10] sm:$0xf]
      %v409 = vld [vmem:[%s298 + $0x14] sm:$0xf]
      %v410 = vld [vmem:[%s298 + $0x18] sm:$0xf]
      %v411 = vld [vmem:[%s298 + $0x1c] sm:$0xf]
      %v412 = vld [vmem:[%s298 + $0x20] sm:$0xf]
      %v413 = vld [vmem:[%s298 + $0x24] sm:$0xf]
      %v414 = vld [vmem:[%s298 + $0x28] sm:$0xf]
      %v415 = vld [vmem:[%s298 + $0x2c] sm:$0xf]
      %v416 = vld [vmem:[%s298 + $0x30] sm:$0xf]
      %v417 = vld [vmem:[%s298 + $0x34] sm:$0xf]
      %v418 = vld [vmem:[%s298 + $0x38] sm:$0xf]
      %v419 = vld [vmem:[%s298 + $0x3c] sm:$0xf]
      %v446 = vunpack.c.l.b16 %v378
      %v447 = vunpack.c.l.b16 %v379
      %v448 = vunpack.c.l.b16 %v380
      %v449 = vunpack.c.l.b16 %v381
      %v450 = vunpack.c.l.b16 %v382
      %v451 = vunpack.c.l.b16 %v383
      %v452 = vunpack.c.l.b16 %v384
      %v453 = vunpack.c.l.b16 %v385
      %v454 = vunpack.c.l.b16 %v386
      %v455 = vunpack.c.l.b16 %v387
      %v456 = vunpack.c.l.b16 %v388
      %v457 = vunpack.c.l.b16 %v389
      %v458 = vunpack.c.l.b16 %v390
      %v459 = vunpack.c.l.b16 %v391
      %v460 = vunpack.c.l.b16 %v392
      %v461 = vunpack.c.l.b16 %v393
      %v462 = vunpack.c.l.b16 %v394
      %v463 = vunpack.c.l.b16 %v395
      %v464 = vunpack.c.l.b16 %v396
      %v465 = vunpack.c.l.b16 %v397
      %v466 = vunpack.c.l.b16 %v398
      %v467 = vunpack.c.l.b16 %v399
      %v468 = vunpack.c.l.b16 %v400
      %v469 = vunpack.c.l.b16 %v401
      %v470 = vunpack.c.l.b16 %v402
      %v471 = vunpack.c.l.b16 %v403
      %v472 = vpack.c.b16 %v447, %v446
      %v473 = vpack.c.b16 %v449, %v448
      %v474 = vpack.c.b16 %v451, %v450
      %v475 = vpack.c.b16 %v453, %v452
      %v476 = vpack.c.b16 %v455, %v454
      %v477 = vpack.c.b16 %v457, %v456
      %v478 = vpack.c.b16 %v459, %v458
      %v479 = vpack.c.b16 %v461, %v460
      %v480 = vpack.c.b16 %v463, %v462
      %v481 = vpack.c.b16 %v465, %v464
      %v482 = vpack.c.b16 %v467, %v466
      %v483 = vpack.c.b16 %v469, %v468
      %v484 = vpack.c.b16 %v471, %v470
      %v514 = vunpack.c.l.b16 %v404
      %v515 = vunpack.c.l.b16 %v405
      %v516 = vunpack.c.l.b16 %v406
      %v517 = vunpack.c.l.b16 %v407
      %v518 = vunpack.c.l.b16 %v408
      %v519 = vunpack.c.l.b16 %v409
      %v520 = vunpack.c.l.b16 %v410
      %v521 = vunpack.c.l.b16 %v411
      %v522 = vunpack.c.l.b16 %v412
      %v523 = vunpack.c.l.b16 %v413
      %v524 = vunpack.c.l.b16 %v414
      %v525 = vunpack.c.l.b16 %v415
      %v526 = vunpack.c.l.b16 %v416
      %v527 = vunpack.c.l.b16 %v417
      %v528 = vunpack.c.l.b16 %v418
      %v529 = vunpack.c.l.b16 %v419
      %v530 = vpack.c.b16 %v515, %v514
      %v531 = vpack.c.b16 %v517, %v516
      %v532 = vpack.c.b16 %v519, %v518
      %v533 = vpack.c.b16 %v521, %v520
      %v534 = vpack.c.b16 %v523, %v522
      %v535 = vpack.c.b16 %v525, %v524
      %v536 = vpack.c.b16 %v527, %v526
      %v537 = vpack.c.b16 %v529, %v528
      %546 = vmatpush.bf16.msra.mxu0 %v537
      %547 = vmatpush.bf16.msra.mxu0 %v536
      %548 = vmatpush.bf16.msra.mxu0 %v535
      %549 = vmatpush.bf16.msra.mxu0 %v534
      %550 = vmatpush.bf16.msra.mxu0 %v533
      %551 = vmatpush.bf16.msra.mxu0 %v532
      %552 = vmatpush.bf16.msra.mxu0 %v531
      %553 = vmatpush.bf16.msra.mxu0 %v530
      %554 = vmatmul.bf16.gmra.mxu0 %v472
      %v555 = vpop.f32.mrf.mxu0
      %v556 = vadd.f32 0.0, %v555
      %v557 = vpop.f32.mrf.mxu0
      %v558 = vadd.f32 0.0, %v557
      %559 = vmatmul.bf16.gmra.mxu0 %v473
      %v560 = vpop.f32.mrf.mxu0
      %v561 = vadd.f32 0.0, %v560
      %v562 = vpop.f32.mrf.mxu0
      %v563 = vadd.f32 0.0, %v562
      %564 = vmatmul.bf16.gmra.mxu0 %v474
      %v565 = vpop.f32.mrf.mxu0
      %v566 = vadd.f32 0.0, %v565
      %v567 = vpop.f32.mrf.mxu0
      %v568 = vadd.f32 0.0, %v567
      %569 = vmatmul.bf16.gmra.mxu0 %v475
      %v570 = vpop.f32.mrf.mxu0
      %v571 = vadd.f32 0.0, %v570
      %v572 = vpop.f32.mrf.mxu0
      %v573 = vadd.f32 0.0, %v572
      %574 = vmatmul.bf16.gmra.mxu0 %v476
      %v575 = vpop.f32.mrf.mxu0
      %v576 = vadd.f32 0.0, %v575
      %v577 = vpop.f32.mrf.mxu0
      %v578 = vadd.f32 0.0, %v577
      %579 = vmatmul.bf16.gmra.mxu0 %v477
      %v580 = vpop.f32.mrf.mxu0
      %v581 = vadd.f32 0.0, %v580
      %v582 = vpop.f32.mrf.mxu0
      %v583 = vadd.f32 0.0, %v582
      %584 = vmatmul.bf16.gmra.mxu0 %v478
      %v585 = vpop.f32.mrf.mxu0
      %v586 = vadd.f32 0.0, %v585
      %v587 = vpop.f32.mrf.mxu0
      %v588 = vadd.f32 0.0, %v587
      %589 = vmatmul.bf16.gmra.mxu0 %v479
      %v590 = vpop.f32.mrf.mxu0
      %v591 = vadd.f32 0.0, %v590
      %v592 = vpop.f32.mrf.mxu0
      %v593 = vadd.f32 0.0, %v592
      %594 = vmatmul.bf16.gmra.mxu0 %v480
      %v595 = vpop.f32.mrf.mxu0
      %v596 = vadd.f32 0.0, %v595
      %v597 = vpop.f32.mrf.mxu0
      %v598 = vadd.f32 0.0, %v597
      %599 = vmatmul.bf16.gmra.mxu0 %v481
      %v600 = vpop.f32.mrf.mxu0
      %v601 = vadd.f32 0.0, %v600
      %v602 = vpop.f32.mrf.mxu0
      %v603 = vadd.f32 0.0, %v602
      %604 = vmatmul.bf16.gmra.mxu0 %v482
      %v605 = vpop.f32.mrf.mxu0
      %v606 = vadd.f32 0.0, %v605
      %v607 = vpop.f32.mrf.mxu0
      %v608 = vadd.f32 0.0, %v607
      %609 = vmatmul.bf16.gmra.mxu0 %v483
      %v610 = vpop.f32.mrf.mxu0
      %v611 = vadd.f32 0.0, %v610
      %v612 = vpop.f32.mrf.mxu0
      %v613 = vadd.f32 0.0, %v612
      %614 = vmatmul.bf16.gmra.mxu0 %v484
      %v615 = vpop.f32.mrf.mxu0
      %v616 = vadd.f32 0.0, %v615
      %v617 = vpop.f32.mrf.mxu0
      %v618 = vadd.f32 0.0, %v617
      %619 = vdwg.mxu0
      %v620 = vadd.f32 %v352, %v556
      %v621 = vadd.f32 %v353, %v558
      %v622 = vadd.f32 %v354, %v561
      %v623 = vadd.f32 %v355, %v563
      %v624 = vadd.f32 %v356, %v566
      %v625 = vadd.f32 %v357, %v568
      %v626 = vadd.f32 %v358, %v571
      %v627 = vadd.f32 %v359, %v573
      %v628 = vadd.f32 %v360, %v576
      %v629 = vadd.f32 %v361, %v578
      %v630 = vadd.f32 %v362, %v581
      %v631 = vadd.f32 %v363, %v583
      %v632 = vadd.f32 %v364, %v586
      %v633 = vadd.f32 %v365, %v588
      %v634 = vadd.f32 %v366, %v591
      %v635 = vadd.f32 %v367, %v593
      %v636 = vadd.f32 %v368, %v596
      %v637 = vadd.f32 %v369, %v598
      %v638 = vadd.f32 %v370, %v601
      %v639 = vadd.f32 %v371, %v603
      %v640 = vadd.f32 %v372, %v606
      %v641 = vadd.f32 %v373, %v608
      %v642 = vadd.f32 %v374, %v611
      %v643 = vadd.f32 %v375, %v613
      %v644 = vadd.f32 %v376, %v616
      %v645 = vadd.f32 %v377, %v618
      %646 = vst [vmem:[#allocation2] sm:$0xff] %v620
      %647 = vst [vmem:[#allocation2 + $0x8] sm:$0xff] %v621
      %648 = vst [vmem:[#allocation2 + $0x10] sm:$0xff] %v622
      %649 = vst [vmem:[#allocation2 + $0x18] sm:$0xff] %v623
      %650 = vst [vmem:[#allocation2 + $0x20] sm:$0xff] %v624
      %651 = vst [vmem:[#allocation2 + $0x28] sm:$0xff] %v625
      %652 = vst [vmem:[#allocation2 + $0x30] sm:$0xff] %v626
      %653 = vst [vmem:[#allocation2 + $0x38] sm:$0xff] %v627
      %654 = vst [vmem:[#allocation2 + $0x40] sm:$0xff] %v628
      %655 = vst [vmem:[#allocation2 + $0x48] sm:$0xff] %v629
      %656 = vst [vmem:[#allocation2 + $0x50] sm:$0xff] %v630
      %657 = vst [vmem:[#allocation2 + $0x58] sm:$0xff] %v631
      %658 = vst [vmem:[#allocation2 + $0x60] sm:$0xff] %v632
      %659 = vst [vmem:[#allocation2 + $0x68] sm:$0xff] %v633
      %660 = vst [vmem:[#allocation2 + $0x70] sm:$0xff] %v634
      %661 = vst [vmem:[#allocation2 + $0x78] sm:$0xff] %v635
      %662 = vst [vmem:[#allocation2 + $0x80] sm:$0xff] %v636
      %663 = vst [vmem:[#allocation2 + $0x88] sm:$0xff] %v637
      %664 = vst [vmem:[#allocation2 + $0x90] sm:$0xff] %v638
      %665 = vst [vmem:[#allocation2 + $0x98] sm:$0xff] %v639
      %666 = vst [vmem:[#allocation2 + $0xa0] sm:$0xff] %v640
      %667 = vst [vmem:[#allocation2 + $0xa8] sm:$0xff] %v641
      %668 = vst [vmem:[#allocation2 + $0xb0] sm:$0xff] %v642
      %669 = vst [vmem:[#allocation2 + $0xb8] sm:$0xff] %v643
      %670 = vst [vmem:[#allocation2 + $0xc0] sm:$0xff] %v644
      %671 = vst [vmem:[#allocation2 + $0xc8] sm:$0xff] %v645
      // Predicated region
      $region41: #{forward.9} parent=35 // pred_check
        %p672 = pneg %p322
      $region42: #{forward.9} parent=35 // pred_check_branch
        %674 = sbr.rel (%p672) target = $region44
      $region43: #{forward.9} parent=35 // pred_region
        %v675 = vld [vmem:[#allocation2] sm:$0xff]
        %v676 = vld [vmem:[#allocation2 + $0x8] sm:$0xff]
        %v677 = vld [vmem:[#allocation2 + $0x10] sm:$0xff]
        %v678 = vld [vmem:[#allocation2 + $0x18] sm:$0xff]
        %v679 = vld [vmem:[#allocation2 + $0x20] sm:$0xff]
        %v680 = vld [vmem:[#allocation2 + $0x28] sm:$0xff]
        %v681 = vld [vmem:[#allocation2 + $0x30] sm:$0xff]
        %v682 = vld [vmem:[#allocation2 + $0x38] sm:$0xff]
        %v683 = vld [vmem:[#allocation2 + $0x40] sm:$0xff]
        %v684 = vld [vmem:[#allocation2 + $0x48] sm:$0xff]
        %v685 = vld [vmem:[#allocation2 + $0x50] sm:$0xff]
        %v686 = vld [vmem:[#allocation2 + $0x58] sm:$0xff]
        %v687 = vld [vmem:[#allocation2 + $0x60] sm:$0xff]
        %v688 = vld [vmem:[#allocation2 + $0x68] sm:$0xff]
        %v689 = vld [vmem:[#allocation2 + $0x70] sm:$0xff]
        %v690 = vld [vmem:[#allocation2 + $0x78] sm:$0xff]
        %v691 = vld [vmem:[#allocation2 + $0x80] sm:$0xff]
        %v692 = vld [vmem:[#allocation2 + $0x88] sm:$0xff]
        %v693 = vld [vmem:[#allocation2 + $0x90] sm:$0xff]
        %v694 = vld [vmem:[#allocation2 + $0x98] sm:$0xff]
        %v695 = vld [vmem:[#allocation2 + $0xa0] sm:$0xff]
        %v696 = vld [vmem:[#allocation2 + $0xa8] sm:$0xff]
        %v697 = vld [vmem:[#allocation2 + $0xb0] sm:$0xff]
        %v698 = vld [vmem:[#allocation2 + $0xb8] sm:$0xff]
        %v699 = vld [vmem:[#allocation2 + $0xc0] sm:$0xff]
        %v700 = vld [vmem:[#allocation2 + $0xc8] sm:$0xff]
        %v701 = vld [vmem:[%s303] sm:$0x1]
        %v702 = vperm.slane %v701, 0
        %v703 = vmul.f32 %v675, %v702
        %v704 = vmul.f32 %v676, %v702
        %v705 = vmul.f32 %v677, %v702
        %v706 = vmul.f32 %v678, %v702
        %v707 = vmul.f32 %v679, %v702
        %v708 = vmul.f32 %v680, %v702
        %v709 = vmul.f32 %v681, %v702
        %v710 = vmul.f32 %v682, %v702
        %v711 = vmul.f32 %v683, %v702
        %v712 = vmul.f32 %v684, %v702
        %v713 = vmul.f32 %v685, %v702
        %v714 = vmul.f32 %v686, %v702
        %v715 = vmul.f32 %v687, %v702
        %v716 = vmul.f32 %v688, %v702
        %v717 = vmul.f32 %v689, %v702
        %v718 = vmul.f32 %v690, %v702
        %v719 = vmul.f32 %v691, %v702
        %v720 = vmul.f32 %v692, %v702
        %v721 = vmul.f32 %v693, %v702
        %v722 = vmul.f32 %v694, %v702
        %v723 = vmul.f32 %v695, %v702
        %v724 = vmul.f32 %v696, %v702
        %v725 = vmul.f32 %v697, %v702
        %v726 = vmul.f32 %v698, %v702
        %v727 = vmul.f32 %v699, %v702
        %v728 = vmul.f32 %v700, %v702
        %v729 = vld [vmem:[%s303 + $0x1] sm:$0x1]
        %v730 = vperm.slane %v729, 0
        %v731 = vadd.f32 %v703, %v730
        %v732 = vadd.f32 %v704, %v730
        %v733 = vadd.f32 %v705, %v730
        %v734 = vadd.f32 %v706, %v730
        %v735 = vadd.f32 %v707, %v730
        %v736 = vadd.f32 %v708, %v730
        %v737 = vadd.f32 %v709, %v730
        %v738 = vadd.f32 %v710, %v730
        %v739 = vadd.f32 %v711, %v730
        %v740 = vadd.f32 %v712, %v730
        %v741 = vadd.f32 %v713, %v730
        %v742 = vadd.f32 %v714, %v730
        %v743 = vadd.f32 %v715, %v730
        %v744 = vadd.f32 %v716, %v730
        %v745 = vadd.f32 %v717, %v730
        %v746 = vadd.f32 %v718, %v730
        %v747 = vadd.f32 %v719, %v730
        %v748 = vadd.f32 %v720, %v730
        %v749 = vadd.f32 %v721, %v730
        %v750 = vadd.f32 %v722, %v730
        %v751 = vadd.f32 %v723, %v730
        %v752 = vadd.f32 %v724, %v730
        %v753 = vadd.f32 %v725, %v730
        %v754 = vadd.f32 %v726, %v730
        %v755 = vadd.f32 %v727, %v730
        %v756 = vadd.f32 %v728, %v730
        %v757 = vld [vmem:[%s311] sm:$0xf]
        %v758 = vld [vmem:[%s311 + $0x4] sm:$0xf]
        %v759 = vld [vmem:[%s311 + $0x8] sm:$0xf]
        %v760 = vld [vmem:[%s311 + $0xc] sm:$0xf]
        %v761 = vld [vmem:[%s311 + $0x10] sm:$0xf]
        %v762 = vld [vmem:[%s311 + $0x14] sm:$0xf]
        %v763 = vld [vmem:[%s311 + $0x18] sm:$0xf]
        %v764 = vld [vmem:[%s311 + $0x1c] sm:$0xf]
        %v765 = vld [vmem:[%s311 + $0x20] sm:$0xf]
        %v766 = vld [vmem:[%s311 + $0x24] sm:$0xf]
        %v767 = vld [vmem:[%s311 + $0x28] sm:$0xf]
        %v768 = vld [vmem:[%s311 + $0x2c] sm:$0xf]
        %v769 = vld [vmem:[%s311 + $0x30] sm:$0xf]
        %v770 = vld [vmem:[%s311 + $0x34] sm:$0xf]
        %v771 = vld [vmem:[%s311 + $0x38] sm:$0xf]
        %v772 = vld [vmem:[%s311 + $0x3c] sm:$0xf]
        %v773 = vld [vmem:[%s311 + $0x40] sm:$0xf]
        %v774 = vld [vmem:[%s311 + $0x44] sm:$0xf]
        %v775 = vld [vmem:[%s311 + $0x48] sm:$0xf]
        %v776 = vld [vmem:[%s311 + $0x4c] sm:$0xf]
        %v777 = vld [vmem:[%s311 + $0x50] sm:$0xf]
        %v778 = vld [vmem:[%s311 + $0x54] sm:$0xf]
        %v779 = vld [vmem:[%s311 + $0x58] sm:$0xf]
        %v780 = vld [vmem:[%s311 + $0x5c] sm:$0xf]
        %v781 = vld [vmem:[%s311 + $0x60] sm:$0xf]
        %v782 = vld [vmem:[%s311 + $0x64] sm:$0xf]
        %v783 = vunpack.c.l.bf16 %v757
        %v784 = vunpack.c.l.bf16 %v758
        %v785 = vunpack.c.l.bf16 %v759
        %v786 = vunpack.c.l.bf16 %v760
        %v787 = vunpack.c.l.bf16 %v761
        %v788 = vunpack.c.l.bf16 %v762
        %v789 = vunpack.c.l.bf16 %v763
        %v790 = vunpack.c.l.bf16 %v764
        %v791 = vunpack.c.l.bf16 %v765
        %v792 = vunpack.c.l.bf16 %v766
        %v793 = vunpack.c.l.bf16 %v767
        %v794 = vunpack.c.l.bf16 %v768
        %v795 = vunpack.c.l.bf16 %v769
        %v796 = vunpack.c.l.bf16 %v770
        %v797 = vunpack.c.l.bf16 %v771
        %v798 = vunpack.c.l.bf16 %v772
        %v799 = vunpack.c.l.bf16 %v773
        %v800 = vunpack.c.l.bf16 %v774
        %v801 = vunpack.c.l.bf16 %v775
        %v802 = vunpack.c.l.bf16 %v776
        %v803 = vunpack.c.l.bf16 %v777
        %v804 = vunpack.c.l.bf16 %v778
        %v805 = vunpack.c.l.bf16 %v779
        %v806 = vunpack.c.l.bf16 %v780
        %v807 = vunpack.c.l.bf16 %v781
        %v808 = vunpack.c.l.bf16 %v782
        %v809 = vadd.f32 %v731, %v783
        %v810 = vadd.f32 %v732, %v784
        %v811 = vadd.f32 %v733, %v785
        %v812 = vadd.f32 %v734, %v786
        %v813 = vadd.f32 %v735, %v787
        %v814 = vadd.f32 %v736, %v788
        %v815 = vadd.f32 %v737, %v789
        %v816 = vadd.f32 %v738, %v790
        %v817 = vadd.f32 %v739, %v791
        %v818 = vadd.f32 %v740, %v792
        %v819 = vadd.f32 %v741, %v793
        %v820 = vadd.f32 %v742, %v794
        %v821 = vadd.f32 %v743, %v795
        %v822 = vadd.f32 %v744, %v796
        %v823 = vadd.f32 %v745, %v797
        %v824 = vadd.f32 %v746, %v798
        %v825 = vadd.f32 %v747, %v799
        %v826 = vadd.f32 %v748, %v800
        %v827 = vadd.f32 %v749, %v801
        %v828 = vadd.f32 %v750, %v802
        %v829 = vadd.f32 %v751, %v803
        %v830 = vadd.f32 %v752, %v804
        %v831 = vadd.f32 %v753, %v805
        %v832 = vadd.f32 %v754, %v806
        %v833 = vadd.f32 %v755, %v807
        %v834 = vadd.f32 %v756, %v808
        %v835 = vmax.f32 %v809, 0.0
        %v836 = vmax.f32 %v810, 0.0
        %v837 = vmax.f32 %v811, 0.0
        %v838 = vmax.f32 %v812, 0.0
        %v839 = vmax.f32 %v813, 0.0
        %v840 = vmax.f32 %v814, 0.0
        %v841 = vmax.f32 %v815, 0.0
        %v842 = vmax.f32 %v816, 0.0
        %v843 = vmax.f32 %v817, 0.0
        %v844 = vmax.f32 %v818, 0.0
        %v845 = vmax.f32 %v819, 0.0
        %v846 = vmax.f32 %v820, 0.0
        %v847 = vmax.f32 %v821, 0.0
        %v848 = vmax.f32 %v822, 0.0
        %v849 = vmax.f32 %v823, 0.0
        %v850 = vmax.f32 %v824, 0.0
        %v851 = vmax.f32 %v825, 0.0
        %v852 = vmax.f32 %v826, 0.0
        %v853 = vmax.f32 %v827, 0.0
        %v854 = vmax.f32 %v828, 0.0
        %v855 = vmax.f32 %v829, 0.0
        %v856 = vmax.f32 %v830, 0.0
        %v857 = vmax.f32 %v831, 0.0
        %v858 = vmax.f32 %v832, 0.0
        %v859 = vmax.f32 %v833, 0.0
        %v860 = vmax.f32 %v834, 0.0
        %v861 = vpack.c.bf16 %v835, %v835
        %v862 = vpack.c.bf16 %v836, %v836
        %v863 = vpack.c.bf16 %v837, %v837
        %v864 = vpack.c.bf16 %v838, %v838
        %v865 = vpack.c.bf16 %v839, %v839
        %v866 = vpack.c.bf16 %v840, %v840
        %v867 = vpack.c.bf16 %v841, %v841
        %v868 = vpack.c.bf16 %v842, %v842
        %v869 = vpack.c.bf16 %v843, %v843
        %v870 = vpack.c.bf16 %v844, %v844
        %v871 = vpack.c.bf16 %v845, %v845
        %v872 = vpack.c.bf16 %v846, %v846
        %v873 = vpack.c.bf16 %v847, %v847
        %v874 = vpack.c.bf16 %v848, %v848
        %v875 = vpack.c.bf16 %v849, %v849
        %v876 = vpack.c.bf16 %v850, %v850
        %v877 = vpack.c.bf16 %v851, %v851
        %v878 = vpack.c.bf16 %v852, %v852
        %v879 = vpack.c.bf16 %v853, %v853
        %v880 = vpack.c.bf16 %v854, %v854
        %v881 = vpack.c.bf16 %v855, %v855
        %v882 = vpack.c.bf16 %v856, %v856
        %v883 = vpack.c.bf16 %v857, %v857
        %v884 = vpack.c.bf16 %v858, %v858
        %v885 = vpack.c.bf16 %v859, %v859
        %v886 = vpack.c.bf16 %v860, %v860
        %887 = vst [vmem:[%s320] sm:$0xf] %v861
        %888 = vst [vmem:[%s320 + $0x4] sm:$0xf] %v862
        %889 = vst [vmem:[%s320 + $0x8] sm:$0xf] %v863
        %890 = vst [vmem:[%s320 + $0xc] sm:$0xf] %v864
        %891 = vst [vmem:[%s320 + $0x10] sm:$0xf] %v865
        %892 = vst [vmem:[%s320 + $0x14] sm:$0xf] %v866
        %893 = vst [vmem:[%s320 + $0x18] sm:$0xf] %v867
        %894 = vst [vmem:[%s320 + $0x1c] sm:$0xf] %v868
        %895 = vst [vmem:[%s320 + $0x20] sm:$0xf] %v869
        %896 = vst [vmem:[%s320 + $0x24] sm:$0xf] %v870
        %897 = vst [vmem:[%s320 + $0x28] sm:$0xf] %v871
        %898 = vst [vmem:[%s320 + $0x2c] sm:$0xf] %v872
        %899 = vst [vmem:[%s320 + $0x30] sm:$0xf] %v873
        %900 = vst [vmem:[%s320 + $0x34] sm:$0xf] %v874
        %901 = vst [vmem:[%s320 + $0x38] sm:$0xf] %v875
        %902 = vst [vmem:[%s320 + $0x3c] sm:$0xf] %v876
        %903 = vst [vmem:[%s320 + $0x40] sm:$0xf] %v877
        %904 = vst [vmem:[%s320 + $0x44] sm:$0xf] %v878
        %905 = vst [vmem:[%s320 + $0x48] sm:$0xf] %v879
        %906 = vst [vmem:[%s320 + $0x4c] sm:$0xf] %v880
        %907 = vst [vmem:[%s320 + $0x50] sm:$0xf] %v881
        %908 = vst [vmem:[%s320 + $0x54] sm:$0xf] %v882
        %909 = vst [vmem:[%s320 + $0x58] sm:$0xf] %v883
        %910 = vst [vmem:[%s320 + $0x5c] sm:$0xf] %v884
        %911 = vst [vmem:[%s320 + $0x60] sm:$0xf] %v885
        %912 = vst [vmem:[%s320 + $0x64] sm:$0xf] %v886
      $region44: #{forward.9} parent=35 // pred_fallthru
        _
      %s913 = smul.u32 26, %s20
      %p914 = scmp.lt.s32.totalorder %s913, 51
      %s915 = scalar_select %p914, %s913, 51
      %p916 = scmp.lt.s32.totalorder %s21, 0
      %s917 = scalar_select %p916, %s21, 0
      %s918 = sadd.s32 %s917, %s915
      %s919 = smul.addr %s918, 4
      %s920 = scalar_lea.vmem %s4, %s919
      // Predicated region
      $region45: #{forward.9} parent=35 // pred_check
        %p921 = pneg %p164
      $region46: #{forward.9} parent=35 // pred_check_branch
        %923 = sbr.rel (%p921) target = $region48
      $region47: #{forward.9} parent=35 // pred_region
        %s924 = smul.u32 26, %s20
      $region48: #{forward.9} parent=35 // pred_fallthru
        _
    $region36: #{forward.9} parent=5 // pred_fallthru
      _
    %p925 = scmp.le.s32.totalorder 2, %s10
    // Predicated region
    $region49: #{forward.9} parent=5 // pred_check
      %p926 = pneg %p925
    $region50: #{forward.9} parent=5 // pred_check_branch
      %928 = sbr.rel (%p926) target = $region52
    $region51: #{forward.9} parent=5 // pred_region
      %s929 = ssub.s32 %s10, 2
      // Predicated region
      $region53: #{forward.9} parent=51 // pred_check
        %p930 = pneg %p170
      $region54: #{forward.9} parent=51 // pred_check_branch
        %932 = sbr.rel (%p930) target = $region56
      $region55: #{forward.9} parent=51 // pred_region
        %s933 = smul.u32 26, %s23
        %p934 = scmp.lt.s32.totalorder %s933, 51
        %s935 = scalar_select %p934, %s933, 51
        %p936 = scmp.lt.s32.totalorder %s24, 0
        %s937 = scalar_select %p936, %s24, 0
        %s938 = sadd.s32 %s937, %s935
        %s939 = smul.addr %s938, 4
        %s940 = scalar_lea.vmem %s4, %s939
      $region56: #{forward.9} parent=51 // pred_fallthru
        _
    $region52: #{forward.9} parent=5 // pred_fallthru
      _
  $region6: #{forward.9} parent=0 // loop_footer
    %s14 = sadd.s32 1, %s10
  $region7: #{forward.9} parent=0 // loop_footer_branch
    %9 = sbr.rel target = $region3
  $region8: #{forward.9} parent=0 // loop_exit
    _

// kernel: forward.10
$region0: #{forward.10}
  #allocation0 [shape = 'u32[]', space=smem, size = 0x4, offset = 0x4, fixed_abs, tag = 'smem constant byte address 0x4 - core index']
  #allocation1 [shape = 'u32[72,128]{1,0:T(1,128)}', space=vmem, size = 0x9000, scoped, tag = 'internal scratch']
  #allocation2 [shape = 'f32[32,128]{1,0:T(8,128)}', space=vmem, size = 0x4000, scoped, tag = 'scratch operand']
  %s0 = inlined_call_operand.vmem [shape: bf16[64,128], index: 0, kind: input, shape index: {}]
  %s1 = inlined_call_operand.vmem [shape: bf16[128,128], index: 1, kind: input, shape index: {}]
  %s2 = inlined_call_operand.vmem [shape: f32[2,128], index: 2, kind: input, shape index: {}]
  %s3 = inlined_call_operand.vmem [shape: bf16[64,128], index: 3, kind: output, shape index: {}]
  %s4 = sld [smem:[#allocation0]]
  $region53: #{forward.10} parent=0
    _
  %s6 = ssub.s32 1, %s4
  %s7 = scalar_select 0, %s6, %s4
  loop: start=0, step=1, limit=4
  $region2: #{forward.10} parent=0 // loop_pre_header
    _
  $region3: #{forward.10} parent=0 // loop_header
    %s9 = sphi 0, %s13
    %p10 = scmp.ge.s32.totalorder %s9, 4
    %s16 = sphi 0, %s35
    %s17 = sphi 0, %s31
    %s18 = sphi 0, %s27
    %s19 = sphi 0, %s16
    %s20 = sphi 0, %s17
    %s21 = sphi 0, %s18
    %s22 = sphi 0, %s19
    %s23 = sphi 0, %s20
    %s24 = sphi 0, %s21
    %s40 = sphi 0, %s42
    %s43 = sphi 0, %s40
    %s44 = sphi 0, %s43
    %s60 = sphi 0, %s44
    %s68 = sphi 0, %s70
    %s71 = sphi 0, %s68
    %s72 = sphi 0, %s71
    %s88 = sphi 0, %s72
    %s94 = sphi 0, %s96
    %s97 = sphi 0, %s94
    %s98 = sphi 0, %s97
    %s114 = sphi 0, %s98
    %s122 = sphi 0, %s124
    %s125 = sphi 0, %s122
    %s126 = sphi 0, %s125
    %s142 = sphi 0, %s126
  $region4: #{forward.10} parent=0 // loop_header_branch
    %12 = sbr.rel (%p10) target = $region8
  $region5: #{forward.10} parent=0 // loop_body
    %s14 = ssub.s32 %s9, 1
    %s15 = ssub.s32 %s9, 2
    %s25 = sadd.s32 1, %s18
    %p26 = scmp.ge.s32.totalorder %s25, 1
    %s27 = scalar_select %p26, 0, %s25
    %s28 = sadd.s32 1, %s17
    %s29 = scalar_select %p26, %s28, %s17
    %p30 = scmp.ge.s32.totalorder %s29, 1
    %s31 = scalar_select %p30, 0, %s29
    %s32 = sadd.s32 1, %s16
    %s33 = scalar_select %p30, %s32, %s16
    %p34 = scmp.ge.s32.totalorder %s33, 2
    %s35 = scalar_select %p34, 0, %s33
    %s36 = ssub.s32 %s16, %s35
    %s37 = ssub.s32 %s18, %s27
    %s38 = sor.u32 %s36, %s37
    %p39 = scmp.eq.s32.totalorder %s38, 0
    %s41 = sadd.s32 %s40, 1
    %s42 = scalar_select %p39, %s40, %s41
    %p45 = pneg %p39
    %p46 = scmp.eq.s32.totalorder %s9, 1
    %p47 = por %p45, %p46
    %p48 = scmp.ne.s32.totalorder %s40, %s43
    %p49 = scmp.eq.s32.totalorder %s9, 0
    %p50 = por %p48, %p49
    %p51 = scmp.ne.s32.totalorder %s40, %s43
    %p52 = scmp.eq.s32.totalorder %s14, 1
    %p53 = por %p51, %p52
    %p54 = scmp.ne.s32.totalorder %s43, %s44
    %p55 = scmp.eq.s32.totalorder %s14, 0
    %p56 = por %p54, %p55
    %p57 = scmp.ne.s32.totalorder %s43, %s44
    %p58 = scmp.eq.s32.totalorder %s15, 1
    %p59 = por %p57, %p58
    %p61 = scmp.ne.s32.totalorder %s44, %s60
    %p62 = scmp.eq.s32.totalorder %s15, 0
    %p63 = por %p61, %p62
    %s64 = ssub.s32 %s18, %s27
    %s65 = ssub.s32 %s17, %s31
    %s66 = sor.u32 %s64, %s65
    %p67 = scmp.eq.s32.totalorder %s66, 0
    %s69 = sadd.s32 %s68, 1
    %s70 = scalar_select %p67, %s68, %s69
    %p73 = pneg %p67
    %p74 = scmp.eq.s32.totalorder %s9, 1
    %p75 = por %p73, %p74
    %p76 = scmp.ne.s32.totalorder %s68, %s71
    %p77 = scmp.eq.s32.totalorder %s9, 0
    %p78 = por %p76, %p77
    %p79 = scmp.ne.s32.totalorder %s68, %s71
    %p80 = scmp.eq.s32.totalorder %s14, 1
    %p81 = por %p79, %p80
    %p82 = scmp.ne.s32.totalorder %s71, %s72
    %p83 = scmp.eq.s32.totalorder %s14, 0
    %p84 = por %p82, %p83
    %p85 = scmp.ne.s32.totalorder %s71, %s72
    %p86 = scmp.eq.s32.totalorder %s15, 1
    %p87 = por %p85, %p86
    %p89 = scmp.ne.s32.totalorder %s72, %s88
    %p90 = scmp.eq.s32.totalorder %s15, 0
    %p91 = por %p89, %p90
    %s92 = ssub.s32 %s17, %s31
    %p93 = scmp.eq.s32.totalorder %s92, 0
    %s95 = sadd.s32 %s94, 1
    %s96 = scalar_select %p93, %s94, %s95
    %p99 = pneg %p93
    %p100 = scmp.eq.s32.totalorder %s9, 1
    %p101 = por %p99, %p100
    %p102 = scmp.ne.s32.totalorder %s94, %s97
    %p103 = scmp.eq.s32.totalorder %s9, 0
    %p104 = por %p102, %p103
    %p105 = scmp.ne.s32.totalorder %s94, %s97
    %p106 = scmp.eq.s32.totalorder %s14, 1
    %p107 = por %p105, %p106
    %p108 = scmp.ne.s32.totalorder %s97, %s98
    %p109 = scmp.eq.s32.totalorder %s14, 0
    %p110 = por %p108, %p109
    %p111 = scmp.ne.s32.totalorder %s97, %s98
    %p112 = scmp.eq.s32.totalorder %s15, 1
    %p113 = por %p111, %p112
    %p115 = scmp.ne.s32.totalorder %s98, %s114
    %p116 = scmp.eq.s32.totalorder %s15, 0
    %p117 = por %p115, %p116
    %s118 = ssub.s32 %s16, %s35
    %s119 = ssub.s32 %s17, %s31
    %s120 = sor.u32 %s118, %s119
    %p121 = scmp.eq.s32.totalorder %s120, 0
    %s123 = sadd.s32 %s122, 1
    %s124 = scalar_select %p121, %s122, %s123
    %p127 = pneg %p121
    %p128 = scmp.eq.s32.totalorder %s9, 1
    %p129 = por %p127, %p128
    %p130 = scmp.ne.s32.totalorder %s122, %s125
    %p131 = scmp.eq.s32.totalorder %s9, 0
    %p132 = por %p130, %p131
    %p133 = scmp.ne.s32.totalorder %s122, %s125
    %p134 = scmp.eq.s32.totalorder %s14, 1
    %p135 = por %p133, %p134
    %p136 = scmp.ne.s32.totalorder %s125, %s126
    %p137 = scmp.eq.s32.totalorder %s14, 0
    %p138 = por %p136, %p137
    %p139 = scmp.ne.s32.totalorder %s125, %s126
    %p140 = scmp.eq.s32.totalorder %s15, 1
    %p141 = por %p139, %p140
    %p143 = scmp.ne.s32.totalorder %s126, %s142
    %p144 = scmp.eq.s32.totalorder %s15, 0
    %p145 = por %p143, %p144
    %p146 = scmp.le.s32.totalorder 1, %s9
    %p147 = scmp.lt.s32.totalorder %s9, 3
    %p148 = pnand %p146, %p147
    %p149 = pneg %p148
    // Predicated region
    $region9: #{forward.10} parent=5 // pred_check
      _
    $region10: #{forward.10} parent=5 // pred_check_branch
      %151 = sbr.rel (%p148) target = $region12
    $region11: #{forward.10} parent=5 // pred_region
      %s152 = ssub.s32 %s9, 1
      // Predicated region
      $region13: #{forward.10} parent=11 // pred_check
        %p153 = pneg %p84
      $region14: #{forward.10} parent=11 // pred_check_branch
        %155 = sbr.rel (%p153) target = $region16
      $region15: #{forward.10} parent=11 // pred_region
        %s156 = smul.u32 16, %s21
        %p157 = scmp.lt.s32.totalorder %s156, 15
        %s158 = scalar_select %p157, %s156, 15
        %p159 = scmp.lt.s32.totalorder %s20, 0
        %s160 = scalar_select %p159, %s20, 0
        %s161 = sadd.s32 %s160, %s158
        %s162 = smul.addr %s161, 4
        %s163 = scalar_lea.vmem %s1, %s162
        %s164 = smul.u32 16, %s21
      $region16: #{forward.10} parent=11 // pred_fallthru
        _
      // Predicated region
      $region17: #{forward.10} parent=11 // pred_check
        %p165 = pneg %p110
      $region18: #{forward.10} parent=11 // pred_check_branch
        %167 = sbr.rel (%p165) target = $region20
      $region19: #{forward.10} parent=11 // pred_region
        %p168 = scmp.lt.s32.totalorder %s20, 0
        %s169 = scalar_select %p168, %s20, 0
        %s170 = smul.addr %s169, 2
        %s171 = scalar_lea.vmem %s2, %s170
      $region20: #{forward.10} parent=11 // pred_fallthru
        _
    $region12: #{forward.10} parent=5 // pred_fallthru
      _
    %p172 = scmp.lt.s32.totalorder %s9, 2
    // Predicated region
    $region21: #{forward.10} parent=5 // pred_check
      %p173 = pneg %p172
    $region22: #{forward.10} parent=5 // pred_check_branch
      %175 = sbr.rel (%p173) target = $region24
    $region23: #{forward.10} parent=5 // pred_region
      // Predicated region
      $region25: #{forward.10} parent=23 // pred_check
        %p176 = pneg %p50
      $region26: #{forward.10} parent=23 // pred_check_branch
        %178 = sbr.rel (%p176) target = $region28
      $region27: #{forward.10} parent=23 // pred_region
        %s179 = smul.u32 4, %s16
        %p180 = scmp.lt.s32.totalorder %s179, 7
        %s181 = scalar_select %p180, %s179, 7
        %p182 = scmp.lt.s32.totalorder %s18, 0
        %s183 = scalar_select %p182, %s18, 0
        %s184 = sadd.s32 %s183, %s181
        %s185 = smul.addr %s184, 4
        %s186 = scalar_lea.vmem %s0, %s185
        %s187 = smul.u32 4, %s16
      $region28: #{forward.10} parent=23 // pred_fallthru
        _
    $region24: #{forward.10} parent=5 // pred_fallthru
      _
    %p188 = scmp.le.s32.totalorder 1, %s9
    %p189 = scmp.lt.s32.totalorder %s9, 3
    %p190 = pnand %p188, %p189
    %p191 = pneg %p190
    // Predicated region
    $region29: #{forward.10} parent=5 // pred_check
      _
    $region30: #{forward.10} parent=5 // pred_check_branch
      %193 = sbr.rel (%p190) target = $region32
    $region31: #{forward.10} parent=5 // pred_region
      %s194 = ssub.s32 %s9, 1
      %s195 = smul.u32 4, %s19
      %p196 = scmp.lt.s32.totalorder %s195, 7
      %s197 = scalar_select %p196, %s195, 7
      %p198 = scmp.lt.s32.totalorder %s21, 0
      %s199 = scalar_select %p198, %s21, 0
      %s200 = sadd.s32 %s199, %s197
      %s201 = smul.addr %s200, 4
      %s202 = scalar_lea.vmem %s0, %s201
      %p203 = pneg %p56
      %p204 = pneg %p53
      %s205 = smul.u32 16, %s21
      %p206 = scmp.lt.s32.totalorder %s205, 15
      %s207 = scalar_select %p206, %s205, 15
      %p208 = scmp.lt.s32.totalorder %s20, 0
      %s209 = scalar_select %p208, %s20, 0
      %s210 = sadd.s32 %s209, %s207
      %s211 = smul.addr %s210, 4
      %s212 = scalar_lea.vmem %s1, %s211
      %p213 = pneg %p84
      %p214 = pneg %p81
      %p215 = scmp.lt.s32.totalorder %s20, 0
      %s216 = scalar_select %p215, %s20, 0
      %s217 = smul.addr %s216, 2
      %s218 = scalar_lea.vmem %s2, %s217
      %p219 = pneg %p110
      %p220 = pneg %p107
      %p221 = pneg %p138
      %p222 = pneg %p135
      %s223 = smul.u32 4, %s19
      %p224 = scmp.lt.s32.totalorder %s223, 7
      %s225 = scalar_select %p224, %s223, 7
      %p226 = scmp.lt.s32.totalorder %s20, 0
      %s227 = scalar_select %p226, %s20, 0
      %s228 = sadd.s32 %s227, %s225
      %s229 = smul.addr %s228, 4
      %s230 = scalar_lea.vmem %s3, %s229
      %s231 = smul.u32 4, %s19
      %p232 = scmp.lt.s32.totalorder %s231, 7
      %s233 = scalar_select %p232, %s231, 7
      %p234 = scmp.lt.s32.totalorder %s21, 0
      %s235 = scalar_select %p234, %s21, 0
      %s236 = sadd.s32 %s235, %s233
      %s237 = smul.addr %s236, 4
      %s238 = scalar_lea.vmem %s0, %s237
      %s239 = smul.u32 4, %s19
      %s240 = smul.u32 16, %s21
      %p241 = scmp.lt.s32.totalorder %s240, 15
      %s242 = scalar_select %p241, %s240, 15
      %p243 = scmp.lt.s32.totalorder %s20, 0
      %s244 = scalar_select %p243, %s20, 0
      %s245 = sadd.s32 %s244, %s242
      %s246 = smul.addr %s245, 4
      %s247 = scalar_lea.vmem %s1, %s246
      %s248 = smul.u32 16, %s21
      %p249 = scmp.lt.s32.totalorder %s20, 0
      %s250 = scalar_select %p249, %s20, 0
      %s251 = smul.addr %s250, 2
      %s252 = scalar_lea.vmem %s2, %s251
      %s253 = smul.u32 4, %s19
      %p254 = scmp.lt.s32.totalorder %s253, 7
      %s255 = scalar_select %p254, %s253, 7
      %p256 = scmp.lt.s32.totalorder %s20, 0
      %s257 = scalar_select %p256, %s20, 0
      %s258 = sadd.s32 %s257, %s255
      %s259 = smul.addr %s258, 4
      %s260 = scalar_lea.vmem %s3, %s259
      %s261 = smul.u32 4, %s19
      %p262 = scmp.eq.s32.totalorder %s21, 0
      // Predicated region
      $region33: #{forward.10} parent=31 // pred_check
        %p263 = pneg %p262
      $region34: #{forward.10} parent=31 // pred_check_branch
        %265 = sbr.rel (%p263) target = $region36
      $region35: #{forward.10} parent=31 // pred_region
        %266 = vst [vmem:[#allocation2] sm:$0xff] 0.0
        %267 = vst [vmem:[#allocation2 + $0x8] sm:$0xff] 0.0
        %268 = vst [vmem:[#allocation2 + $0x10] sm:$0xff] 0.0
        %269 = vst [vmem:[#allocation2 + $0x18] sm:$0xff] 0.0
      $region36: #{forward.10} parent=31 // pred_fallthru
        _
      %v270 = vld [vmem:[#allocation2] sm:$0xff]
      %v271 = vld [vmem:[#allocation2 + $0x8] sm:$0xff]
      %v272 = vld [vmem:[#allocation2 + $0x10] sm:$0xff]
      %v273 = vld [vmem:[#allocation2 + $0x18] sm:$0xff]
      %v274 = vld [vmem:[%s238] sm:$0xf]
      %v275 = vld [vmem:[%s238 + $0x4] sm:$0xf]
      %v276 = vld [vmem:[%s238 + $0x8] sm:$0xf]
      %v277 = vld [vmem:[%s238 + $0xc] sm:$0xf]
      %v278 = vld [vmem:[%s247] sm:$0xf]
      %v279 = vld [vmem:[%s247 + $0x4] sm:$0xf]
      %v280 = vld [vmem:[%s247 + $0x8] sm:$0xf]
      %v281 = vld [vmem:[%s247 + $0xc] sm:$0xf]
      %v282 = vld [vmem:[%s247 + $0x10] sm:$0xf]
      %v283 = vld [vmem:[%s247 + $0x14] sm:$0xf]
      %v284 = vld [vmem:[%s247 + $0x18] sm:$0xf]
      %v285 = vld [vmem:[%s247 + $0x1c] sm:$0xf]
      %v286 = vld [vmem:[%s247 + $0x20] sm:$0xf]
      %v287 = vld [vmem:[%s247 + $0x24] sm:$0xf]
      %v288 = vld [vmem:[%s247 + $0x28] sm:$0xf]
      %v289 = vld [vmem:[%s247 + $0x2c] sm:$0xf]
      %v290 = vld [vmem:[%s247 + $0x30] sm:$0xf]
      %v291 = vld [vmem:[%s247 + $0x34] sm:$0xf]
      %v292 = vld [vmem:[%s247 + $0x38] sm:$0xf]
      %v293 = vld [vmem:[%s247 + $0x3c] sm:$0xf]
      %v298 = vunpack.c.l.b16 %v274
      %v299 = vunpack.c.l.b16 %v275
      %v300 = vunpack.c.l.b16 %v276
      %v301 = vunpack.c.l.b16 %v277
      %v302 = vpack.c.b16 %v299, %v298
      %v303 = vpack.c.b16 %v301, %v300
      %v322 = vunpack.c.l.b16 %v278
      %v323 = vunpack.c.l.b16 %v279
      %v324 = vunpack.c.l.b16 %v280
      %v325 = vunpack.c.l.b16 %v281
      %v326 = vunpack.c.l.b16 %v282
      %v327 = vunpack.c.l.b16 %v283
      %v328 = vunpack.c.l.b16 %v284
      %v329 = vunpack.c.l.b16 %v285
      %v330 = vunpack.c.l.b16 %v286
      %v331 = vunpack.c.l.b16 %v287
      %v332 = vunpack.c.l.b16 %v288
      %v333 = vunpack.c.l.b16 %v289
      %v334 = vunpack.c.l.b16 %v290
      %v335 = vunpack.c.l.b16 %v291
      %v336 = vunpack.c.l.b16 %v292
      %v337 = vunpack.c.l.b16 %v293
      %v338 = vpack.c.b16 %v323, %v322
      %v339 = vpack.c.b16 %v325, %v324
      %v340 = vpack.c.b16 %v327, %v326
      %v341 = vpack.c.b16 %v329, %v328
      %v342 = vpack.c.b16 %v331, %v330
      %v343 = vpack.c.b16 %v333, %v332
      %v344 = vpack.c.b16 %v335, %v334
      %v345 = vpack.c.b16 %v337, %v336
      %354 = vmatpush.bf16.msra.mxu0 %v345
      %355 = vmatpush.bf16.msra.mxu0 %v344
      %356 = vmatpush.bf16.msra.mxu0 %v343
      %357 = vmatpush.bf16.msra.mxu0 %v342
      %358 = vmatpush.bf16.msra.mxu0 %v341
      %359 = vmatpush.bf16.msra.mxu0 %v340
      %360 = vmatpush.bf16.msra.mxu0 %v339
      %361 = vmatpush.bf16.msra.mxu0 %v338
      %362 = vmatmul.bf16.gmra.mxu0 %v302
      %v363 = vpop.f32.mrf.mxu0
      %v364 = vadd.f32 0.0, %v363
      %v365 = vpop.f32.mrf.mxu0
      %v366 = vadd.f32 0.0, %v365
      %367 = vmatmul.bf16.gmra.mxu0 %v303
      %v368 = vpop.f32.mrf.mxu0
      %v369 = vadd.f32 0.0, %v368
      %v370 = vpop.f32.mrf.mxu0
      %v371 = vadd.f32 0.0, %v370
      %372 = vdwg.mxu0
      %v373 = vadd.f32 %v270, %v364
      %v374 = vadd.f32 %v271, %v366
      %v375 = vadd.f32 %v272, %v369
      %v376 = vadd.f32 %v273, %v371
      %377 = vst [vmem:[#allocation2] sm:$0xff] %v373
      %378 = vst [vmem:[#allocation2 + $0x8] sm:$0xff] %v374
      %379 = vst [vmem:[#allocation2 + $0x10] sm:$0xff] %v375
      %380 = vst [vmem:[#allocation2 + $0x18] sm:$0xff] %v376
      // Predicated region
      $region37: #{forward.10} parent=31 // pred_check
        %p381 = pneg %p262
      $region38: #{forward.10} parent=31 // pred_check_branch
        %383 = sbr.rel (%p381) target = $region40
      $region39: #{forward.10} parent=31 // pred_region
        %v384 = vld [vmem:[#allocation2] sm:$0xff]
        %v385 = vld [vmem:[#allocation2 + $0x8] sm:$0xff]
        %v386 = vld [vmem:[#allocation2 + $0x10] sm:$0xff]
        %v387 = vld [vmem:[#allocation2 + $0x18] sm:$0xff]
        %v388 = vmax.f32 %v384, 0.0
        %v389 = vmax.f32 %v385, 0.0
        %v390 = vmax.f32 %v386, 0.0
        %v391 = vmax.f32 %v387, 0.0
        %v392 = vld [vmem:[%s252] sm:$0x1]
        %v393 = vperm.slane %v392, 0
        %v394 = vmul.f32 %v388, %v393
        %v395 = vmul.f32 %v389, %v393
        %v396 = vmul.f32 %v390, %v393
        %v397 = vmul.f32 %v391, %v393
        %v398 = vld [vmem:[%s252 + $0x1] sm:$0x1]
        %v399 = vperm.slane %v398, 0
        %v400 = vadd.f32 %v394, %v399
        %v401 = vadd.f32 %v395, %v399
        %v402 = vadd.f32 %v396, %v399
        %v403 = vadd.f32 %v397, %v399
        %v404 = vpack.c.bf16 %v400, %v400
        %v405 = vpack.c.bf16 %v401, %v401
        %v406 = vpack.c.bf16 %v402, %v402
        %v407 = vpack.c.bf16 %v403, %v403
        %408 = vst [vmem:[%s260] sm:$0xf] %v404
        %409 = vst [vmem:[%s260 + $0x4] sm:$0xf] %v405
        %410 = vst [vmem:[%s260 + $0x8] sm:$0xf] %v406
        %411 = vst [vmem:[%s260 + $0xc] sm:$0xf] %v407
      $region40: #{forward.10} parent=31 // pred_fallthru
        _
      %s412 = smul.u32 4, %s19
      %p413 = scmp.lt.s32.totalorder %s412, 7
      %s414 = scalar_select %p413, %s412, 7
      %p415 = scmp.lt.s32.totalorder %s20, 0
      %s416 = scalar_select %p415, %s20, 0
      %s417 = sadd.s32 %s416, %s414
      %s418 = smul.addr %s417, 4
      %s419 = scalar_lea.vmem %s3, %s418
      // Predicated region
      $region41: #{forward.10} parent=31 // pred_check
        %p420 = pneg %p135
      $region42: #{forward.10} parent=31 // pred_check_branch
        %422 = sbr.rel (%p420) target = $region44
      $region43: #{forward.10} parent=31 // pred_region
        %s423 = smul.u32 4, %s19
      $region44: #{forward.10} parent=31 // pred_fallthru
        _
    $region32: #{forward.10} parent=5 // pred_fallthru
      _
    %p424 = scmp.le.s32.totalorder 2, %s9
    // Predicated region
    $region45: #{forward.10} parent=5 // pred_check
      %p425 = pneg %p424
    $region46: #{forward.10} parent=5 // pred_check_branch
      %427 = sbr.rel (%p425) target = $region48
    $region47: #{forward.10} parent=5 // pred_region
      %s428 = ssub.s32 %s9, 2
      // Predicated region
      $region49: #{forward.10} parent=47 // pred_check
        %p429 = pneg %p141
      $region50: #{forward.10} parent=47 // pred_check_branch
        %431 = sbr.rel (%p429) target = $region52
      $region51: #{forward.10} parent=47 // pred_region
        %s432 = smul.u32 4, %s22
        %p433 = scmp.lt.s32.totalorder %s432, 7
        %s434 = scalar_select %p433, %s432, 7
        %p435 = scmp.lt.s32.totalorder %s23, 0
        %s436 = scalar_select %p435, %s23, 0
        %s437 = sadd.s32 %s436, %s434
        %s438 = smul.addr %s437, 4
        %s439 = scalar_lea.vmem %s3, %s438
      $region52: #{forward.10} parent=47 // pred_fallthru
        _
    $region48: #{forward.10} parent=5 // pred_fallthru
      _
  $region6: #{forward.10} parent=0 // loop_footer
    %s13 = sadd.s32 1, %s9
  $region7: #{forward.10} parent=0 // loop_footer_branch
    %8 = sbr.rel target = $region3
  $region8: #{forward.10} parent=0 // loop_exit
    _

// kernel: forward.11
$region0: #{forward.11}
  #allocation0 [shape = 'u32[]', space=smem, size = 0x4, offset = 0x4, fixed_abs, tag = 'smem constant byte address 0x4 - core index']
  #allocation1 [shape = 'u32[72,128]{1,0:T(1,128)}', space=vmem, size = 0x9000, scoped, tag = 'internal scratch']
  #allocation2 [shape = 'f32[32,128]{1,0:T(8,128)}', space=vmem, size = 0x4000, scoped, tag = 'scratch operand']
  %s0 = inlined_call_operand.vmem [shape: bf16[64,128], index: 0, kind: input, shape index: {}]
  %s1 = inlined_call_operand.vmem [shape: bf16[128,128], index: 1, kind: input, shape index: {}]
  %s2 = inlined_call_operand.vmem [shape: f32[2,128], index: 2, kind: input, shape index: {}]
  %s3 = inlined_call_operand.vmem [shape: bf16[64,128], index: 3, kind: output, shape index: {}]
  %s4 = sld [smem:[#allocation0]]
  $region53: #{forward.11} parent=0
    _
  %s6 = ssub.s32 1, %s4
  %s7 = scalar_select 0, %s6, %s4
  loop: start=0, step=1, limit=4
  $region2: #{forward.11} parent=0 // loop_pre_header
    _
  $region3: #{forward.11} parent=0 // loop_header
    %s9 = sphi 0, %s13
    %p10 = scmp.ge.s32.totalorder %s9, 4
    %s16 = sphi 0, %s35
    %s17 = sphi 0, %s31
    %s18 = sphi 0, %s27
    %s19 = sphi 0, %s16
    %s20 = sphi 0, %s17
    %s21 = sphi 0, %s18
    %s22 = sphi 0, %s19
    %s23 = sphi 0, %s20
    %s24 = sphi 0, %s21
    %s40 = sphi 0, %s42
    %s43 = sphi 0, %s40
    %s44 = sphi 0, %s43
    %s60 = sphi 0, %s44
    %s68 = sphi 0, %s70
    %s71 = sphi 0, %s68
    %s72 = sphi 0, %s71
    %s88 = sphi 0, %s72
    %s94 = sphi 0, %s96
    %s97 = sphi 0, %s94
    %s98 = sphi 0, %s97
    %s114 = sphi 0, %s98
    %s122 = sphi 0, %s124
    %s125 = sphi 0, %s122
    %s126 = sphi 0, %s125
    %s142 = sphi 0, %s126
  $region4: #{forward.11} parent=0 // loop_header_branch
    %12 = sbr.rel (%p10) target = $region8
  $region5: #{forward.11} parent=0 // loop_body
    %s14 = ssub.s32 %s9, 1
    %s15 = ssub.s32 %s9, 2
    %s25 = sadd.s32 1, %s18
    %p26 = scmp.ge.s32.totalorder %s25, 1
    %s27 = scalar_select %p26, 0, %s25
    %s28 = sadd.s32 1, %s17
    %s29 = scalar_select %p26, %s28, %s17
    %p30 = scmp.ge.s32.totalorder %s29, 1
    %s31 = scalar_select %p30, 0, %s29
    %s32 = sadd.s32 1, %s16
    %s33 = scalar_select %p30, %s32, %s16
    %p34 = scmp.ge.s32.totalorder %s33, 2
    %s35 = scalar_select %p34, 0, %s33
    %s36 = ssub.s32 %s16, %s35
    %s37 = ssub.s32 %s18, %s27
    %s38 = sor.u32 %s36, %s37
    %p39 = scmp.eq.s32.totalorder %s38, 0
    %s41 = sadd.s32 %s40, 1
    %s42 = scalar_select %p39, %s40, %s41
    %p45 = pneg %p39
    %p46 = scmp.eq.s32.totalorder %s9, 1
    %p47 = por %p45, %p46
    %p48 = scmp.ne.s32.totalorder %s40, %s43
    %p49 = scmp.eq.s32.totalorder %s9, 0
    %p50 = por %p48, %p49
    %p51 = scmp.ne.s32.totalorder %s40, %s43
    %p52 = scmp.eq.s32.totalorder %s14, 1
    %p53 = por %p51, %p52
    %p54 = scmp.ne.s32.totalorder %s43, %s44
    %p55 = scmp.eq.s32.totalorder %s14, 0
    %p56 = por %p54, %p55
    %p57 = scmp.ne.s32.totalorder %s43, %s44
    %p58 = scmp.eq.s32.totalorder %s15, 1
    %p59 = por %p57, %p58
    %p61 = scmp.ne.s32.totalorder %s44, %s60
    %p62 = scmp.eq.s32.totalorder %s15, 0
    %p63 = por %p61, %p62
    %s64 = ssub.s32 %s18, %s27
    %s65 = ssub.s32 %s17, %s31
    %s66 = sor.u32 %s64, %s65
    %p67 = scmp.eq.s32.totalorder %s66, 0
    %s69 = sadd.s32 %s68, 1
    %s70 = scalar_select %p67, %s68, %s69
    %p73 = pneg %p67
    %p74 = scmp.eq.s32.totalorder %s9, 1
    %p75 = por %p73, %p74
    %p76 = scmp.ne.s32.totalorder %s68, %s71
    %p77 = scmp.eq.s32.totalorder %s9, 0
    %p78 = por %p76, %p77
    %p79 = scmp.ne.s32.totalorder %s68, %s71
    %p80 = scmp.eq.s32.totalorder %s14, 1
    %p81 = por %p79, %p80
    %p82 = scmp.ne.s32.totalorder %s71, %s72
    %p83 = scmp.eq.s32.totalorder %s14, 0
    %p84 = por %p82, %p83
    %p85 = scmp.ne.s32.totalorder %s71, %s72
    %p86 = scmp.eq.s32.totalorder %s15, 1
    %p87 = por %p85, %p86
    %p89 = scmp.ne.s32.totalorder %s72, %s88
    %p90 = scmp.eq.s32.totalorder %s15, 0
    %p91 = por %p89, %p90
    %s92 = ssub.s32 %s17, %s31
    %p93 = scmp.eq.s32.totalorder %s92, 0
    %s95 = sadd.s32 %s94, 1
    %s96 = scalar_select %p93, %s94, %s95
    %p99 = pneg %p93
    %p100 = scmp.eq.s32.totalorder %s9, 1
    %p101 = por %p99, %p100
    %p102 = scmp.ne.s32.totalorder %s94, %s97
    %p103 = scmp.eq.s32.totalorder %s9, 0
    %p104 = por %p102, %p103
    %p105 = scmp.ne.s32.totalorder %s94, %s97
    %p106 = scmp.eq.s32.totalorder %s14, 1
    %p107 = por %p105, %p106
    %p108 = scmp.ne.s32.totalorder %s97, %s98
    %p109 = scmp.eq.s32.totalorder %s14, 0
    %p110 = por %p108, %p109
    %p111 = scmp.ne.s32.totalorder %s97, %s98
    %p112 = scmp.eq.s32.totalorder %s15, 1
    %p113 = por %p111, %p112
    %p115 = scmp.ne.s32.totalorder %s98, %s114
    %p116 = scmp.eq.s32.totalorder %s15, 0
    %p117 = por %p115, %p116
    %s118 = ssub.s32 %s16, %s35
    %s119 = ssub.s32 %s17, %s31
    %s120 = sor.u32 %s118, %s119
    %p121 = scmp.eq.s32.totalorder %s120, 0
    %s123 = sadd.s32 %s122, 1
    %s124 = scalar_select %p121, %s122, %s123
    %p127 = pneg %p121
    %p128 = scmp.eq.s32.totalorder %s9, 1
    %p129 = por %p127, %p128
    %p130 = scmp.ne.s32.totalorder %s122, %s125
    %p131 = scmp.eq.s32.totalorder %s9, 0
    %p132 = por %p130, %p131
    %p133 = scmp.ne.s32.totalorder %s122, %s125
    %p134 = scmp.eq.s32.totalorder %s14, 1
    %p135 = por %p133, %p134
    %p136 = scmp.ne.s32.totalorder %s125, %s126
    %p137 = scmp.eq.s32.totalorder %s14, 0
    %p138 = por %p136, %p137
    %p139 = scmp.ne.s32.totalorder %s125, %s126
    %p140 = scmp.eq.s32.totalorder %s15, 1
    %p141 = por %p139, %p140
    %p143 = scmp.ne.s32.totalorder %s126, %s142
    %p144 = scmp.eq.s32.totalorder %s15, 0
    %p145 = por %p143, %p144
    %p146 = scmp.le.s32.totalorder 1, %s9
    %p147 = scmp.lt.s32.totalorder %s9, 3
    %p148 = pnand %p146, %p147
    %p149 = pneg %p148
    // Predicated region
    $region9: #{forward.11} parent=5 // pred_check
      _
    $region10: #{forward.11} parent=5 // pred_check_branch
      %151 = sbr.rel (%p148) target = $region12
    $region11: #{forward.11} parent=5 // pred_region
      %s152 = ssub.s32 %s9, 1
      // Predicated region
      $region13: #{forward.11} parent=11 // pred_check
        %p153 = pneg %p84
      $region14: #{forward.11} parent=11 // pred_check_branch
        %155 = sbr.rel (%p153) target = $region16
      $region15: #{forward.11} parent=11 // pred_region
        %s156 = smul.u32 16, %s21
        %p157 = scmp.lt.s32.totalorder %s156, 15
        %s158 = scalar_select %p157, %s156, 15
        %p159 = scmp.lt.s32.totalorder %s20, 0
        %s160 = scalar_select %p159, %s20, 0
        %s161 = sadd.s32 %s160, %s158
        %s162 = smul.addr %s161, 4
        %s163 = scalar_lea.vmem %s1, %s162
        %s164 = smul.u32 16, %s21
      $region16: #{forward.11} parent=11 // pred_fallthru
        _
      // Predicated region
      $region17: #{forward.11} parent=11 // pred_check
        %p165 = pneg %p110
      $region18: #{forward.11} parent=11 // pred_check_branch
        %167 = sbr.rel (%p165) target = $region20
      $region19: #{forward.11} parent=11 // pred_region
        %p168 = scmp.lt.s32.totalorder %s20, 0
        %s169 = scalar_select %p168, %s20, 0
        %s170 = smul.addr %s169, 2
        %s171 = scalar_lea.vmem %s2, %s170
      $region20: #{forward.11} parent=11 // pred_fallthru
        _
    $region12: #{forward.11} parent=5 // pred_fallthru
      _
    %p172 = scmp.lt.s32.totalorder %s9, 2
    // Predicated region
    $region21: #{forward.11} parent=5 // pred_check
      %p173 = pneg %p172
    $region22: #{forward.11} parent=5 // pred_check_branch
      %175 = sbr.rel (%p173) target = $region24
    $region23: #{forward.11} parent=5 // pred_region
      // Predicated region
      $region25: #{forward.11} parent=23 // pred_check
        %p176 = pneg %p50
      $region26: #{forward.11} parent=23 // pred_check_branch
        %178 = sbr.rel (%p176) target = $region28
      $region27: #{forward.11} parent=23 // pred_region
        %s179 = smul.u32 4, %s16
        %p180 = scmp.lt.s32.totalorder %s179, 7
        %s181 = scalar_select %p180, %s179, 7
        %p182 = scmp.lt.s32.totalorder %s18, 0
        %s183 = scalar_select %p182, %s18, 0
        %s184 = sadd.s32 %s183, %s181
        %s185 = smul.addr %s184, 4
        %s186 = scalar_lea.vmem %s0, %s185
        %s187 = smul.u32 4, %s16
      $region28: #{forward.11} parent=23 // pred_fallthru
        _
    $region24: #{forward.11} parent=5 // pred_fallthru
      _
    %p188 = scmp.le.s32.totalorder 1, %s9
    %p189 = scmp.lt.s32.totalorder %s9, 3
    %p190 = pnand %p188, %p189
    %p191 = pneg %p190
    // Predicated region
    $region29: #{forward.11} parent=5 // pred_check
      _
    $region30: #{forward.11} parent=5 // pred_check_branch
      %193 = sbr.rel (%p190) target = $region32
    $region31: #{forward.11} parent=5 // pred_region
      %s194 = ssub.s32 %s9, 1
      %s195 = smul.u32 4, %s19
      %p196 = scmp.lt.s32.totalorder %s195, 7
      %s197 = scalar_select %p196, %s195, 7
      %p198 = scmp.lt.s32.totalorder %s21, 0
      %s199 = scalar_select %p198, %s21, 0
      %s200 = sadd.s32 %s199, %s197
      %s201 = smul.addr %s200, 4
      %s202 = scalar_lea.vmem %s0, %s201
      %p203 = pneg %p56
      %p204 = pneg %p53
      %s205 = smul.u32 16, %s21
      %p206 = scmp.lt.s32.totalorder %s205, 15
      %s207 = scalar_select %p206, %s205, 15
      %p208 = scmp.lt.s32.totalorder %s20, 0
      %s209 = scalar_select %p208, %s20, 0
      %s210 = sadd.s32 %s209, %s207
      %s211 = smul.addr %s210, 4
      %s212 = scalar_lea.vmem %s1, %s211
      %p213 = pneg %p84
      %p214 = pneg %p81
      %p215 = scmp.lt.s32.totalorder %s20, 0
      %s216 = scalar_select %p215, %s20, 0
      %s217 = smul.addr %s216, 2
      %s218 = scalar_lea.vmem %s2, %s217
      %p219 = pneg %p110
      %p220 = pneg %p107
      %p221 = pneg %p138
      %p222 = pneg %p135
      %s223 = smul.u32 4, %s19
      %p224 = scmp.lt.s32.totalorder %s223, 7
      %s225 = scalar_select %p224, %s223, 7
      %p226 = scmp.lt.s32.totalorder %s20, 0
      %s227 = scalar_select %p226, %s20, 0
      %s228 = sadd.s32 %s227, %s225
      %s229 = smul.addr %s228, 4
      %s230 = scalar_lea.vmem %s3, %s229
      %s231 = smul.u32 4, %s19
      %p232 = scmp.lt.s32.totalorder %s231, 7
      %s233 = scalar_select %p232, %s231, 7
      %p234 = scmp.lt.s32.totalorder %s21, 0
      %s235 = scalar_select %p234, %s21, 0
      %s236 = sadd.s32 %s235, %s233
      %s237 = smul.addr %s236, 4
      %s238 = scalar_lea.vmem %s0, %s237
      %s239 = smul.u32 4, %s19
      %s240 = smul.u32 16, %s21
      %p241 = scmp.lt.s32.totalorder %s240, 15
      %s242 = scalar_select %p241, %s240, 15
      %p243 = scmp.lt.s32.totalorder %s20, 0
      %s244 = scalar_select %p243, %s20, 0
      %s245 = sadd.s32 %s244, %s242
      %s246 = smul.addr %s245, 4
      %s247 = scalar_lea.vmem %s1, %s246
      %s248 = smul.u32 16, %s21
      %p249 = scmp.lt.s32.totalorder %s20, 0
      %s250 = scalar_select %p249, %s20, 0
      %s251 = smul.addr %s250, 2
      %s252 = scalar_lea.vmem %s2, %s251
      %s253 = smul.u32 4, %s19
      %p254 = scmp.lt.s32.totalorder %s253, 7
      %s255 = scalar_select %p254, %s253, 7
      %p256 = scmp.lt.s32.totalorder %s20, 0
      %s257 = scalar_select %p256, %s20, 0
      %s258 = sadd.s32 %s257, %s255
      %s259 = smul.addr %s258, 4
      %s260 = scalar_lea.vmem %s3, %s259
      %s261 = smul.u32 4, %s19
      %p262 = scmp.eq.s32.totalorder %s21, 0
      // Predicated region
      $region33: #{forward.11} parent=31 // pred_check
        %p263 = pneg %p262
      $region34: #{forward.11} parent=31 // pred_check_branch
        %265 = sbr.rel (%p263) target = $region36
      $region35: #{forward.11} parent=31 // pred_region
        %266 = vst [vmem:[#allocation2] sm:$0xff] 0.0
        %267 = vst [vmem:[#allocation2 + $0x8] sm:$0xff] 0.0
        %268 = vst [vmem:[#allocation2 + $0x10] sm:$0xff] 0.0
        %269 = vst [vmem:[#allocation2 + $0x18] sm:$0xff] 0.0
      $region36: #{forward.11} parent=31 // pred_fallthru
        _
      %v270 = vld [vmem:[#allocation2] sm:$0xff]
      %v271 = vld [vmem:[#allocation2 + $0x8] sm:$0xff]
      %v272 = vld [vmem:[#allocation2 + $0x10] sm:$0xff]
      %v273 = vld [vmem:[#allocation2 + $0x18] sm:$0xff]
      %v274 = vld [vmem:[%s238] sm:$0xf]
      %v275 = vld [vmem:[%s238 + $0x4] sm:$0xf]
      %v276 = vld [vmem:[%s238 + $0x8] sm:$0xf]
      %v277 = vld [vmem:[%s238 + $0xc] sm:$0xf]
      %v278 = vld [vmem:[%s247] sm:$0xf]
      %v279 = vld [vmem:[%s247 + $0x4] sm:$0xf]
      %v280 = vld [vmem:[%s247 + $0x8] sm:$0xf]
      %v281 = vld [vmem:[%s247 + $0xc] sm:$0xf]
      %v282 = vld [vmem:[%s247 + $0x10] sm:$0xf]
      %v283 = vld [vmem:[%s247 + $0x14] sm:$0xf]
      %v284 = vld [vmem:[%s247 + $0x18] sm:$0xf]
      %v285 = vld [vmem:[%s247 + $0x1c] sm:$0xf]
      %v286 = vld [vmem:[%s247 + $0x20] sm:$0xf]
      %v287 = vld [vmem:[%s247 + $0x24] sm:$0xf]
      %v288 = vld [vmem:[%s247 + $0x28] sm:$0xf]
      %v289 = vld [vmem:[%s247 + $0x2c] sm:$0xf]
      %v290 = vld [vmem:[%s247 + $0x30] sm:$0xf]
      %v291 = vld [vmem:[%s247 + $0x34] sm:$0xf]
      %v292 = vld [vmem:[%s247 + $0x38] sm:$0xf]
      %v293 = vld [vmem:[%s247 + $0x3c] sm:$0xf]
      %v298 = vunpack.c.l.b16 %v274
      %v299 = vunpack.c.l.b16 %v275
      %v300 = vunpack.c.l.b16 %v276
      %v301 = vunpack.c.l.b16 %v277
      %v302 = vpack.c.b16 %v299, %v298
      %v303 = vpack.c.b16 %v301, %v300
      %v322 = vunpack.c.l.b16 %v278
      %v323 = vunpack.c.l.b16 %v279
      %v324 = vunpack.c.l.b16 %v280
      %v325 = vunpack.c.l.b16 %v281
      %v326 = vunpack.c.l.b16 %v282
      %v327 = vunpack.c.l.b16 %v283
      %v328 = vunpack.c.l.b16 %v284
      %v329 = vunpack.c.l.b16 %v285
      %v330 = vunpack.c.l.b16 %v286
      %v331 = vunpack.c.l.b16 %v287
      %v332 = vunpack.c.l.b16 %v288
      %v333 = vunpack.c.l.b16 %v289
      %v334 = vunpack.c.l.b16 %v290
      %v335 = vunpack.c.l.b16 %v291
      %v336 = vunpack.c.l.b16 %v292
      %v337 = vunpack.c.l.b16 %v293
      %v338 = vpack.c.b16 %v323, %v322
      %v339 = vpack.c.b16 %v325, %v324
      %v340 = vpack.c.b16 %v327, %v326
      %v341 = vpack.c.b16 %v329, %v328
      %v342 = vpack.c.b16 %v331, %v330
      %v343 = vpack.c.b16 %v333, %v332
      %v344 = vpack.c.b16 %v335, %v334
      %v345 = vpack.c.b16 %v337, %v336
      %354 = vmatpush.bf16.msra.mxu0 %v345
      %355 = vmatpush.bf16.msra.mxu0 %v344
      %356 = vmatpush.bf16.msra.mxu0 %v343
      %357 = vmatpush.bf16.msra.mxu0 %v342
      %358 = vmatpush.bf16.msra.mxu0 %v341
      %359 = vmatpush.bf16.msra.mxu0 %v340
      %360 = vmatpush.bf16.msra.mxu0 %v339
      %361 = vmatpush.bf16.msra.mxu0 %v338
      %362 = vmatmul.bf16.gmra.mxu0 %v302
      %v363 = vpop.f32.mrf.mxu0
      %v364 = vadd.f32 0.0, %v363
      %v365 = vpop.f32.mrf.mxu0
      %v366 = vadd.f32 0.0, %v365
      %367 = vmatmul.bf16.gmra.mxu0 %v303
      %v368 = vpop.f32.mrf.mxu0
      %v369 = vadd.f32 0.0, %v368
      %v370 = vpop.f32.mrf.mxu0
      %v371 = vadd.f32 0.0, %v370
      %372 = vdwg.mxu0
      %v373 = vadd.f32 %v270, %v364
      %v374 = vadd.f32 %v271, %v366
      %v375 = vadd.f32 %v272, %v369
      %v376 = vadd.f32 %v273, %v371
      %377 = vst [vmem:[#allocation2] sm:$0xff] %v373
      %378 = vst [vmem:[#allocation2 + $0x8] sm:$0xff] %v374
      %379 = vst [vmem:[#allocation2 + $0x10] sm:$0xff] %v375
      %380 = vst [vmem:[#allocation2 + $0x18] sm:$0xff] %v376
      // Predicated region
      $region37: #{forward.11} parent=31 // pred_check
        %p381 = pneg %p262
      $region38: #{forward.11} parent=31 // pred_check_branch
        %383 = sbr.rel (%p381) target = $region40
      $region39: #{forward.11} parent=31 // pred_region
        %v384 = vld [vmem:[#allocation2] sm:$0xff]
        %v385 = vld [vmem:[#allocation2 + $0x8] sm:$0xff]
        %v386 = vld [vmem:[#allocation2 + $0x10] sm:$0xff]
        %v387 = vld [vmem:[#allocation2 + $0x18] sm:$0xff]
        %v388 = vld [vmem:[%s252] sm:$0x1]
        %v389 = vperm.slane %v388, 0
        %v390 = vmul.f32 %v384, %v389
        %v391 = vmul.f32 %v385, %v389
        %v392 = vmul.f32 %v386, %v389
        %v393 = vmul.f32 %v387, %v389
        %v394 = vld [vmem:[%s252 + $0x1] sm:$0x1]
        %v395 = vperm.slane %v394, 0
        %v396 = vadd.f32 %v390, %v395
        %v397 = vadd.f32 %v391, %v395
        %v398 = vadd.f32 %v392, %v395
        %v399 = vadd.f32 %v393, %v395
        %v400 = vmax.f32 %v396, 0.0
        %v401 = vmax.f32 %v397, 0.0
        %v402 = vmax.f32 %v398, 0.0
        %v403 = vmax.f32 %v399, 0.0
        %v404 = vpack.c.bf16 %v400, %v400
        %v405 = vpack.c.bf16 %v401, %v401
        %v406 = vpack.c.bf16 %v402, %v402
        %v407 = vpack.c.bf16 %v403, %v403
        %408 = vst [vmem:[%s260] sm:$0xf] %v404
        %409 = vst [vmem:[%s260 + $0x4] sm:$0xf] %v405
        %410 = vst [vmem:[%s260 + $0x8] sm:$0xf] %v406
        %411 = vst [vmem:[%s260 + $0xc] sm:$0xf] %v407
      $region40: #{forward.11} parent=31 // pred_fallthru
        _
      %s412 = smul.u32 4, %s19
      %p413 = scmp.lt.s32.totalorder %s412, 7
      %s414 = scalar_select %p413, %s412, 7
      %p415 = scmp.lt.s32.totalorder %s20, 0
      %s416 = scalar_select %p415, %s20, 0
      %s417 = sadd.s32 %s416, %s414
      %s418 = smul.addr %s417, 4
      %s419 = scalar_lea.vmem %s3, %s418
      // Predicated region
      $region41: #{forward.11} parent=31 // pred_check
        %p420 = pneg %p135
      $region42: #{forward.11} parent=31 // pred_check_branch
        %422 = sbr.rel (%p420) target = $region44
      $region43: #{forward.11} parent=31 // pred_region
        %s423 = smul.u32 4, %s19
      $region44: #{forward.11} parent=31 // pred_fallthru
        _
    $region32: #{forward.11} parent=5 // pred_fallthru
      _
    %p424 = scmp.le.s32.totalorder 2, %s9
    // Predicated region
    $region45: #{forward.11} parent=5 // pred_check
      %p425 = pneg %p424
    $region46: #{forward.11} parent=5 // pred_check_branch
      %427 = sbr.rel (%p425) target = $region48
    $region47: #{forward.11} parent=5 // pred_region
      %s428 = ssub.s32 %s9, 2
      // Predicated region
      $region49: #{forward.11} parent=47 // pred_check
        %p429 = pneg %p141
      $region50: #{forward.11} parent=47 // pred_check_branch
        %431 = sbr.rel (%p429) target = $region52
      $region51: #{forward.11} parent=47 // pred_region
        %s432 = smul.u32 4, %s22
        %p433 = scmp.lt.s32.totalorder %s432, 7
        %s434 = scalar_select %p433, %s432, 7
        %p435 = scmp.lt.s32.totalorder %s23, 0
        %s436 = scalar_select %p435, %s23, 0
        %s437 = sadd.s32 %s436, %s434
        %s438 = smul.addr %s437, 4
        %s439 = scalar_lea.vmem %s3, %s438
      $region52: #{forward.11} parent=47 // pred_fallthru
        _
    $region48: #{forward.11} parent=5 // pred_fallthru
      _
  $region6: #{forward.11} parent=0 // loop_footer
    %s13 = sadd.s32 1, %s9
  $region7: #{forward.11} parent=0 // loop_footer_branch
    %8 = sbr.rel target = $region3
  $region8: #{forward.11} parent=0 // loop_exit
    _

// kernel: forward.12
$region0: #{forward.12}
  #allocation0 [shape = 'u32[]', space=smem, size = 0x4, offset = 0x4, fixed_abs, tag = 'smem constant byte address 0x4 - core index']
  #allocation1 [shape = 'u32[72,128]{1,0:T(1,128)}', space=vmem, size = 0x9000, scoped, tag = 'internal scratch']
  #allocation2 [shape = 'f32[32,128]{1,0:T(8,128)}', space=vmem, size = 0x4000, scoped, tag = 'scratch operand']
  %s0 = inlined_call_operand.vmem [shape: bf16[64,128], index: 0, kind: input, shape index: {}]
  %s1 = inlined_call_operand.vmem [shape: bf16[128,128], index: 1, kind: input, shape index: {}]
  %s2 = inlined_call_operand.vmem [shape: f32[2,128], index: 2, kind: input, shape index: {}]
  %s3 = inlined_call_operand.vmem [shape: bf16[64,128], index: 3, kind: input, shape index: {}]
  %s4 = inlined_call_operand.vmem [shape: bf16[64,128], index: 4, kind: output, shape index: {}]
  %s5 = sld [smem:[#allocation0]]
  $region57: #{forward.12} parent=0
    _
  %s7 = ssub.s32 1, %s5
  %s8 = scalar_select 0, %s7, %s5
  loop: start=0, step=1, limit=4
  $region2: #{forward.12} parent=0 // loop_pre_header
    _
  $region3: #{forward.12} parent=0 // loop_header
    %s10 = sphi 0, %s14
    %p11 = scmp.ge.s32.totalorder %s10, 4
    %s17 = sphi 0, %s36
    %s18 = sphi 0, %s32
    %s19 = sphi 0, %s28
    %s20 = sphi 0, %s17
    %s21 = sphi 0, %s18
    %s22 = sphi 0, %s19
    %s23 = sphi 0, %s20
    %s24 = sphi 0, %s21
    %s25 = sphi 0, %s22
    %s41 = sphi 0, %s43
    %s44 = sphi 0, %s41
    %s45 = sphi 0, %s44
    %s61 = sphi 0, %s45
    %s69 = sphi 0, %s71
    %s72 = sphi 0, %s69
    %s73 = sphi 0, %s72
    %s89 = sphi 0, %s73
    %s95 = sphi 0, %s97
    %s98 = sphi 0, %s95
    %s99 = sphi 0, %s98
    %s115 = sphi 0, %s99
    %s123 = sphi 0, %s125
    %s126 = sphi 0, %s123
    %s127 = sphi 0, %s126
    %s143 = sphi 0, %s127
    %s151 = sphi 0, %s153
    %s154 = sphi 0, %s151
    %s155 = sphi 0, %s154
    %s171 = sphi 0, %s155
  $region4: #{forward.12} parent=0 // loop_header_branch
    %13 = sbr.rel (%p11) target = $region8
  $region5: #{forward.12} parent=0 // loop_body
    %s15 = ssub.s32 %s10, 1
    %s16 = ssub.s32 %s10, 2
    %s26 = sadd.s32 1, %s19
    %p27 = scmp.ge.s32.totalorder %s26, 1
    %s28 = scalar_select %p27, 0, %s26
    %s29 = sadd.s32 1, %s18
    %s30 = scalar_select %p27, %s29, %s18
    %p31 = scmp.ge.s32.totalorder %s30, 1
    %s32 = scalar_select %p31, 0, %s30
    %s33 = sadd.s32 1, %s17
    %s34 = scalar_select %p31, %s33, %s17
    %p35 = scmp.ge.s32.totalorder %s34, 2
    %s36 = scalar_select %p35, 0, %s34
    %s37 = ssub.s32 %s17, %s36
    %s38 = ssub.s32 %s19, %s28
    %s39 = sor.u32 %s37, %s38
    %p40 = scmp.eq.s32.totalorder %s39, 0
    %s42 = sadd.s32 %s41, 1
    %s43 = scalar_select %p40, %s41, %s42
    %p46 = pneg %p40
    %p47 = scmp.eq.s32.totalorder %s10, 1
    %p48 = por %p46, %p47
    %p49 = scmp.ne.s32.totalorder %s41, %s44
    %p50 = scmp.eq.s32.totalorder %s10, 0
    %p51 = por %p49, %p50
    %p52 = scmp.ne.s32.totalorder %s41, %s44
    %p53 = scmp.eq.s32.totalorder %s15, 1
    %p54 = por %p52, %p53
    %p55 = scmp.ne.s32.totalorder %s44, %s45
    %p56 = scmp.eq.s32.totalorder %s15, 0
    %p57 = por %p55, %p56
    %p58 = scmp.ne.s32.totalorder %s44, %s45
    %p59 = scmp.eq.s32.totalorder %s16, 1
    %p60 = por %p58, %p59
    %p62 = scmp.ne.s32.totalorder %s45, %s61
    %p63 = scmp.eq.s32.totalorder %s16, 0
    %p64 = por %p62, %p63
    %s65 = ssub.s32 %s19, %s28
    %s66 = ssub.s32 %s18, %s32
    %s67 = sor.u32 %s65, %s66
    %p68 = scmp.eq.s32.totalorder %s67, 0
    %s70 = sadd.s32 %s69, 1
    %s71 = scalar_select %p68, %s69, %s70
    %p74 = pneg %p68
    %p75 = scmp.eq.s32.totalorder %s10, 1
    %p76 = por %p74, %p75
    %p77 = scmp.ne.s32.totalorder %s69, %s72
    %p78 = scmp.eq.s32.totalorder %s10, 0
    %p79 = por %p77, %p78
    %p80 = scmp.ne.s32.totalorder %s69, %s72
    %p81 = scmp.eq.s32.totalorder %s15, 1
    %p82 = por %p80, %p81
    %p83 = scmp.ne.s32.totalorder %s72, %s73
    %p84 = scmp.eq.s32.totalorder %s15, 0
    %p85 = por %p83, %p84
    %p86 = scmp.ne.s32.totalorder %s72, %s73
    %p87 = scmp.eq.s32.totalorder %s16, 1
    %p88 = por %p86, %p87
    %p90 = scmp.ne.s32.totalorder %s73, %s89
    %p91 = scmp.eq.s32.totalorder %s16, 0
    %p92 = por %p90, %p91
    %s93 = ssub.s32 %s18, %s32
    %p94 = scmp.eq.s32.totalorder %s93, 0
    %s96 = sadd.s32 %s95, 1
    %s97 = scalar_select %p94, %s95, %s96
    %p100 = pneg %p94
    %p101 = scmp.eq.s32.totalorder %s10, 1
    %p102 = por %p100, %p101
    %p103 = scmp.ne.s32.totalorder %s95, %s98
    %p104 = scmp.eq.s32.totalorder %s10, 0
    %p105 = por %p103, %p104
    %p106 = scmp.ne.s32.totalorder %s95, %s98
    %p107 = scmp.eq.s32.totalorder %s15, 1
    %p108 = por %p106, %p107
    %p109 = scmp.ne.s32.totalorder %s98, %s99
    %p110 = scmp.eq.s32.totalorder %s15, 0
    %p111 = por %p109, %p110
    %p112 = scmp.ne.s32.totalorder %s98, %s99
    %p113 = scmp.eq.s32.totalorder %s16, 1
    %p114 = por %p112, %p113
    %p116 = scmp.ne.s32.totalorder %s99, %s115
    %p117 = scmp.eq.s32.totalorder %s16, 0
    %p118 = por %p116, %p117
    %s119 = ssub.s32 %s17, %s36
    %s120 = ssub.s32 %s18, %s32
    %s121 = sor.u32 %s119, %s120
    %p122 = scmp.eq.s32.totalorder %s121, 0
    %s124 = sadd.s32 %s123, 1
    %s125 = scalar_select %p122, %s123, %s124
    %p128 = pneg %p122
    %p129 = scmp.eq.s32.totalorder %s10, 1
    %p130 = por %p128, %p129
    %p131 = scmp.ne.s32.totalorder %s123, %s126
    %p132 = scmp.eq.s32.totalorder %s10, 0
    %p133 = por %p131, %p132
    %p134 = scmp.ne.s32.totalorder %s123, %s126
    %p135 = scmp.eq.s32.totalorder %s15, 1
    %p136 = por %p134, %p135
    %p137 = scmp.ne.s32.totalorder %s126, %s127
    %p138 = scmp.eq.s32.totalorder %s15, 0
    %p139 = por %p137, %p138
    %p140 = scmp.ne.s32.totalorder %s126, %s127
    %p141 = scmp.eq.s32.totalorder %s16, 1
    %p142 = por %p140, %p141
    %p144 = scmp.ne.s32.totalorder %s127, %s143
    %p145 = scmp.eq.s32.totalorder %s16, 0
    %p146 = por %p144, %p145
    %s147 = ssub.s32 %s17, %s36
    %s148 = ssub.s32 %s18, %s32
    %s149 = sor.u32 %s147, %s148
    %p150 = scmp.eq.s32.totalorder %s149, 0
    %s152 = sadd.s32 %s151, 1
    %s153 = scalar_select %p150, %s151, %s152
    %p156 = pneg %p150
    %p157 = scmp.eq.s32.totalorder %s10, 1
    %p158 = por %p156, %p157
    %p159 = scmp.ne.s32.totalorder %s151, %s154
    %p160 = scmp.eq.s32.totalorder %s10, 0
    %p161 = por %p159, %p160
    %p162 = scmp.ne.s32.totalorder %s151, %s154
    %p163 = scmp.eq.s32.totalorder %s15, 1
    %p164 = por %p162, %p163
    %p165 = scmp.ne.s32.totalorder %s154, %s155
    %p166 = scmp.eq.s32.totalorder %s15, 0
    %p167 = por %p165, %p166
    %p168 = scmp.ne.s32.totalorder %s154, %s155
    %p169 = scmp.eq.s32.totalorder %s16, 1
    %p170 = por %p168, %p169
    %p172 = scmp.ne.s32.totalorder %s155, %s171
    %p173 = scmp.eq.s32.totalorder %s16, 0
    %p174 = por %p172, %p173
    %p175 = scmp.le.s32.totalorder 1, %s10
    %p176 = scmp.lt.s32.totalorder %s10, 3
    %p177 = pnand %p175, %p176
    %p178 = pneg %p177
    // Predicated region
    $region9: #{forward.12} parent=5 // pred_check
      _
    $region10: #{forward.12} parent=5 // pred_check_branch
      %180 = sbr.rel (%p177) target = $region12
    $region11: #{forward.12} parent=5 // pred_region
      %s181 = ssub.s32 %s10, 1
      // Predicated region
      $region13: #{forward.12} parent=11 // pred_check
        %p182 = pneg %p85
      $region14: #{forward.12} parent=11 // pred_check_branch
        %184 = sbr.rel (%p182) target = $region16
      $region15: #{forward.12} parent=11 // pred_region
        %s185 = smul.u32 16, %s22
        %p186 = scmp.lt.s32.totalorder %s185, 15
        %s187 = scalar_select %p186, %s185, 15
        %p188 = scmp.lt.s32.totalorder %s21, 0
        %s189 = scalar_select %p188, %s21, 0
        %s190 = sadd.s32 %s189, %s187
        %s191 = smul.addr %s190, 4
        %s192 = scalar_lea.vmem %s1, %s191
        %s193 = smul.u32 16, %s22
      $region16: #{forward.12} parent=11 // pred_fallthru
        _
      // Predicated region
      $region17: #{forward.12} parent=11 // pred_check
        %p194 = pneg %p111
      $region18: #{forward.12} parent=11 // pred_check_branch
        %196 = sbr.rel (%p194) target = $region20
      $region19: #{forward.12} parent=11 // pred_region
        %p197 = scmp.lt.s32.totalorder %s21, 0
        %s198 = scalar_select %p197, %s21, 0
        %s199 = smul.addr %s198, 2
        %s200 = scalar_lea.vmem %s2, %s199
      $region20: #{forward.12} parent=11 // pred_fallthru
        _
    $region12: #{forward.12} parent=5 // pred_fallthru
      _
    %p201 = scmp.lt.s32.totalorder %s10, 2
    // Predicated region
    $region21: #{forward.12} parent=5 // pred_check
      %p202 = pneg %p201
    $region22: #{forward.12} parent=5 // pred_check_branch
      %204 = sbr.rel (%p202) target = $region24
    $region23: #{forward.12} parent=5 // pred_region
      // Predicated region
      $region25: #{forward.12} parent=23 // pred_check
        %p205 = pneg %p51
      $region26: #{forward.12} parent=23 // pred_check_branch
        %207 = sbr.rel (%p205) target = $region28
      $region27: #{forward.12} parent=23 // pred_region
        %s208 = smul.u32 4, %s17
        %p209 = scmp.lt.s32.totalorder %s208, 7
        %s210 = scalar_select %p209, %s208, 7
        %p211 = scmp.lt.s32.totalorder %s19, 0
        %s212 = scalar_select %p211, %s19, 0
        %s213 = sadd.s32 %s212, %s210
        %s214 = smul.addr %s213, 4
        %s215 = scalar_lea.vmem %s0, %s214
        %s216 = smul.u32 4, %s17
      $region28: #{forward.12} parent=23 // pred_fallthru
        _
      // Predicated region
      $region29: #{forward.12} parent=23 // pred_check
        %p217 = pneg %p133
      $region30: #{forward.12} parent=23 // pred_check_branch
        %219 = sbr.rel (%p217) target = $region32
      $region31: #{forward.12} parent=23 // pred_region
        %s220 = smul.u32 4, %s17
        %p221 = scmp.lt.s32.totalorder %s220, 7
        %s222 = scalar_select %p221, %s220, 7
        %p223 = scmp.lt.s32.totalorder %s18, 0
        %s224 = scalar_select %p223, %s18, 0
        %s225 = sadd.s32 %s224, %s222
        %s226 = smul.addr %s225, 4
        %s227 = scalar_lea.vmem %s3, %s226
        %s228 = smul.u32 4, %s17
      $region32: #{forward.12} parent=23 // pred_fallthru
        _
    $region24: #{forward.12} parent=5 // pred_fallthru
      _
    %p229 = scmp.le.s32.totalorder 1, %s10
    %p230 = scmp.lt.s32.totalorder %s10, 3
    %p231 = pnand %p229, %p230
    %p232 = pneg %p231
    // Predicated region
    $region33: #{forward.12} parent=5 // pred_check
      _
    $region34: #{forward.12} parent=5 // pred_check_branch
      %234 = sbr.rel (%p231) target = $region36
    $region35: #{forward.12} parent=5 // pred_region
      %s235 = ssub.s32 %s10, 1
      %s236 = smul.u32 4, %s20
      %p237 = scmp.lt.s32.totalorder %s236, 7
      %s238 = scalar_select %p237, %s236, 7
      %p239 = scmp.lt.s32.totalorder %s22, 0
      %s240 = scalar_select %p239, %s22, 0
      %s241 = sadd.s32 %s240, %s238
      %s242 = smul.addr %s241, 4
      %s243 = scalar_lea.vmem %s0, %s242
      %p244 = pneg %p57
      %p245 = pneg %p54
      %s246 = smul.u32 16, %s22
      %p247 = scmp.lt.s32.totalorder %s246, 15
      %s248 = scalar_select %p247, %s246, 15
      %p249 = scmp.lt.s32.totalorder %s21, 0
      %s250 = scalar_select %p249, %s21, 0
      %s251 = sadd.s32 %s250, %s248
      %s252 = smul.addr %s251, 4
      %s253 = scalar_lea.vmem %s1, %s252
      %p254 = pneg %p85
      %p255 = pneg %p82
      %p256 = scmp.lt.s32.totalorder %s21, 0
      %s257 = scalar_select %p256, %s21, 0
      %s258 = smul.addr %s257, 2
      %s259 = scalar_lea.vmem %s2, %s258
      %p260 = pneg %p111
      %p261 = pneg %p108
      %s262 = smul.u32 4, %s20
      %p263 = scmp.lt.s32.totalorder %s262, 7
      %s264 = scalar_select %p263, %s262, 7
      %p265 = scmp.lt.s32.totalorder %s21, 0
      %s266 = scalar_select %p265, %s21, 0
      %s267 = sadd.s32 %s266, %s264
      %s268 = smul.addr %s267, 4
      %s269 = scalar_lea.vmem %s3, %s268
      %p270 = pneg %p139
      %p271 = pneg %p136
      %p272 = pneg %p167
      %p273 = pneg %p164
      %s274 = smul.u32 4, %s20
      %p275 = scmp.lt.s32.totalorder %s274, 7
      %s276 = scalar_select %p275, %s274, 7
      %p277 = scmp.lt.s32.totalorder %s21, 0
      %s278 = scalar_select %p277, %s21, 0
      %s279 = sadd.s32 %s278, %s276
      %s280 = smul.addr %s279, 4
      %s281 = scalar_lea.vmem %s4, %s280
      %s282 = smul.u32 4, %s20
      %p283 = scmp.lt.s32.totalorder %s282, 7
      %s284 = scalar_select %p283, %s282, 7
      %p285 = scmp.lt.s32.totalorder %s22, 0
      %s286 = scalar_select %p285, %s22, 0
      %s287 = sadd.s32 %s286, %s284
      %s288 = smul.addr %s287, 4
      %s289 = scalar_lea.vmem %s0, %s288
      %s290 = smul.u32 4, %s20
      %s291 = smul.u32 16, %s22
      %p292 = scmp.lt.s32.totalorder %s291, 15
      %s293 = scalar_select %p292, %s291, 15
      %p294 = scmp.lt.s32.totalorder %s21, 0
      %s295 = scalar_select %p294, %s21, 0
      %s296 = sadd.s32 %s295, %s293
      %s297 = smul.addr %s296, 4
      %s298 = scalar_lea.vmem %s1, %s297
      %s299 = smul.u32 16, %s22
      %p300 = scmp.lt.s32.totalorder %s21, 0
      %s301 = scalar_select %p300, %s21, 0
      %s302 = smul.addr %s301, 2
      %s303 = scalar_lea.vmem %s2, %s302
      %s304 = smul.u32 4, %s20
      %p305 = scmp.lt.s32.totalorder %s304, 7
      %s306 = scalar_select %p305, %s304, 7
      %p307 = scmp.lt.s32.totalorder %s21, 0
      %s308 = scalar_select %p307, %s21, 0
      %s309 = sadd.s32 %s308, %s306
      %s310 = smul.addr %s309, 4
      %s311 = scalar_lea.vmem %s3, %s310
      %s312 = smul.u32 4, %s20
      %s313 = smul.u32 4, %s20
      %p314 = scmp.lt.s32.totalorder %s313, 7
      %s315 = scalar_select %p314, %s313, 7
      %p316 = scmp.lt.s32.totalorder %s21, 0
      %s317 = scalar_select %p316, %s21, 0
      %s318 = sadd.s32 %s317, %s315
      %s319 = smul.addr %s318, 4
      %s320 = scalar_lea.vmem %s4, %s319
      %s321 = smul.u32 4, %s20
      %p322 = scmp.eq.s32.totalorder %s22, 0
      // Predicated region
      $region37: #{forward.12} parent=35 // pred_check
        %p323 = pneg %p322
      $region38: #{forward.12} parent=35 // pred_check_branch
        %325 = sbr.rel (%p323) target = $region40
      $region39: #{forward.12} parent=35 // pred_region
        %326 = vst [vmem:[#allocation2] sm:$0xff] 0.0
        %327 = vst [vmem:[#allocation2 + $0x8] sm:$0xff] 0.0
        %328 = vst [vmem:[#allocation2 + $0x10] sm:$0xff] 0.0
        %329 = vst [vmem:[#allocation2 + $0x18] sm:$0xff] 0.0
      $region40: #{forward.12} parent=35 // pred_fallthru
        _
      %v330 = vld [vmem:[#allocation2] sm:$0xff]
      %v331 = vld [vmem:[#allocation2 + $0x8] sm:$0xff]
      %v332 = vld [vmem:[#allocation2 + $0x10] sm:$0xff]
      %v333 = vld [vmem:[#allocation2 + $0x18] sm:$0xff]
      %v334 = vld [vmem:[%s289] sm:$0xf]
      %v335 = vld [vmem:[%s289 + $0x4] sm:$0xf]
      %v336 = vld [vmem:[%s289 + $0x8] sm:$0xf]
      %v337 = vld [vmem:[%s289 + $0xc] sm:$0xf]
      %v338 = vld [vmem:[%s298] sm:$0xf]
      %v339 = vld [vmem:[%s298 + $0x4] sm:$0xf]
      %v340 = vld [vmem:[%s298 + $0x8] sm:$0xf]
      %v341 = vld [vmem:[%s298 + $0xc] sm:$0xf]
      %v342 = vld [vmem:[%s298 + $0x10] sm:$0xf]
      %v343 = vld [vmem:[%s298 + $0x14] sm:$0xf]
      %v344 = vld [vmem:[%s298 + $0x18] sm:$0xf]
      %v345 = vld [vmem:[%s298 + $0x1c] sm:$0xf]
      %v346 = vld [vmem:[%s298 + $0x20] sm:$0xf]
      %v347 = vld [vmem:[%s298 + $0x24] sm:$0xf]
      %v348 = vld [vmem:[%s298 + $0x28] sm:$0xf]
      %v349 = vld [vmem:[%s298 + $0x2c] sm:$0xf]
      %v350 = vld [vmem:[%s298 + $0x30] sm:$0xf]
      %v351 = vld [vmem:[%s298 + $0x34] sm:$0xf]
      %v352 = vld [vmem:[%s298 + $0x38] sm:$0xf]
      %v353 = vld [vmem:[%s298 + $0x3c] sm:$0xf]
      %v358 = vunpack.c.l.b16 %v334
      %v359 = vunpack.c.l.b16 %v335
      %v360 = vunpack.c.l.b16 %v336
      %v361 = vunpack.c.l.b16 %v337
      %v362 = vpack.c.b16 %v359, %v358
      %v363 = vpack.c.b16 %v361, %v360
      %v382 = vunpack.c.l.b16 %v338
      %v383 = vunpack.c.l.b16 %v339
      %v384 = vunpack.c.l.b16 %v340
      %v385 = vunpack.c.l.b16 %v341
      %v386 = vunpack.c.l.b16 %v342
      %v387 = vunpack.c.l.b16 %v343
      %v388 = vunpack.c.l.b16 %v344
      %v389 = vunpack.c.l.b16 %v345
      %v390 = vunpack.c.l.b16 %v346
      %v391 = vunpack.c.l.b16 %v347
      %v392 = vunpack.c.l.b16 %v348
      %v393 = vunpack.c.l.b16 %v349
      %v394 = vunpack.c.l.b16 %v350
      %v395 = vunpack.c.l.b16 %v351
      %v396 = vunpack.c.l.b16 %v352
      %v397 = vunpack.c.l.b16 %v353
      %v398 = vpack.c.b16 %v383, %v382
      %v399 = vpack.c.b16 %v385, %v384
      %v400 = vpack.c.b16 %v387, %v386
      %v401 = vpack.c.b16 %v389, %v388
      %v402 = vpack.c.b16 %v391, %v390
      %v403 = vpack.c.b16 %v393, %v392
      %v404 = vpack.c.b16 %v395, %v394
      %v405 = vpack.c.b16 %v397, %v396
      %414 = vmatpush.bf16.msra.mxu0 %v405
      %415 = vmatpush.bf16.msra.mxu0 %v404
      %416 = vmatpush.bf16.msra.mxu0 %v403
      %417 = vmatpush.bf16.msra.mxu0 %v402
      %418 = vmatpush.bf16.msra.mxu0 %v401
      %419 = vmatpush.bf16.msra.mxu0 %v400
      %420 = vmatpush.bf16.msra.mxu0 %v399
      %421 = vmatpush.bf16.msra.mxu0 %v398
      %422 = vmatmul.bf16.gmra.mxu0 %v362
      %v423 = vpop.f32.mrf.mxu0
      %v424 = vadd.f32 0.0, %v423
      %v425 = vpop.f32.mrf.mxu0
      %v426 = vadd.f32 0.0, %v425
      %427 = vmatmul.bf16.gmra.mxu0 %v363
      %v428 = vpop.f32.mrf.mxu0
      %v429 = vadd.f32 0.0, %v428
      %v430 = vpop.f32.mrf.mxu0
      %v431 = vadd.f32 0.0, %v430
      %432 = vdwg.mxu0
      %v433 = vadd.f32 %v330, %v424
      %v434 = vadd.f32 %v331, %v426
      %v435 = vadd.f32 %v332, %v429
      %v436 = vadd.f32 %v333, %v431
      %437 = vst [vmem:[#allocation2] sm:$0xff] %v433
      %438 = vst [vmem:[#allocation2 + $0x8] sm:$0xff] %v434
      %439 = vst [vmem:[#allocation2 + $0x10] sm:$0xff] %v435
      %440 = vst [vmem:[#allocation2 + $0x18] sm:$0xff] %v436
      // Predicated region
      $region41: #{forward.12} parent=35 // pred_check
        %p441 = pneg %p322
      $region42: #{forward.12} parent=35 // pred_check_branch
        %443 = sbr.rel (%p441) target = $region44
      $region43: #{forward.12} parent=35 // pred_region
        %v444 = vld [vmem:[#allocation2] sm:$0xff]
        %v445 = vld [vmem:[#allocation2 + $0x8] sm:$0xff]
        %v446 = vld [vmem:[#allocation2 + $0x10] sm:$0xff]
        %v447 = vld [vmem:[#allocation2 + $0x18] sm:$0xff]
        %v448 = vld [vmem:[%s303] sm:$0x1]
        %v449 = vperm.slane %v448, 0
        %v450 = vmul.f32 %v444, %v449
        %v451 = vmul.f32 %v445, %v449
        %v452 = vmul.f32 %v446, %v449
        %v453 = vmul.f32 %v447, %v449
        %v454 = vld [vmem:[%s303 + $0x1] sm:$0x1]
        %v455 = vperm.slane %v454, 0
        %v456 = vadd.f32 %v450, %v455
        %v457 = vadd.f32 %v451, %v455
        %v458 = vadd.f32 %v452, %v455
        %v459 = vadd.f32 %v453, %v455
        %v460 = vld [vmem:[%s311] sm:$0xf]
        %v461 = vld [vmem:[%s311 + $0x4] sm:$0xf]
        %v462 = vld [vmem:[%s311 + $0x8] sm:$0xf]
        %v463 = vld [vmem:[%s311 + $0xc] sm:$0xf]
        %v464 = vunpack.c.l.bf16 %v460
        %v465 = vunpack.c.l.bf16 %v461
        %v466 = vunpack.c.l.bf16 %v462
        %v467 = vunpack.c.l.bf16 %v463
        %v468 = vadd.f32 %v456, %v464
        %v469 = vadd.f32 %v457, %v465
        %v470 = vadd.f32 %v458, %v466
        %v471 = vadd.f32 %v459, %v467
        %v472 = vmax.f32 %v468, 0.0
        %v473 = vmax.f32 %v469, 0.0
        %v474 = vmax.f32 %v470, 0.0
        %v475 = vmax.f32 %v471, 0.0
        %v476 = vpack.c.bf16 %v472, %v472
        %v477 = vpack.c.bf16 %v473, %v473
        %v478 = vpack.c.bf16 %v474, %v474
        %v479 = vpack.c.bf16 %v475, %v475
        %480 = vst [vmem:[%s320] sm:$0xf] %v476
        %481 = vst [vmem:[%s320 + $0x4] sm:$0xf] %v477
        %482 = vst [vmem:[%s320 + $0x8] sm:$0xf] %v478
        %483 = vst [vmem:[%s320 + $0xc] sm:$0xf] %v479
      $region44: #{forward.12} parent=35 // pred_fallthru
        _
      %s484 = smul.u32 4, %s20
      %p485 = scmp.lt.s32.totalorder %s484, 7
      %s486 = scalar_select %p485, %s484, 7
      %p487 = scmp.lt.s32.totalorder %s21, 0
      %s488 = scalar_select %p487, %s21, 0
      %s489 = sadd.s32 %s488, %s486
      %s490 = smul.addr %s489, 4
      %s491 = scalar_lea.vmem %s4, %s490
      // Predicated region
      $region45: #{forward.12} parent=35 // pred_check
        %p492 = pneg %p164
      $region46: #{forward.12} parent=35 // pred_check_branch
        %494 = sbr.rel (%p492) target = $region48
      $region47: #{forward.12} parent=35 // pred_region
        %s495 = smul.u32 4, %s20
      $region48: #{forward.12} parent=35 // pred_fallthru
        _
    $region36: #{forward.12} parent=5 // pred_fallthru
      _
    %p496 = scmp.le.s32.totalorder 2, %s10
    // Predicated region
    $region49: #{forward.12} parent=5 // pred_check
      %p497 = pneg %p496
    $region50: #{forward.12} parent=5 // pred_check_branch
      %499 = sbr.rel (%p497) target = $region52
    $region51: #{forward.12} parent=5 // pred_region
      %s500 = ssub.s32 %s10, 2
      // Predicated region
      $region53: #{forward.12} parent=51 // pred_check
        %p501 = pneg %p170
      $region54: #{forward.12} parent=51 // pred_check_branch
        %503 = sbr.rel (%p501) target = $region56
      $region55: #{forward.12} parent=51 // pred_region
        %s504 = smul.u32 4, %s23
        %p505 = scmp.lt.s32.totalorder %s504, 7
        %s506 = scalar_select %p505, %s504, 7
        %p507 = scmp.lt.s32.totalorder %s24, 0
        %s508 = scalar_select %p507, %s24, 0
        %s509 = sadd.s32 %s508, %s506
        %s510 = smul.addr %s509, 4
        %s511 = scalar_lea.vmem %s4, %s510
      $region56: #{forward.12} parent=51 // pred_fallthru
        _
    $region52: #{forward.12} parent=5 // pred_fallthru
      _
  $region6: #{forward.12} parent=0 // loop_footer
    %s14 = sadd.s32 1, %s10
  $region7: #{forward.12} parent=0 // loop_footer_branch
    %9 = sbr.rel target = $region3
  $region8: #{forward.12} parent=0 // loop_exit
    _

// kernel: forward.13
$region0: #{forward.13}
  #allocation0 [shape = 'u32[]', space=smem, size = 0x4, offset = 0x4, fixed_abs, tag = 'smem constant byte address 0x4 - core index']
  #allocation1 [shape = 'u32[72,128]{1,0:T(1,128)}', space=vmem, size = 0x9000, scoped, tag = 'internal scratch']
  %s0 = inlined_call_operand.vmem [shape: bf16[8,5,40], index: 0, kind: input, shape index: {}]
  %s1 = inlined_call_operand.vmem [shape: bf16[40,32], index: 1, kind: input, shape index: {}]
  %s2 = inlined_call_operand.vmem [shape: f32[1,32], index: 2, kind: input, shape index: {}]
  %s3 = inlined_call_operand.vmem [shape: bf16[32,128], index: 3, kind: input, shape index: {}]
  %s4 = inlined_call_operand.vmem [shape: f32[1,128], index: 4, kind: input, shape index: {}]
  %s5 = inlined_call_operand.vmem [shape: f32[8,128], index: 5, kind: output, shape index: {}]
  %s6 = sld [smem:[#allocation0]]
  $region30: #{forward.13} parent=0
    _
  %s8 = ssub.s32 1, %s6
  %s9 = scalar_select 0, %s8, %s6
  // Predicated region
  $region2: #{forward.13} parent=0 // pred_check
    _
  $region3: #{forward.13} parent=0 // pred_check_branch
    %11 = sbr.rel (0) target = $region5
  $region4: #{forward.13} parent=0 // pred_region
    _
  $region5: #{forward.13} parent=0 // pred_fallthru
    _
  // Predicated region
  $region6: #{forward.13} parent=0 // pred_check
    _
  $region7: #{forward.13} parent=0 // pred_check_branch
    %13 = sbr.rel (0) target = $region9
  $region8: #{forward.13} parent=0 // pred_region
    _
  $region9: #{forward.13} parent=0 // pred_fallthru
    _
  // Predicated region
  $region10: #{forward.13} parent=0 // pred_check
    _
  $region11: #{forward.13} parent=0 // pred_check_branch
    %15 = sbr.rel (0) target = $region13
  $region12: #{forward.13} parent=0 // pred_region
    _
  $region13: #{forward.13} parent=0 // pred_fallthru
    _
  // Predicated region
  $region14: #{forward.13} parent=0 // pred_check
    _
  $region15: #{forward.13} parent=0 // pred_check_branch
    %17 = sbr.rel (0) target = $region17
  $region16: #{forward.13} parent=0 // pred_region
    _
  $region17: #{forward.13} parent=0 // pred_fallthru
    _
  // Predicated region
  $region18: #{forward.13} parent=0 // pred_check
    _
  $region19: #{forward.13} parent=0 // pred_check_branch
    %19 = sbr.rel (0) target = $region21
  $region20: #{forward.13} parent=0 // pred_region
    _
  $region21: #{forward.13} parent=0 // pred_fallthru
    _
  %v21 = vld [vmem:[%s0] sm:$0x7]
  %v22 = vld [vmem:[%s0 + $0x4] sm:$0x7]
  %v23 = vld [vmem:[%s0 + $0x8] sm:$0x7]
  %v24 = vld [vmem:[%s0 + $0xc] sm:$0x7]
  %v25 = vld [vmem:[%s0 + $0x10] sm:$0x7]
  %v26 = vld [vmem:[%s0 + $0x14] sm:$0x7]
  %v27 = vld [vmem:[%s0 + $0x18] sm:$0x7]
  %v28 = vld [vmem:[%s0 + $0x1c] sm:$0x7]
  %v29 = vunpack.c.l.bf16 %v21
  %v30 = vunpack.c.l.bf16 %v22
  %v31 = vunpack.c.l.bf16 %v23
  %v32 = vunpack.c.l.bf16 %v24
  %v33 = vunpack.c.l.bf16 %v25
  %v34 = vunpack.c.l.bf16 %v26
  %v35 = vunpack.c.l.bf16 %v27
  %v36 = vunpack.c.l.bf16 %v28
  %vm37 = vcmask 323584
  %v38 = vsel %vm37, %v29, 0.0
  %v39 = vrot.slane %v38, 4
  %v40 = vadd.f32 %v38, %v39
  %v41 = vrot.slane %v40, 2
  %v42 = vadd.f32 %v40, %v41
  %v43 = vrot.slane %v42, 1
  %v44 = vadd.f32 %v42, %v43
  %v45 = vsel %vm37, %v30, 0.0
  %v46 = vrot.slane %v45, 4
  %v47 = vadd.f32 %v45, %v46
  %v48 = vrot.slane %v47, 2
  %v49 = vadd.f32 %v47, %v48
  %v50 = vrot.slane %v49, 1
  %v51 = vadd.f32 %v49, %v50
  %v52 = vsel %vm37, %v31, 0.0
  %v53 = vrot.slane %v52, 4
  %v54 = vadd.f32 %v52, %v53
  %v55 = vrot.slane %v54, 2
  %v56 = vadd.f32 %v54, %v55
  %v57 = vrot.slane %v56, 1
  %v58 = vadd.f32 %v56, %v57
  %v59 = vsel %vm37, %v32, 0.0
  %v60 = vrot.slane %v59, 4
  %v61 = vadd.f32 %v59, %v60
  %v62 = vrot.slane %v61, 2
  %v63 = vadd.f32 %v61, %v62
  %v64 = vrot.slane %v63, 1
  %v65 = vadd.f32 %v63, %v64
  %v66 = vsel %vm37, %v33, 0.0
  %v67 = vrot.slane %v66, 4
  %v68 = vadd.f32 %v66, %v67
  %v69 = vrot.slane %v68, 2
  %v70 = vadd.f32 %v68, %v69
  %v71 = vrot.slane %v70, 1
  %v72 = vadd.f32 %v70, %v71
  %v73 = vsel %vm37, %v34, 0.0
  %v74 = vrot.slane %v73, 4
  %v75 = vadd.f32 %v73, %v74
  %v76 = vrot.slane %v75, 2
  %v77 = vadd.f32 %v75, %v76
  %v78 = vrot.slane %v77, 1
  %v79 = vadd.f32 %v77, %v78
  %v80 = vsel %vm37, %v35, 0.0
  %v81 = vrot.slane %v80, 4
  %v82 = vadd.f32 %v80, %v81
  %v83 = vrot.slane %v82, 2
  %v84 = vadd.f32 %v82, %v83
  %v85 = vrot.slane %v84, 1
  %v86 = vadd.f32 %v84, %v85
  %v87 = vsel %vm37, %v36, 0.0
  %v88 = vrot.slane %v87, 4
  %v89 = vadd.f32 %v87, %v88
  %v90 = vrot.slane %v89, 2
  %v91 = vadd.f32 %v89, %v90
  %v92 = vrot.slane %v91, 1
  %v93 = vadd.f32 %v91, %v92
  %v94 = vrcp.pop 5.0
  %v95 = vmul.f32 5.0, %v94
  %v96 = vsub.f32 1.0, %v95
  %v97 = vmul.f32 %v94, %v96
  %v98 = vadd.f32 %v94, %v97
  %vm99 = vweird.f32 %v94
  %v100 = vsel %vm99, %v94, %v98
  %v101 = vmul.f32 %v44, %v100
  %v102 = vmul.f32 %v51, %v100
  %v103 = vmul.f32 %v58, %v100
  %v104 = vmul.f32 %v65, %v100
  %v105 = vmul.f32 %v72, %v100
  %v106 = vmul.f32 %v79, %v100
  %v107 = vmul.f32 %v86, %v100
  %v108 = vmul.f32 %v93, %v100
  %v109 = vpack.c.bf16 %v101, %v101
  %v110 = vpack.c.bf16 %v102, %v102
  %v111 = vpack.c.bf16 %v103, %v103
  %v112 = vpack.c.bf16 %v104, %v104
  %v113 = vpack.c.bf16 %v105, %v105
  %v114 = vpack.c.bf16 %v106, %v106
  %v115 = vpack.c.bf16 %v107, %v107
  %v116 = vpack.c.bf16 %v108, %v108
  %v117 = vld [vmem:[%s1] sm:$0xf]
  %v118 = vld [vmem:[%s1 + $0x4] sm:$0xf]
  %v119 = vld [vmem:[%s1 + $0x8] sm:$0xf]
  %v120 = vld [vmem:[%s1 + $0xc] sm:$0xf]
  %v121 = vld [vmem:[%s1 + $0x10] sm:$0xf]
  %v122 = vld [vmem:[%s2] sm:$0x1]
  %v124 = vperm.slane %v122, 0
  %v134 = vunpack.c.l.b16 %v109
  %v135 = vunpack.c.l.b16 %v110
  %v136 = vunpack.c.l.b16 %v111
  %v137 = vunpack.c.l.b16 %v112
  %v138 = vunpack.c.l.b16 %v113
  %v139 = vunpack.c.l.b16 %v114
  %v140 = vunpack.c.l.b16 %v115
  %v141 = vunpack.c.l.b16 %v116
  %vm142 = vcmask 1041409
  %v143 = vsel %vm142, %v135, %v134
  %vm144 = vcmask 1042434
  %v145 = vsel %vm144, %v136, %v143
  %vm146 = vcmask 1043459
  %v147 = vsel %vm146, %v137, %v145
  %vm148 = vcmask 1044484
  %v149 = vsel %vm148, %v138, %v147
  %vm150 = vcmask 1045509
  %v151 = vsel %vm150, %v139, %v149
  %vm152 = vcmask 1046534
  %v153 = vsel %vm152, %v140, %v151
  %vm154 = vcmask 1047559
  %v155 = vsel %vm154, %v141, %v153
  %v156 = vpack.c.b16 %v155, %v155
  %v162 = vunpack.c.l.b16 %v117
  %v163 = vunpack.c.l.b16 %v118
  %v164 = vunpack.c.l.b16 %v119
  %v165 = vunpack.c.l.b16 %v120
  %v166 = vunpack.c.l.b16 %v121
  %v167 = vpack.c.b16 %v163, %v162
  %v168 = vpack.c.b16 %v165, %v164
  %v169 = vpack.c.b16 %v166, %v166
  %vm172 = vcmask 326656
  %v174 = vsel %vm172, %v156, 0
  %vm176 = vcmask 1043456
  %v178 = vsel %vm176, %v169, 0
  %180 = vmatpush.bf16.msra.mxu0 0
  %181 = vmatpush.bf16.msra.mxu0 0
  %182 = vmatpush.bf16.msra.mxu0 0
  %183 = vmatpush.bf16.msra.mxu0 0
  %184 = vmatpush.bf16.msra.mxu0 0
  %185 = vmatpush.bf16.msra.mxu0 %v178
  %186 = vmatpush.bf16.msra.mxu0 %v168
  %187 = vmatpush.bf16.msra.mxu0 %v167
  %188 = vmatmul.bf16.gmra.mxu0 %v174
  %v189 = vpop.f32.mrf.mxu0
  %v190 = vadd.f32 %v124, %v189
  %v191 = vpop.f32.mrf.mxu0
  %192 = vdwg.mxu0
  %v193 = vpack.c.bf16 %v190, %v190
  %v194 = vld [vmem:[%s3] sm:$0xf]
  %v195 = vld [vmem:[%s3 + $0x4] sm:$0xf]
  %v196 = vld [vmem:[%s3 + $0x8] sm:$0xf]
  %v197 = vld [vmem:[%s3 + $0xc] sm:$0xf]
  %v198 = vld [vmem:[%s4] sm:$0x1]
  %v200 = vperm.slane %v198, 0
  %v206 = vunpack.c.l.b16 %v194
  %v207 = vunpack.c.l.b16 %v195
  %v208 = vunpack.c.l.b16 %v196
  %v209 = vunpack.c.l.b16 %v197
  %v210 = vpack.c.b16 %v207, %v206
  %v211 = vpack.c.b16 %v209, %v208
  %vm214 = vcmask 261120
  %v216 = vsel %vm214, %v193, 0
  %218 = vmatpush.bf16.msra.mxu0 0
  %219 = vmatpush.bf16.msra.mxu0 0
  %220 = vmatpush.bf16.msra.mxu0 0
  %221 = vmatpush.bf16.msra.mxu0 0
  %222 = vmatpush.bf16.msra.mxu0 0
  %223 = vmatpush.bf16.msra.mxu0 0
  %224 = vmatpush.bf16.msra.mxu0 %v211
  %225 = vmatpush.bf16.msra.mxu0 %v210
  %226 = vmatmul.bf16.gmra.mxu0 %v216
  %v227 = vpop.f32.mrf.mxu0
  %v228 = vadd.f32 %v200, %v227
  %v229 = vpop.f32.mrf.mxu0
  %230 = vdwg.mxu0
  %231 = vst [vmem:[%s5] sm:$0xff] %v228
  // Predicated region
  $region22: #{forward.13} parent=0 // pred_check
    _
  $region23: #{forward.13} parent=0 // pred_check_branch
    %233 = sbr.rel (0) target = $region25
  $region24: #{forward.13} parent=0 // pred_region
    _
  $region25: #{forward.13} parent=0 // pred_fallthru
    _
  // Predicated region
  $region26: #{forward.13} parent=0 // pred_check
    _
  $region27: #{forward.13} parent=0 // pred_check_branch
    %235 = sbr.rel (0) target = $region29
  $region28: #{forward.13} parent=0 // pred_region
    _
  $region29: #{forward.13} parent=0 // pred_fallthru
    _

</llo_original>
